<compile_context>
chip_gen: v7x
topology: tpu7x:2x2x1
jax: 0.10.0
libtpu: 0.0.40
codegen_flags: <defaults>
</compile_context>

<pallas_src>
import functools

import jax
import jax.numpy as jnp
from jax import lax
from jax.experimental import pallas as pl
from jax.experimental.pallas import tpu as pltpu

K = 5             # conv kernel size
PAD = 2           # conv 'same' padding
FRONT = 16        # front zero rows in time-padded buffers (>= PAD, bf16-aligned)
BACK = 16         # never-written back zero rows (>= PAD, bf16-aligned)
SUB = 16          # bf16 sublane pack: keep time offsets/extents multiples of this
LANE = 128
T_CHUNK_BASE = 256  # target output rows per in-kernel matmul chunk


def _round_up(x, m):
    return (x + m - 1) // m * m


def _transition_kernel(x_ref,
                       w1_ref, b1_ref, w2_ref, b2_ref,
                       w3_ref, b3_ref, w4_ref, b4_ref,
                       out_ref, z1_ref, z2_ref,
                       *, T, t_chunk):
    # x_ref : (bt, t_total, cin_pad) bf16, zero-padded in time & lanes
    # w*_ref: (K, Cin_pad, Cout_pad) bf16 (per-tap stacked), b*_ref: (1, Cout) f32
    # out_ref: (bt, t_cpad, nm_pad) f32
    # z1_ref, z2_ref: (bt, t_total, h_pad) bf16 scratch
    bt, t_cpad, _ = out_ref.shape
    t_total = z1_ref.shape[1]
    h = z1_ref.shape[2]
    n_chunks = t_cpad // t_chunk
    back = t_total - FRONT - t_cpad

    # Zero only the never-written time borders of the activation scratch (cheap,
    # and correct regardless of how the "parallel" grid axis is split).
    for zr in (z1_ref, z2_ref):
        zr[:, pl.ds(0, FRONT), :] = jnp.zeros((bt, FRONT, h), zr.dtype)
        zr[:, pl.ds(FRONT + t_cpad, back), :] = jnp.zeros((bt, back, h), zr.dtype)

    def conv_layer(src_ref, w_ref, b_ref, dst_ref, dst_off, relu, zero_tail):
        cin = src_ref.shape[2]
        cout = w_ref.shape[2]

        def chunk(c):
            coff = c * t_chunk
            if not isinstance(coff, int):
                coff = pl.multiple_of(coff, t_chunk)
            base = coff + (FRONT - PAD)
            # Per-tap accumulating matmuls: no K*Cout wide intermediate.
            acc = None
            for k in range(K):
                lhs = src_ref[:, pl.ds(base + k, t_chunk), :]
                lhs = lhs.reshape(bt * t_chunk, cin)          # bf16 rows -> MXU
                p = jnp.dot(lhs, w_ref[k], preferred_element_type=jnp.float32)
                acc = p if acc is None else acc + p
            acc = acc + b_ref[...]                            # (1, Cout) broadcast
            if relu:
                acc = jnp.maximum(acc, 0.0)
            acc = acc.reshape(bt, t_chunk, cout)
            dst_ref[:, pl.ds(dst_off + coff, t_chunk), :] = acc.astype(dst_ref.dtype)

        if n_chunks == 1:
            chunk(0)
        else:
            def body(c, carry):
                chunk(c)
                return carry
            lax.fori_loop(0, n_chunks, body, 0)

        # Rows >= T were computed from padded data; keep them zero so the next
        # layer's taps see proper conv zero-padding.
        if zero_tail and t_cpad > T:
            dst_ref[:, pl.ds(dst_off + T, t_cpad - T), :] = jnp.zeros(
                (bt, t_cpad - T, cout), dst_ref.dtype)

    # encoder
    conv_layer(x_ref, w1_ref, b1_ref, z1_ref, FRONT, relu=True, zero_tail=True)
    conv_layer(z1_ref, w2_ref, b2_ref, z2_ref, FRONT, relu=True, zero_tail=True)
    # decoder (reuse z1; its front/back borders are still zero)
    conv_layer(z2_ref, w3_ref, b3_ref, z1_ref, FRONT, relu=True, zero_tail=True)
    conv_layer(z1_ref, w4_ref, b4_ref, out_ref, 0, relu=False, zero_tail=False)


def _stack_weight(w, cin_pad, cout_pad):
    """torch Conv1d weight (Cout, Cin, K) -> per-tap (K, Cin_pad, Cout_pad) bf16."""
    w = jnp.transpose(w, (2, 1, 0))                      # (K, Cin, Cout)
    k_, ci, co = w.shape
    w = jnp.pad(w, ((0, 0), (0, cin_pad - ci), (0, cout_pad - co)))
    return w.astype(jnp.bfloat16)


def _stack_bias(b, cout_pad):
    b = b.reshape(1, -1).astype(jnp.float32)
    return jnp.pad(b, ((0, 0), (0, cout_pad - b.shape[1])))


@functools.partial(jax.jit, static_argnames=("n_mels", "hidden"))
def transition_generator(mel_a, mel_b, params, *, n_mels, hidden):
    """mel_a, mel_b: (B, n_mels, T) or (B, 1, n_mels, T).  Returns (B, n_mels, T)."""
    if mel_a.ndim == 4:
        mel_a = jnp.squeeze(mel_a, axis=1)
    if mel_b.ndim == 4:
        mel_b = jnp.squeeze(mel_b, axis=1)

    B, _, T = mel_a.shape
    cin = 2 * n_mels
    cin_pad = _round_up(cin, LANE)
    h_pad = _round_up(hidden, LANE)
    nm_pad = _round_up(n_mels, LANE)

    # Time tiling: the kernel loops over fixed-size chunks of t_chunk output
    # rows; chunk starts/extents are multiples of the bf16 sublane pack.
    t_chunk = min(T_CHUNK_BASE, _round_up(T, SUB))
    t_cpad = _round_up(T, t_chunk)
    t_total = FRONT + t_cpad + BACK

    # Batch tile from a per-step VMEM budget (conservative across v5e/v6e/v7x).
    bytes_per_b = (
        2 * t_total * cin_pad * 2            # input block, bf16, double buffered
        + 2 * t_cpad * nm_pad * 4            # output block, f32, double buffered
        + 2 * t_total * h_pad * 2            # two bf16 activation scratch buffers
        + 16 * t_chunk * max(cin_pad, h_pad, nm_pad))   # per-chunk matmul temps
    budget = 18 << 20
    b_tile = int(max(1, min(B, budget // bytes_per_b)))
    # Split into >= 2 grid steps (v7x megacore) only if every per-chunk matmul
    # keeps >= 1024 rows; single-TC v5e/v6e never pay for a forced split.
    if B >= 2 and b_tile >= B:
        half = (B + 1) // 2
        if half * t_chunk >= 1024:
            b_tile = half
    b_pad = _round_up(B, b_tile)

    # torch.cat([mel_a, mel_b], dim=1) in NCW == concat on the channel axis.
    x = jnp.concatenate([mel_a, mel_b], axis=1)          # (B, cin, T)
    x = jnp.transpose(x, (0, 2, 1))                      # (B, T, cin)
    x = jnp.pad(x, ((0, b_pad - B), (FRONT, t_total - FRONT - T),
                    (0, cin_pad - cin))).astype(jnp.bfloat16)

    (w1, b1), (w2, b2), (w3, b3), (w4, b4) = params
    W1 = _stack_weight(w1, cin_pad, h_pad)
    W2 = _stack_weight(w2, h_pad, h_pad)
    W3 = _stack_weight(w3, h_pad, h_pad)
    W4 = _stack_weight(w4, h_pad, nm_pad)
    B1 = _stack_bias(b1, h_pad)
    B2 = _stack_bias(b2, h_pad)
    B3 = _stack_bias(b3, h_pad)
    B4 = _stack_bias(b4, nm_pad)

    weight_bytes = sum(int(a.size) * a.dtype.itemsize
                       for a in (W1, W2, W3, W4, B1, B2, B3, B4))
    vmem_limit = int(min(max(b_tile * bytes_per_b + weight_bytes + (6 << 20),
                             32 << 20), 56 << 20))

    def fixed_spec(a):   # grid-invariant weights/biases: single buffered
        return pl.BlockSpec(a.shape, lambda i: (0,) * a.ndim,
                            pipeline_mode=pl.Buffered(1))

    kernel = functools.partial(_transition_kernel, T=T, t_chunk=t_chunk)
    out = pl.pallas_call(
        kernel,
        out_shape=jax.ShapeDtypeStruct((b_pad, t_cpad, nm_pad), jnp.float32),
        grid_spec=pltpu.PrefetchScalarGridSpec(
            num_scalar_prefetch=0,
            grid=(b_pad // b_tile,),
            in_specs=[
                pl.BlockSpec((b_tile, t_total, cin_pad), lambda i: (i, 0, 0)),
                fixed_spec(W1), fixed_spec(B1),
                fixed_spec(W2), fixed_spec(B2),
                fixed_spec(W3), fixed_spec(B3),
                fixed_spec(W4), fixed_spec(B4),
            ],
            out_specs=pl.BlockSpec((b_tile, t_cpad, nm_pad),
                                   lambda i: (i, 0, 0)),
            scratch_shapes=[
                pltpu.VMEM((b_tile, t_total, h_pad), jnp.bfloat16),
                pltpu.VMEM((b_tile, t_total, h_pad), jnp.bfloat16),
            ],
        ),
        compiler_params=pltpu.CompilerParams(
            dimension_semantics=("parallel",),
            vmem_limit_bytes=vmem_limit),
    )(x, W1, B1, W2, B2, W3, B3, W4, B4)

    out = out[:B, :T, :n_mels]                           # drop batch/time/lane padding
    return jnp.transpose(out, (0, 2, 1))                 # back to (B, n_mels, T)


def init_params(key, n_mels, hidden):
    """Deterministic synthetic params with PyTorch Conv1d weight shapes (Cout,Cin,K)."""
    ks = jax.random.split(key, 8)
    cin = 2 * n_mels

    def conv_params(kw_key, kb_key, cout, cin_):
        w = 0.05 * jax.random.normal(kw_key, (cout, cin_, K), jnp.float32)
        b = 0.01 * jax.random.normal(kb_key, (cout,), jnp.float32)
        return w, b

    return (
        conv_params(ks[0], ks[1], hidden, cin),
        conv_params(ks[2], ks[3], hidden, hidden),
        conv_params(ks[4], ks[5], hidden, hidden),
        conv_params(ks[6], ks[7], n_mels, hidden),
    )


def _reference(mel_a, mel_b, params, quantize=False):
    """Plain-JAX NCW reference mirroring the PyTorch module.  With quantize=True
    the conv inputs/weights are bf16-rounded at the same points as the kernel."""
    if mel_a.ndim == 4:
        mel_a = jnp.squeeze(mel_a, axis=1)
    if mel_b.ndim == 4:
        mel_b = jnp.squeeze(mel_b, axis=1)
    x = jnp.concatenate([mel_a, mel_b], axis=1)

    def conv(x, w, b):
        if quantize:
            x = x.astype(jnp.bfloat16)
            w = w.astype(jnp.bfloat16)
        y = lax.conv_general_dilated(
            x, w, window_strides=(1,), padding=[(PAD, PAD)],
            dimension_numbers=("NCH", "OIH", "NCH"),
            preferred_element_type=jnp.float32)
        return y + b[None, :, None]

    (w1, b1), (w2, b2), (w3, b3), (w4, b4) = params
    z = jax.nn.relu(conv(x, w1, b1))
    z = jax.nn.relu(conv(z, w2, b2))
    z = jax.nn.relu(conv(z, w3, b3))
    return conv(z, w4, b4)


def _run_case(mel_a, mel_b, params, n_mels, hidden, B, T):
    out = transition_generator(mel_a, mel_b, params, n_mels=n_mels, hidden=hidden)
    out = jax.block_until_ready(out)
    assert out.shape == (B, n_mels, T), out.shape
    # Compare against a bf16-quantized reference (same quantization points as
    # the kernel) -> tight tolerance that catches tap-offset bugs.
    ref_q = _reference(mel_a, mel_b, params, quantize=True)
    ref_f = _reference(mel_a, mel_b, params, quantize=False)
    err_q = float(jnp.max(jnp.abs(out - ref_q)))
    err_f = float(jnp.max(jnp.abs(out - ref_f)))
    assert jnp.allclose(out, ref_q, atol=5e-2, rtol=5e-2), (err_q, err_f)
    return err_q, err_f


if __name__ == "__main__":
    # Small shapes consistent with the module (n_mels=64, hidden=128 stand in
    # for the defaults 128/256).
    n_mels, hidden = 64, 128
    key = jax.random.PRNGKey(0)
    k_a, k_b, k_p, k_c, k_d = jax.random.split(key, 5)
    params = init_params(k_p, n_mels, hidden)

    # Case 1: tiny T (single time chunk, exact fit).
    B, T = 2, 32
    mel_a = jax.random.normal(k_a, (B, n_mels, T), jnp.float32)
    mel_b = jax.random.normal(k_b, (B, n_mels, T), jnp.float32)
    _run_case(mel_a, mel_b, params, n_mels, hidden, B, T)

    # Case 2: T > chunk size (exercises the in-kernel chunk loop, the ragged
    # tail re-zeroing, and the 4-D squeeze path of the module).
    B2, T2 = 2, 300
    mel_a2 = jax.random.normal(k_c, (B2, 1, n_mels, T2), jnp.float32)  # 4-D input
    mel_b2 = jax.random.normal(k_d, (B2, n_mels, T2), jnp.float32)
    _run_case(mel_a2, mel_b2, params, n_mels, hidden, B2, T2)

    print("KERNEL_OK")
</pallas_src>

<mosaic_0001>
module attributes {stable_mosaic.version = 11 : i64} {
  func.func @_transition_kernel(%arg0: i32, %arg1: memref<2x64x128xbf16, #tpu.memory_space<vmem>>, %arg2: memref<5x128x128xbf16, #tpu.memory_space<vmem>>, %arg3: memref<1x128xf32, #tpu.memory_space<vmem>>, %arg4: memref<5x128x128xbf16, #tpu.memory_space<vmem>>, %arg5: memref<1x128xf32, #tpu.memory_space<vmem>>, %arg6: memref<5x128x128xbf16, #tpu.memory_space<vmem>>, %arg7: memref<1x128xf32, #tpu.memory_space<vmem>>, %arg8: memref<5x128x128xbf16, #tpu.memory_space<vmem>>, %arg9: memref<1x128xf32, #tpu.memory_space<vmem>>, %arg10: memref<2x32x128xf32, #tpu.memory_space<vmem>>, %arg11: memref<2x64x128xbf16, #tpu.memory_space<vmem>>, %arg12: memref<2x64x128xbf16, #tpu.memory_space<vmem>>) attributes {dimension_semantics = [#tpu.dimension_semantics<parallel>], iteration_bounds = array<i64: 1>, scalar_prefetch = 0 : i64, scratch_operands = 2 : i64, tpu.core_type = #tpu.core_type<tc>, window_params = [{transform_indices = @transform_0, window_bounds = array<i64: 2, 64, 128>}, {pipeline_mode = #tpu.pipeline_mode<synchronous>, transform_indices = @transform_1, window_bounds = array<i64: 5, 128, 128>}, {pipeline_mode = #tpu.pipeline_mode<synchronous>, transform_indices = @transform_2, window_bounds = array<i64: 1, 128>}, {pipeline_mode = #tpu.pipeline_mode<synchronous>, transform_indices = @transform_3, window_bounds = array<i64: 5, 128, 128>}, {pipeline_mode = #tpu.pipeline_mode<synchronous>, transform_indices = @transform_4, window_bounds = array<i64: 1, 128>}, {pipeline_mode = #tpu.pipeline_mode<synchronous>, transform_indices = @transform_5, window_bounds = array<i64: 5, 128, 128>}, {pipeline_mode = #tpu.pipeline_mode<synchronous>, transform_indices = @transform_6, window_bounds = array<i64: 1, 128>}, {pipeline_mode = #tpu.pipeline_mode<synchronous>, transform_indices = @transform_7, window_bounds = array<i64: 5, 128, 128>}, {pipeline_mode = #tpu.pipeline_mode<synchronous>, transform_indices = @transform_8, window_bounds = array<i64: 1, 128>}, {transform_indices = @transform_9, window_bounds = array<i64: 2, 32, 128>}]} {
    %cst = arith.constant 0.000000e+00 : bf16
    %0 = vector.broadcast %cst : bf16 to vector<2x16x128xbf16>
    %c0 = arith.constant 0 : index
    %c0_0 = arith.constant 0 : index
    %c0_1 = arith.constant 0 : index
    %1 = vector.load %arg11[%c0, %c0_0, %c0_1] : memref<2x64x128xbf16, #tpu.memory_space<vmem>>, vector<2x16x128xbf16>
    tpu.vector_store %arg11[%c0, %c0_0, %c0_1], %0 {strides = array<i32>} : memref<2x64x128xbf16, #tpu.memory_space<vmem>>, vector<2x16x128xbf16>,
    %cst_2 = arith.constant 0.000000e+00 : bf16
    %2 = vector.broadcast %cst_2 : bf16 to vector<2x16x128xbf16>
    %c0_3 = arith.constant 0 : index
    %c48 = arith.constant 48 : index
    %c0_4 = arith.constant 0 : index
    %3 = vector.load %arg11[%c0_3, %c48, %c0_4] : memref<2x64x128xbf16, #tpu.memory_space<vmem>>, vector<2x16x128xbf16>
    tpu.vector_store %arg11[%c0_3, %c48, %c0_4], %2 {strides = array<i32>} : memref<2x64x128xbf16, #tpu.memory_space<vmem>>, vector<2x16x128xbf16>,
    %cst_5 = arith.constant 0.000000e+00 : bf16
    %4 = vector.broadcast %cst_5 : bf16 to vector<2x16x128xbf16>
    %c0_6 = arith.constant 0 : index
    %c0_7 = arith.constant 0 : index
    %c0_8 = arith.constant 0 : index
    %5 = vector.load %arg12[%c0_6, %c0_7, %c0_8] : memref<2x64x128xbf16, #tpu.memory_space<vmem>>, vector<2x16x128xbf16>
    tpu.vector_store %arg12[%c0_6, %c0_7, %c0_8], %4 {strides = array<i32>} : memref<2x64x128xbf16, #tpu.memory_space<vmem>>, vector<2x16x128xbf16>,
    %cst_9 = arith.constant 0.000000e+00 : bf16
    %6 = vector.broadcast %cst_9 : bf16 to vector<2x16x128xbf16>
    %c0_10 = arith.constant 0 : index
    %c48_11 = arith.constant 48 : index
    %c0_12 = arith.constant 0 : index
    %7 = vector.load %arg12[%c0_10, %c48_11, %c0_12] : memref<2x64x128xbf16, #tpu.memory_space<vmem>>, vector<2x16x128xbf16>
    tpu.vector_store %arg12[%c0_10, %c48_11, %c0_12], %6 {strides = array<i32>} : memref<2x64x128xbf16, #tpu.memory_space<vmem>>, vector<2x16x128xbf16>,
    %c0_13 = arith.constant 0 : index
    %c14 = arith.constant 14 : index
    %c0_14 = arith.constant 0 : index
    %8 = vector.load %arg1[%c0_13, %c14, %c0_14] : memref<2x64x128xbf16, #tpu.memory_space<vmem>>, vector<2x32x128xbf16>
    %9 = vector.shape_cast %8 : vector<2x32x128xbf16> to vector<64x128xbf16>
    %c0_15 = arith.constant 0 : index
    %c0_16 = arith.constant 0 : index
    %c0_17 = arith.constant 0 : index
    %10 = vector.load %arg2[%c0_15, %c0_16, %c0_17] : memref<5x128x128xbf16, #tpu.memory_space<vmem>>, vector<1x128x128xbf16>
    %11 = vector.shape_cast %10 : vector<1x128x128xbf16> to vector<128x128xbf16>
    %cst_18 = arith.constant dense<0.000000e+00> : vector<64x128xf32>
    %12 = tpu.matmul %9, %11, %cst_18 {dimension_numbers = #tpu.dot_dimension_numbers<[1], [0], [0], [1], [0, 0, 1, 1], [], []>} : vector<64x128xbf16>, vector<128x128xbf16>, vector<64x128xf32> -> vector<64x128xf32>
    %c0_19 = arith.constant 0 : index
    %c15 = arith.constant 15 : index
    %c0_20 = arith.constant 0 : index
    %13 = vector.load %arg1[%c0_19, %c15, %c0_20] : memref<2x64x128xbf16, #tpu.memory_space<vmem>>, vector<2x32x128xbf16>
    %14 = vector.shape_cast %13 : vector<2x32x128xbf16> to vector<64x128xbf16>
    %c1 = arith.constant 1 : index
    %c0_21 = arith.constant 0 : index
    %c0_22 = arith.constant 0 : index
    %15 = vector.load %arg2[%c1, %c0_21, %c0_22] : memref<5x128x128xbf16, #tpu.memory_space<vmem>>, vector<1x128x128xbf16>
    %16 = vector.shape_cast %15 : vector<1x128x128xbf16> to vector<128x128xbf16>
    %cst_23 = arith.constant dense<0.000000e+00> : vector<64x128xf32>
    %17 = tpu.matmul %14, %16, %cst_23 {dimension_numbers = #tpu.dot_dimension_numbers<[1], [0], [0], [1], [0, 0, 1, 1], [], []>} : vector<64x128xbf16>, vector<128x128xbf16>, vector<64x128xf32> -> vector<64x128xf32>
    %18 = arith.addf %12, %17 : vector<64x128xf32>
    %c0_24 = arith.constant 0 : index
    %c16 = arith.constant 16 : index
    %c0_25 = arith.constant 0 : index
    %19 = vector.load %arg1[%c0_24, %c16, %c0_25] : memref<2x64x128xbf16, #tpu.memory_space<vmem>>, vector<2x32x128xbf16>
    %20 = vector.shape_cast %19 : vector<2x32x128xbf16> to vector<64x128xbf16>
    %c2 = arith.constant 2 : index
    %c0_26 = arith.constant 0 : index
    %c0_27 = arith.constant 0 : index
    %21 = vector.load %arg2[%c2, %c0_26, %c0_27] : memref<5x128x128xbf16, #tpu.memory_space<vmem>>, vector<1x128x128xbf16>
    %22 = vector.shape_cast %21 : vector<1x128x128xbf16> to vector<128x128xbf16>
    %cst_28 = arith.constant dense<0.000000e+00> : vector<64x128xf32>
    %23 = tpu.matmul %20, %22, %cst_28 {dimension_numbers = #tpu.dot_dimension_numbers<[1], [0], [0], [1], [0, 0, 1, 1], [], []>} : vector<64x128xbf16>, vector<128x128xbf16>, vector<64x128xf32> -> vector<64x128xf32>
    %24 = arith.addf %18, %23 : vector<64x128xf32>
    %c0_29 = arith.constant 0 : index
    %c17 = arith.constant 17 : index
    %c0_30 = arith.constant 0 : index
    %25 = vector.load %arg1[%c0_29, %c17, %c0_30] : memref<2x64x128xbf16, #tpu.memory_space<vmem>>, vector<2x32x128xbf16>
    %26 = vector.shape_cast %25 : vector<2x32x128xbf16> to vector<64x128xbf16>
    %c3 = arith.constant 3 : index
    %c0_31 = arith.constant 0 : index
    %c0_32 = arith.constant 0 : index
    %27 = vector.load %arg2[%c3, %c0_31, %c0_32] : memref<5x128x128xbf16, #tpu.memory_space<vmem>>, vector<1x128x128xbf16>
    %28 = vector.shape_cast %27 : vector<1x128x128xbf16> to vector<128x128xbf16>
    %cst_33 = arith.constant dense<0.000000e+00> : vector<64x128xf32>
    %29 = tpu.matmul %26, %28, %cst_33 {dimension_numbers = #tpu.dot_dimension_numbers<[1], [0], [0], [1], [0, 0, 1, 1], [], []>} : vector<64x128xbf16>, vector<128x128xbf16>, vector<64x128xf32> -> vector<64x128xf32>
    %30 = arith.addf %24, %29 : vector<64x128xf32>
    %c0_34 = arith.constant 0 : index
    %c18 = arith.constant 18 : index
    %c0_35 = arith.constant 0 : index
    %31 = vector.load %arg1[%c0_34, %c18, %c0_35] : memref<2x64x128xbf16, #tpu.memory_space<vmem>>, vector<2x32x128xbf16>
    %32 = vector.shape_cast %31 : vector<2x32x128xbf16> to vector<64x128xbf16>
    %c4 = arith.constant 4 : index
    %c0_36 = arith.constant 0 : index
    %c0_37 = arith.constant 0 : index
    %33 = vector.load %arg2[%c4, %c0_36, %c0_37] : memref<5x128x128xbf16, #tpu.memory_space<vmem>>, vector<1x128x128xbf16>
    %34 = vector.shape_cast %33 : vector<1x128x128xbf16> to vector<128x128xbf16>
    %cst_38 = arith.constant dense<0.000000e+00> : vector<64x128xf32>
    %35 = tpu.matmul %32, %34, %cst_38 {dimension_numbers = #tpu.dot_dimension_numbers<[1], [0], [0], [1], [0, 0, 1, 1], [], []>} : vector<64x128xbf16>, vector<128x128xbf16>, vector<64x128xf32> -> vector<64x128xf32>
    %36 = arith.addf %30, %35 : vector<64x128xf32>
    %c0_39 = arith.constant 0 : index
    %c0_40 = arith.constant 0 : index
    %37 = vector.load %arg3[%c0_39, %c0_40] : memref<1x128xf32, #tpu.memory_space<vmem>>, vector<1x128xf32>
    %38 = vector.broadcast %37 : vector<1x128xf32> to vector<64x128xf32>
    %39 = arith.addf %36, %38 : vector<64x128xf32>
    %cst_41 = arith.constant 0.000000e+00 : f32
    %40 = vector.broadcast %cst_41 : f32 to vector<64x128xf32>
    %41 = arith.maximumf %39, %40 : vector<64x128xf32>
    %42 = vector.shape_cast %41 : vector<64x128xf32> to vector<2x32x128xf32>
    %43 = arith.truncf %42 : vector<2x32x128xf32> to vector<2x32x128xbf16>
    %c0_42 = arith.constant 0 : index
    %c16_43 = arith.constant 16 : index
    %c0_44 = arith.constant 0 : index
    %44 = vector.load %arg11[%c0_42, %c16_43, %c0_44] : memref<2x64x128xbf16, #tpu.memory_space<vmem>>, vector<2x32x128xbf16>
    tpu.vector_store %arg11[%c0_42, %c16_43, %c0_44], %43 {strides = array<i32>} : memref<2x64x128xbf16, #tpu.memory_space<vmem>>, vector<2x32x128xbf16>,
    %c0_45 = arith.constant 0 : index
    %c14_46 = arith.constant 14 : index
    %c0_47 = arith.constant 0 : index
    %45 = vector.load %arg11[%c0_45, %c14_46, %c0_47] : memref<2x64x128xbf16, #tpu.memory_space<vmem>>, vector<2x32x128xbf16>
    %46 = vector.shape_cast %45 : vector<2x32x128xbf16> to vector<64x128xbf16>
    %c0_48 = arith.constant 0 : index
    %c0_49 = arith.constant 0 : index
    %c0_50 = arith.constant 0 : index
    %47 = vector.load %arg4[%c0_48, %c0_49, %c0_50] : memref<5x128x128xbf16, #tpu.memory_space<vmem>>, vector<1x128x128xbf16>
    %48 = vector.shape_cast %47 : vector<1x128x128xbf16> to vector<128x128xbf16>
    %cst_51 = arith.constant dense<0.000000e+00> : vector<64x128xf32>
    %49 = tpu.matmul %46, %48, %cst_51 {dimension_numbers = #tpu.dot_dimension_numbers<[1], [0], [0], [1], [0, 0, 1, 1], [], []>} : vector<64x128xbf16>, vector<128x128xbf16>, vector<64x128xf32> -> vector<64x128xf32>
    %c0_52 = arith.constant 0 : index
    %c15_53 = arith.constant 15 : index
    %c0_54 = arith.constant 0 : index
    %50 = vector.load %arg11[%c0_52, %c15_53, %c0_54] : memref<2x64x128xbf16, #tpu.memory_space<vmem>>, vector<2x32x128xbf16>
    %51 = vector.shape_cast %50 : vector<2x32x128xbf16> to vector<64x128xbf16>
    %c1_55 = arith.constant 1 : index
    %c0_56 = arith.constant 0 : index
    %c0_57 = arith.constant 0 : index
    %52 = vector.load %arg4[%c1_55, %c0_56, %c0_57] : memref<5x128x128xbf16, #tpu.memory_space<vmem>>, vector<1x128x128xbf16>
    %53 = vector.shape_cast %52 : vector<1x128x128xbf16> to vector<128x128xbf16>
    %cst_58 = arith.constant dense<0.000000e+00> : vector<64x128xf32>
    %54 = tpu.matmul %51, %53, %cst_58 {dimension_numbers = #tpu.dot_dimension_numbers<[1], [0], [0], [1], [0, 0, 1, 1], [], []>} : vector<64x128xbf16>, vector<128x128xbf16>, vector<64x128xf32> -> vector<64x128xf32>
    %55 = arith.addf %49, %54 : vector<64x128xf32>
    %c0_59 = arith.constant 0 : index
    %c16_60 = arith.constant 16 : index
    %c0_61 = arith.constant 0 : index
    %56 = vector.load %arg11[%c0_59, %c16_60, %c0_61] : memref<2x64x128xbf16, #tpu.memory_space<vmem>>, vector<2x32x128xbf16>
    %57 = vector.shape_cast %56 : vector<2x32x128xbf16> to vector<64x128xbf16>
    %c2_62 = arith.constant 2 : index
    %c0_63 = arith.constant 0 : index
    %c0_64 = arith.constant 0 : index
    %58 = vector.load %arg4[%c2_62, %c0_63, %c0_64] : memref<5x128x128xbf16, #tpu.memory_space<vmem>>, vector<1x128x128xbf16>
    %59 = vector.shape_cast %58 : vector<1x128x128xbf16> to vector<128x128xbf16>
    %cst_65 = arith.constant dense<0.000000e+00> : vector<64x128xf32>
    %60 = tpu.matmul %57, %59, %cst_65 {dimension_numbers = #tpu.dot_dimension_numbers<[1], [0], [0], [1], [0, 0, 1, 1], [], []>} : vector<64x128xbf16>, vector<128x128xbf16>, vector<64x128xf32> -> vector<64x128xf32>
    %61 = arith.addf %55, %60 : vector<64x128xf32>
    %c0_66 = arith.constant 0 : index
    %c17_67 = arith.constant 17 : index
    %c0_68 = arith.constant 0 : index
    %62 = vector.load %arg11[%c0_66, %c17_67, %c0_68] : memref<2x64x128xbf16, #tpu.memory_space<vmem>>, vector<2x32x128xbf16>
    %63 = vector.shape_cast %62 : vector<2x32x128xbf16> to vector<64x128xbf16>
    %c3_69 = arith.constant 3 : index
    %c0_70 = arith.constant 0 : index
    %c0_71 = arith.constant 0 : index
    %64 = vector.load %arg4[%c3_69, %c0_70, %c0_71] : memref<5x128x128xbf16, #tpu.memory_space<vmem>>, vector<1x128x128xbf16>
    %65 = vector.shape_cast %64 : vector<1x128x128xbf16> to vector<128x128xbf16>
    %cst_72 = arith.constant dense<0.000000e+00> : vector<64x128xf32>
    %66 = tpu.matmul %63, %65, %cst_72 {dimension_numbers = #tpu.dot_dimension_numbers<[1], [0], [0], [1], [0, 0, 1, 1], [], []>} : vector<64x128xbf16>, vector<128x128xbf16>, vector<64x128xf32> -> vector<64x128xf32>
    %67 = arith.addf %61, %66 : vector<64x128xf32>
    %c0_73 = arith.constant 0 : index
    %c18_74 = arith.constant 18 : index
    %c0_75 = arith.constant 0 : index
    %68 = vector.load %arg11[%c0_73, %c18_74, %c0_75] : memref<2x64x128xbf16, #tpu.memory_space<vmem>>, vector<2x32x128xbf16>
    %69 = vector.shape_cast %68 : vector<2x32x128xbf16> to vector<64x128xbf16>
    %c4_76 = arith.constant 4 : index
    %c0_77 = arith.constant 0 : index
    %c0_78 = arith.constant 0 : index
    %70 = vector.load %arg4[%c4_76, %c0_77, %c0_78] : memref<5x128x128xbf16, #tpu.memory_space<vmem>>, vector<1x128x128xbf16>
    %71 = vector.shape_cast %70 : vector<1x128x128xbf16> to vector<128x128xbf16>
    %cst_79 = arith.constant dense<0.000000e+00> : vector<64x128xf32>
    %72 = tpu.matmul %69, %71, %cst_79 {dimension_numbers = #tpu.dot_dimension_numbers<[1], [0], [0], [1], [0, 0, 1, 1], [], []>} : vector<64x128xbf16>, vector<128x128xbf16>, vector<64x128xf32> -> vector<64x128xf32>
    %73 = arith.addf %67, %72 : vector<64x128xf32>
    %c0_80 = arith.constant 0 : index
    %c0_81 = arith.constant 0 : index
    %74 = vector.load %arg5[%c0_80, %c0_81] : memref<1x128xf32, #tpu.memory_space<vmem>>, vector<1x128xf32>
    %75 = vector.broadcast %74 : vector<1x128xf32> to vector<64x128xf32>
    %76 = arith.addf %73, %75 : vector<64x128xf32>
    %cst_82 = arith.constant 0.000000e+00 : f32
    %77 = vector.broadcast %cst_82 : f32 to vector<64x128xf32>
    %78 = arith.maximumf %76, %77 : vector<64x128xf32>
    %79 = vector.shape_cast %78 : vector<64x128xf32> to vector<2x32x128xf32>
    %80 = arith.truncf %79 : vector<2x32x128xf32> to vector<2x32x128xbf16>
    %c0_83 = arith.constant 0 : index
    %c16_84 = arith.constant 16 : index
    %c0_85 = arith.constant 0 : index
    %81 = vector.load %arg12[%c0_83, %c16_84, %c0_85] : memref<2x64x128xbf16, #tpu.memory_space<vmem>>, vector<2x32x128xbf16>
    tpu.vector_store %arg12[%c0_83, %c16_84, %c0_85], %80 {strides = array<i32>} : memref<2x64x128xbf16, #tpu.memory_space<vmem>>, vector<2x32x128xbf16>,
    %c0_86 = arith.constant 0 : index
    %c14_87 = arith.constant 14 : index
    %c0_88 = arith.constant 0 : index
    %82 = vector.load %arg12[%c0_86, %c14_87, %c0_88] : memref<2x64x128xbf16, #tpu.memory_space<vmem>>, vector<2x32x128xbf16>
    %83 = vector.shape_cast %82 : vector<2x32x128xbf16> to vector<64x128xbf16>
    %c0_89 = arith.constant 0 : index
    %c0_90 = arith.constant 0 : index
    %c0_91 = arith.constant 0 : index
    %84 = vector.load %arg6[%c0_89, %c0_90, %c0_91] : memref<5x128x128xbf16, #tpu.memory_space<vmem>>, vector<1x128x128xbf16>
    %85 = vector.shape_cast %84 : vector<1x128x128xbf16> to vector<128x128xbf16>
    %cst_92 = arith.constant dense<0.000000e+00> : vector<64x128xf32>
    %86 = tpu.matmul %83, %85, %cst_92 {dimension_numbers = #tpu.dot_dimension_numbers<[1], [0], [0], [1], [0, 0, 1, 1], [], []>} : vector<64x128xbf16>, vector<128x128xbf16>, vector<64x128xf32> -> vector<64x128xf32>
    %c0_93 = arith.constant 0 : index
    %c15_94 = arith.constant 15 : index
    %c0_95 = arith.constant 0 : index
    %87 = vector.load %arg12[%c0_93, %c15_94, %c0_95] : memref<2x64x128xbf16, #tpu.memory_space<vmem>>, vector<2x32x128xbf16>
    %88 = vector.shape_cast %87 : vector<2x32x128xbf16> to vector<64x128xbf16>
    %c1_96 = arith.constant 1 : index
    %c0_97 = arith.constant 0 : index
    %c0_98 = arith.constant 0 : index
    %89 = vector.load %arg6[%c1_96, %c0_97, %c0_98] : memref<5x128x128xbf16, #tpu.memory_space<vmem>>, vector<1x128x128xbf16>
    %90 = vector.shape_cast %89 : vector<1x128x128xbf16> to vector<128x128xbf16>
    %cst_99 = arith.constant dense<0.000000e+00> : vector<64x128xf32>
    %91 = tpu.matmul %88, %90, %cst_99 {dimension_numbers = #tpu.dot_dimension_numbers<[1], [0], [0], [1], [0, 0, 1, 1], [], []>} : vector<64x128xbf16>, vector<128x128xbf16>, vector<64x128xf32> -> vector<64x128xf32>
    %92 = arith.addf %86, %91 : vector<64x128xf32>
    %c0_100 = arith.constant 0 : index
    %c16_101 = arith.constant 16 : index
    %c0_102 = arith.constant 0 : index
    %93 = vector.load %arg12[%c0_100, %c16_101, %c0_102] : memref<2x64x128xbf16, #tpu.memory_space<vmem>>, vector<2x32x128xbf16>
    %94 = vector.shape_cast %93 : vector<2x32x128xbf16> to vector<64x128xbf16>
    %c2_103 = arith.constant 2 : index
    %c0_104 = arith.constant 0 : index
    %c0_105 = arith.constant 0 : index
    %95 = vector.load %arg6[%c2_103, %c0_104, %c0_105] : memref<5x128x128xbf16, #tpu.memory_space<vmem>>, vector<1x128x128xbf16>
    %96 = vector.shape_cast %95 : vector<1x128x128xbf16> to vector<128x128xbf16>
    %cst_106 = arith.constant dense<0.000000e+00> : vector<64x128xf32>
    %97 = tpu.matmul %94, %96, %cst_106 {dimension_numbers = #tpu.dot_dimension_numbers<[1], [0], [0], [1], [0, 0, 1, 1], [], []>} : vector<64x128xbf16>, vector<128x128xbf16>, vector<64x128xf32> -> vector<64x128xf32>
    %98 = arith.addf %92, %97 : vector<64x128xf32>
    %c0_107 = arith.constant 0 : index
    %c17_108 = arith.constant 17 : index
    %c0_109 = arith.constant 0 : index
    %99 = vector.load %arg12[%c0_107, %c17_108, %c0_109] : memref<2x64x128xbf16, #tpu.memory_space<vmem>>, vector<2x32x128xbf16>
    %100 = vector.shape_cast %99 : vector<2x32x128xbf16> to vector<64x128xbf16>
    %c3_110 = arith.constant 3 : index
    %c0_111 = arith.constant 0 : index
    %c0_112 = arith.constant 0 : index
    %101 = vector.load %arg6[%c3_110, %c0_111, %c0_112] : memref<5x128x128xbf16, #tpu.memory_space<vmem>>, vector<1x128x128xbf16>
    %102 = vector.shape_cast %101 : vector<1x128x128xbf16> to vector<128x128xbf16>
    %cst_113 = arith.constant dense<0.000000e+00> : vector<64x128xf32>
    %103 = tpu.matmul %100, %102, %cst_113 {dimension_numbers = #tpu.dot_dimension_numbers<[1], [0], [0], [1], [0, 0, 1, 1], [], []>} : vector<64x128xbf16>, vector<128x128xbf16>, vector<64x128xf32> -> vector<64x128xf32>
    %104 = arith.addf %98, %103 : vector<64x128xf32>
    %c0_114 = arith.constant 0 : index
    %c18_115 = arith.constant 18 : index
    %c0_116 = arith.constant 0 : index
    %105 = vector.load %arg12[%c0_114, %c18_115, %c0_116] : memref<2x64x128xbf16, #tpu.memory_space<vmem>>, vector<2x32x128xbf16>
    %106 = vector.shape_cast %105 : vector<2x32x128xbf16> to vector<64x128xbf16>
    %c4_117 = arith.constant 4 : index
    %c0_118 = arith.constant 0 : index
    %c0_119 = arith.constant 0 : index
    %107 = vector.load %arg6[%c4_117, %c0_118, %c0_119] : memref<5x128x128xbf16, #tpu.memory_space<vmem>>, vector<1x128x128xbf16>
    %108 = vector.shape_cast %107 : vector<1x128x128xbf16> to vector<128x128xbf16>
    %cst_120 = arith.constant dense<0.000000e+00> : vector<64x128xf32>
    %109 = tpu.matmul %106, %108, %cst_120 {dimension_numbers = #tpu.dot_dimension_numbers<[1], [0], [0], [1], [0, 0, 1, 1], [], []>} : vector<64x128xbf16>, vector<128x128xbf16>, vector<64x128xf32> -> vector<64x128xf32>
    %110 = arith.addf %104, %109 : vector<64x128xf32>
    %c0_121 = arith.constant 0 : index
    %c0_122 = arith.constant 0 : index
    %111 = vector.load %arg7[%c0_121, %c0_122] : memref<1x128xf32, #tpu.memory_space<vmem>>, vector<1x128xf32>
    %112 = vector.broadcast %111 : vector<1x128xf32> to vector<64x128xf32>
    %113 = arith.addf %110, %112 : vector<64x128xf32>
    %cst_123 = arith.constant 0.000000e+00 : f32
    %114 = vector.broadcast %cst_123 : f32 to vector<64x128xf32>
    %115 = arith.maximumf %113, %114 : vector<64x128xf32>
    %116 = vector.shape_cast %115 : vector<64x128xf32> to vector<2x32x128xf32>
    %117 = arith.truncf %116 : vector<2x32x128xf32> to vector<2x32x128xbf16>
    %c0_124 = arith.constant 0 : index
    %c16_125 = arith.constant 16 : index
    %c0_126 = arith.constant 0 : index
    %118 = vector.load %arg11[%c0_124, %c16_125, %c0_126] : memref<2x64x128xbf16, #tpu.memory_space<vmem>>, vector<2x32x128xbf16>
    tpu.vector_store %arg11[%c0_124, %c16_125, %c0_126], %117 {strides = array<i32>} : memref<2x64x128xbf16, #tpu.memory_space<vmem>>, vector<2x32x128xbf16>,
    %c0_127 = arith.constant 0 : index
    %c14_128 = arith.constant 14 : index
    %c0_129 = arith.constant 0 : index
    %119 = vector.load %arg11[%c0_127, %c14_128, %c0_129] : memref<2x64x128xbf16, #tpu.memory_space<vmem>>, vector<2x32x128xbf16>
    %120 = vector.shape_cast %119 : vector<2x32x128xbf16> to vector<64x128xbf16>
    %c0_130 = arith.constant 0 : index
    %c0_131 = arith.constant 0 : index
    %c0_132 = arith.constant 0 : index
    %121 = vector.load %arg8[%c0_130, %c0_131, %c0_132] : memref<5x128x128xbf16, #tpu.memory_space<vmem>>, vector<1x128x128xbf16>
    %122 = vector.shape_cast %121 : vector<1x128x128xbf16> to vector<128x128xbf16>
    %cst_133 = arith.constant dense<0.000000e+00> : vector<64x128xf32>
    %123 = tpu.matmul %120, %122, %cst_133 {dimension_numbers = #tpu.dot_dimension_numbers<[1], [0], [0], [1], [0, 0, 1, 1], [], []>} : vector<64x128xbf16>, vector<128x128xbf16>, vector<64x128xf32> -> vector<64x128xf32>
    %c0_134 = arith.constant 0 : index
    %c15_135 = arith.constant 15 : index
    %c0_136 = arith.constant 0 : index
    %124 = vector.load %arg11[%c0_134, %c15_135, %c0_136] : memref<2x64x128xbf16, #tpu.memory_space<vmem>>, vector<2x32x128xbf16>
    %125 = vector.shape_cast %124 : vector<2x32x128xbf16> to vector<64x128xbf16>
    %c1_137 = arith.constant 1 : index
    %c0_138 = arith.constant 0 : index
    %c0_139 = arith.constant 0 : index
    %126 = vector.load %arg8[%c1_137, %c0_138, %c0_139] : memref<5x128x128xbf16, #tpu.memory_space<vmem>>, vector<1x128x128xbf16>
    %127 = vector.shape_cast %126 : vector<1x128x128xbf16> to vector<128x128xbf16>
    %cst_140 = arith.constant dense<0.000000e+00> : vector<64x128xf32>
    %128 = tpu.matmul %125, %127, %cst_140 {dimension_numbers = #tpu.dot_dimension_numbers<[1], [0], [0], [1], [0, 0, 1, 1], [], []>} : vector<64x128xbf16>, vector<128x128xbf16>, vector<64x128xf32> -> vector<64x128xf32>
    %129 = arith.addf %123, %128 : vector<64x128xf32>
    %c0_141 = arith.constant 0 : index
    %c16_142 = arith.constant 16 : index
    %c0_143 = arith.constant 0 : index
    %130 = vector.load %arg11[%c0_141, %c16_142, %c0_143] : memref<2x64x128xbf16, #tpu.memory_space<vmem>>, vector<2x32x128xbf16>
    %131 = vector.shape_cast %130 : vector<2x32x128xbf16> to vector<64x128xbf16>
    %c2_144 = arith.constant 2 : index
    %c0_145 = arith.constant 0 : index
    %c0_146 = arith.constant 0 : index
    %132 = vector.load %arg8[%c2_144, %c0_145, %c0_146] : memref<5x128x128xbf16, #tpu.memory_space<vmem>>, vector<1x128x128xbf16>
    %133 = vector.shape_cast %132 : vector<1x128x128xbf16> to vector<128x128xbf16>
    %cst_147 = arith.constant dense<0.000000e+00> : vector<64x128xf32>
    %134 = tpu.matmul %131, %133, %cst_147 {dimension_numbers = #tpu.dot_dimension_numbers<[1], [0], [0], [1], [0, 0, 1, 1], [], []>} : vector<64x128xbf16>, vector<128x128xbf16>, vector<64x128xf32> -> vector<64x128xf32>
    %135 = arith.addf %129, %134 : vector<64x128xf32>
    %c0_148 = arith.constant 0 : index
    %c17_149 = arith.constant 17 : index
    %c0_150 = arith.constant 0 : index
    %136 = vector.load %arg11[%c0_148, %c17_149, %c0_150] : memref<2x64x128xbf16, #tpu.memory_space<vmem>>, vector<2x32x128xbf16>
    %137 = vector.shape_cast %136 : vector<2x32x128xbf16> to vector<64x128xbf16>
    %c3_151 = arith.constant 3 : index
    %c0_152 = arith.constant 0 : index
    %c0_153 = arith.constant 0 : index
    %138 = vector.load %arg8[%c3_151, %c0_152, %c0_153] : memref<5x128x128xbf16, #tpu.memory_space<vmem>>, vector<1x128x128xbf16>
    %139 = vector.shape_cast %138 : vector<1x128x128xbf16> to vector<128x128xbf16>
    %cst_154 = arith.constant dense<0.000000e+00> : vector<64x128xf32>
    %140 = tpu.matmul %137, %139, %cst_154 {dimension_numbers = #tpu.dot_dimension_numbers<[1], [0], [0], [1], [0, 0, 1, 1], [], []>} : vector<64x128xbf16>, vector<128x128xbf16>, vector<64x128xf32> -> vector<64x128xf32>
    %141 = arith.addf %135, %140 : vector<64x128xf32>
    %c0_155 = arith.constant 0 : index
    %c18_156 = arith.constant 18 : index
    %c0_157 = arith.constant 0 : index
    %142 = vector.load %arg11[%c0_155, %c18_156, %c0_157] : memref<2x64x128xbf16, #tpu.memory_space<vmem>>, vector<2x32x128xbf16>
    %143 = vector.shape_cast %142 : vector<2x32x128xbf16> to vector<64x128xbf16>
    %c4_158 = arith.constant 4 : index
    %c0_159 = arith.constant 0 : index
    %c0_160 = arith.constant 0 : index
    %144 = vector.load %arg8[%c4_158, %c0_159, %c0_160] : memref<5x128x128xbf16, #tpu.memory_space<vmem>>, vector<1x128x128xbf16>
    %145 = vector.shape_cast %144 : vector<1x128x128xbf16> to vector<128x128xbf16>
    %cst_161 = arith.constant dense<0.000000e+00> : vector<64x128xf32>
    %146 = tpu.matmul %143, %145, %cst_161 {dimension_numbers = #tpu.dot_dimension_numbers<[1], [0], [0], [1], [0, 0, 1, 1], [], []>} : vector<64x128xbf16>, vector<128x128xbf16>, vector<64x128xf32> -> vector<64x128xf32>
    %147 = arith.addf %141, %146 : vector<64x128xf32>
    %c0_162 = arith.constant 0 : index
    %c0_163 = arith.constant 0 : index
    %148 = vector.load %arg9[%c0_162, %c0_163] : memref<1x128xf32, #tpu.memory_space<vmem>>, vector<1x128xf32>
    %149 = vector.broadcast %148 : vector<1x128xf32> to vector<64x128xf32>
    %150 = arith.addf %147, %149 : vector<64x128xf32>
    %151 = vector.shape_cast %150 : vector<64x128xf32> to vector<2x32x128xf32>
    %c0_164 = arith.constant 0 : index
    %c0_165 = arith.constant 0 : index
    %c0_166 = arith.constant 0 : index
    %152 = vector.load %arg10[%c0_164, %c0_165, %c0_166] : memref<2x32x128xf32, #tpu.memory_space<vmem>>, vector<2x32x128xf32>
    tpu.vector_store %arg10[%c0_164, %c0_165, %c0_166], %151 {strides = array<i32>} : memref<2x32x128xf32, #tpu.memory_space<vmem>>, vector<2x32x128xf32>,
    return
  }
  func.func @transform_0(%arg0: i32) -> (i32, i32, i32) {
    %c0_i32 = arith.constant 0 : i32
    %c0_i32_0 = arith.constant 0 : i32
    %c0_i32_1 = arith.constant 0 : i32
    return %arg0, %c0_i32, %c0_i32_0 : i32, i32, i32
  }
  func.func @transform_1(%arg0: i32) -> (i32, i32, i32) {
    %c0_i32 = arith.constant 0 : i32
    %c0_i32_0 = arith.constant 0 : i32
    %c0_i32_1 = arith.constant 0 : i32
    %c0_i32_2 = arith.constant 0 : i32
    return %c0_i32, %c0_i32_0, %c0_i32_1 : i32, i32, i32
  }
  func.func @transform_2(%arg0: i32) -> (i32, i32) {
    %c0_i32 = arith.constant 0 : i32
    %c0_i32_0 = arith.constant 0 : i32
    %c0_i32_1 = arith.constant 0 : i32
    return %c0_i32, %c0_i32_0 : i32, i32
  }
  func.func @transform_3(%arg0: i32) -> (i32, i32, i32) {
    %c0_i32 = arith.constant 0 : i32
    %c0_i32_0 = arith.constant 0 : i32
    %c0_i32_1 = arith.constant 0 : i32
    %c0_i32_2 = arith.constant 0 : i32
    return %c0_i32, %c0_i32_0, %c0_i32_1 : i32, i32, i32
  }
  func.func @transform_4(%arg0: i32) -> (i32, i32) {
    %c0_i32 = arith.constant 0 : i32
    %c0_i32_0 = arith.constant 0 : i32
    %c0_i32_1 = arith.constant 0 : i32
    return %c0_i32, %c0_i32_0 : i32, i32
  }
  func.func @transform_5(%arg0: i32) -> (i32, i32, i32) {
    %c0_i32 = arith.constant 0 : i32
    %c0_i32_0 = arith.constant 0 : i32
    %c0_i32_1 = arith.constant 0 : i32
    %c0_i32_2 = arith.constant 0 : i32
    return %c0_i32, %c0_i32_0, %c0_i32_1 : i32, i32, i32
  }
  func.func @transform_6(%arg0: i32) -> (i32, i32) {
    %c0_i32 = arith.constant 0 : i32
    %c0_i32_0 = arith.constant 0 : i32
    %c0_i32_1 = arith.constant 0 : i32
    return %c0_i32, %c0_i32_0 : i32, i32
  }
  func.func @transform_7(%arg0: i32) -> (i32, i32, i32) {
    %c0_i32 = arith.constant 0 : i32
    %c0_i32_0 = arith.constant 0 : i32
    %c0_i32_1 = arith.constant 0 : i32
    %c0_i32_2 = arith.constant 0 : i32
    return %c0_i32, %c0_i32_0, %c0_i32_1 : i32, i32, i32
  }
  func.func @transform_8(%arg0: i32) -> (i32, i32) {
    %c0_i32 = arith.constant 0 : i32
    %c0_i32_0 = arith.constant 0 : i32
    %c0_i32_1 = arith.constant 0 : i32
    return %c0_i32, %c0_i32_0 : i32, i32
  }
  func.func @transform_9(%arg0: i32) -> (i32, i32, i32) {
    %c0_i32 = arith.constant 0 : i32
    %c0_i32_0 = arith.constant 0 : i32
    %c0_i32_1 = arith.constant 0 : i32
    return %arg0, %c0_i32, %c0_i32_0 : i32, i32, i32
  }
}

</mosaic_0001>

<llo_original>
// kernel: transition_generator.1
$region0: #{transition_generator.1}
  #allocation0 [shape = 'u32[]', space=smem, size = 0x4, offset = 0x4, fixed_abs, tag = 'smem constant byte address 0x4 - core index']
  #allocation1 [shape = 'u32[144,128]{1,0:T(1,128)}', space=vmem, size = 0x12000, scoped, tag = 'internal scratch']
  #allocation2 [shape = 'bf16[2,64,128]{2,1,0:T(16,128)(2,1)}', space=vmem, size = 0x8000, scoped, tag = 'scratch operand']
  #allocation3 [shape = 'bf16[2,64,128]{2,1,0:T(16,128)(2,1)}', space=vmem, size = 0x8000, scoped, tag = 'scratch operand']
  %s0 = inlined_call_operand.vmem [shape: bf16[2,64,128], index: 0, kind: input, shape index: {}]
  %s1 = inlined_call_operand.vmem [shape: bf16[5,128,128], index: 1, kind: input, shape index: {}]
  %s2 = inlined_call_operand.vmem [shape: f32[1,128], index: 2, kind: input, shape index: {}]
  %s3 = inlined_call_operand.vmem [shape: bf16[5,128,128], index: 3, kind: input, shape index: {}]
  %s4 = inlined_call_operand.vmem [shape: f32[1,128], index: 4, kind: input, shape index: {}]
  %s5 = inlined_call_operand.vmem [shape: bf16[5,128,128], index: 5, kind: input, shape index: {}]
  %s6 = inlined_call_operand.vmem [shape: f32[1,128], index: 6, kind: input, shape index: {}]
  %s7 = inlined_call_operand.vmem [shape: bf16[5,128,128], index: 7, kind: input, shape index: {}]
  %s8 = inlined_call_operand.vmem [shape: f32[1,128], index: 8, kind: input, shape index: {}]
  %s9 = inlined_call_operand.vmem [shape: f32[2,32,128], index: 9, kind: output, shape index: {}]
  %s10 = sld [smem:[#allocation0]]
  $region46: #{transition_generator.1} parent=0
    _
  %s12 = ssub.s32 1, %s10
  %s13 = scalar_select 0, %s12, %s10
  // Predicated region
  $region2: #{transition_generator.1} parent=0 // pred_check
    _
  $region3: #{transition_generator.1} parent=0 // pred_check_branch
    %15 = sbr.rel (0) target = $region5
  $region4: #{transition_generator.1} parent=0 // pred_region
    _
  $region5: #{transition_generator.1} parent=0 // pred_fallthru
    _
  // Predicated region
  $region6: #{transition_generator.1} parent=0 // pred_check
    _
  $region7: #{transition_generator.1} parent=0 // pred_check_branch
    %17 = sbr.rel (0) target = $region9
  $region8: #{transition_generator.1} parent=0 // pred_region
    _
  $region9: #{transition_generator.1} parent=0 // pred_fallthru
    _
  // Predicated region
  $region10: #{transition_generator.1} parent=0 // pred_check
    _
  $region11: #{transition_generator.1} parent=0 // pred_check_branch
    %19 = sbr.rel (0) target = $region13
  $region12: #{transition_generator.1} parent=0 // pred_region
    _
  $region13: #{transition_generator.1} parent=0 // pred_fallthru
    _
  // Predicated region
  $region14: #{transition_generator.1} parent=0 // pred_check
    _
  $region15: #{transition_generator.1} parent=0 // pred_check_branch
    %21 = sbr.rel (0) target = $region17
  $region16: #{transition_generator.1} parent=0 // pred_region
    _
  $region17: #{transition_generator.1} parent=0 // pred_fallthru
    _
  // Predicated region
  $region18: #{transition_generator.1} parent=0 // pred_check
    _
  $region19: #{transition_generator.1} parent=0 // pred_check_branch
    %23 = sbr.rel (0) target = $region21
  $region20: #{transition_generator.1} parent=0 // pred_region
    _
  $region21: #{transition_generator.1} parent=0 // pred_fallthru
    _
  // Predicated region
  $region22: #{transition_generator.1} parent=0 // pred_check
    _
  $region23: #{transition_generator.1} parent=0 // pred_check_branch
    %25 = sbr.rel (0) target = $region25
  $region24: #{transition_generator.1} parent=0 // pred_region
    _
  $region25: #{transition_generator.1} parent=0 // pred_fallthru
    _
  // Predicated region
  $region26: #{transition_generator.1} parent=0 // pred_check
    _
  $region27: #{transition_generator.1} parent=0 // pred_check_branch
    %27 = sbr.rel (0) target = $region29
  $region28: #{transition_generator.1} parent=0 // pred_region
    _
  $region29: #{transition_generator.1} parent=0 // pred_fallthru
    _
  // Predicated region
  $region30: #{transition_generator.1} parent=0 // pred_check
    _
  $region31: #{transition_generator.1} parent=0 // pred_check_branch
    %29 = sbr.rel (0) target = $region33
  $region32: #{transition_generator.1} parent=0 // pred_region
    _
  $region33: #{transition_generator.1} parent=0 // pred_fallthru
    _
  // Predicated region
  $region34: #{transition_generator.1} parent=0 // pred_check
    _
  $region35: #{transition_generator.1} parent=0 // pred_check_branch
    %31 = sbr.rel (0) target = $region37
  $region36: #{transition_generator.1} parent=0 // pred_region
    _
  $region37: #{transition_generator.1} parent=0 // pred_fallthru
    _
  %33 = vst [vmem:[#allocation2] sm:$0xff] 0
  %34 = vst [vmem:[#allocation2 + $0x20] sm:$0xff] 0
  %35 = vst [vmem:[#allocation2 + $0x18] sm:$0xff] 0
  %36 = vst [vmem:[#allocation2 + $0x38] sm:$0xff] 0
  %37 = vst [vmem:[#allocation3] sm:$0xff] 0
  %38 = vst [vmem:[#allocation3 + $0x20] sm:$0xff] 0
  %39 = vst [vmem:[#allocation3 + $0x18] sm:$0xff] 0
  %40 = vst [vmem:[#allocation3 + $0x38] sm:$0xff] 0
  %v41 = vld [vmem:[%s0 + $0x4] sm:$0x8]
  %v42 = vld [vmem:[%s0 + $0x8] sm:$0xf]
  %v43 = vld [vmem:[%s0 + $0xc] sm:$0xf]
  %v44 = vld [vmem:[%s0 + $0x10] sm:$0xf]
  %v45 = vld [vmem:[%s0 + $0x14] sm:$0x7]
  %v46 = vld [vmem:[%s0 + $0x24] sm:$0x8]
  %v47 = vld [vmem:[%s0 + $0x28] sm:$0xf]
  %v48 = vld [vmem:[%s0 + $0x2c] sm:$0xf]
  %v49 = vld [vmem:[%s0 + $0x30] sm:$0xf]
  %v50 = vld [vmem:[%s0 + $0x34] sm:$0x7]
  %vm61 = vcmask 1040384
  %vm62 = vcmask 1044484
  %vm63 = vmor %vm61, %vm62
  %v64 = vrot.slane %v41, 7
  %v65 = vrot.slane %v64, 4
  %v66 = vrot.slane %v42, 7
  %v67 = vsel %vm63, %v65, %v66
  %v68 = vrot.slane %v66, 4
  %v69 = vrot.slane %v43, 7
  %v70 = vsel %vm63, %v68, %v69
  %v71 = vrot.slane %v69, 4
  %v72 = vrot.slane %v44, 7
  %v73 = vsel %vm63, %v71, %v72
  %v74 = vrot.slane %v72, 4
  %v75 = vrot.slane %v45, 7
  %v76 = vsel %vm63, %v74, %v75
  %v77 = vrot.slane %v46, 7
  %v78 = vrot.slane %v77, 4
  %v79 = vrot.slane %v47, 7
  %v80 = vsel %vm63, %v78, %v79
  %v81 = vrot.slane %v79, 4
  %v82 = vrot.slane %v48, 7
  %v83 = vsel %vm63, %v81, %v82
  %v84 = vrot.slane %v82, 4
  %v85 = vrot.slane %v49, 7
  %v86 = vsel %vm63, %v84, %v85
  %v87 = vrot.slane %v85, 4
  %v88 = vrot.slane %v50, 7
  %v89 = vsel %vm63, %v87, %v88
  %v90 = vld [vmem:[%s1] sm:$0xf]
  %v91 = vld [vmem:[%s1 + $0x4] sm:$0xf]
  %v92 = vld [vmem:[%s1 + $0x8] sm:$0xf]
  %v93 = vld [vmem:[%s1 + $0xc] sm:$0xf]
  %v94 = vld [vmem:[%s1 + $0x10] sm:$0xf]
  %v95 = vld [vmem:[%s1 + $0x14] sm:$0xf]
  %v96 = vld [vmem:[%s1 + $0x18] sm:$0xf]
  %v97 = vld [vmem:[%s1 + $0x1c] sm:$0xf]
  %v98 = vld [vmem:[%s1 + $0x20] sm:$0xf]
  %v99 = vld [vmem:[%s1 + $0x24] sm:$0xf]
  %v100 = vld [vmem:[%s1 + $0x28] sm:$0xf]
  %v101 = vld [vmem:[%s1 + $0x2c] sm:$0xf]
  %v102 = vld [vmem:[%s1 + $0x30] sm:$0xf]
  %v103 = vld [vmem:[%s1 + $0x34] sm:$0xf]
  %v104 = vld [vmem:[%s1 + $0x38] sm:$0xf]
  %v105 = vld [vmem:[%s1 + $0x3c] sm:$0xf]
  %v106 = vld [vmem:[%s0 + $0x14] sm:$0xf]
  %v107 = vld [vmem:[%s0 + $0x34] sm:$0xf]
  %vm108 = vsmask.f32 256
  %vm109 = vsmask.f32 4368
  %vm110 = vmor %vm108, %vm109
  %v112 = vshrl.u32 %v41, 16
  %v114 = vrot.slane %v112, 7
  %v115 = vrot.slane %v114, 4
  %v117 = vshrl.u32 %v42, 16
  %v119 = vrot.slane %v117, 7
  %v120 = vshll.u32 %v42, 16
  %v122 = vor.u32 %v119, %v120
  %v123 = vsel %vm110, %v115, %v122
  %v124 = vrot.slane %v119, 4
  %v126 = vshrl.u32 %v43, 16
  %v128 = vrot.slane %v126, 7
  %v129 = vshll.u32 %v43, 16
  %v131 = vor.u32 %v128, %v129
  %v132 = vsel %vm110, %v124, %v131
  %v133 = vrot.slane %v128, 4
  %v135 = vshrl.u32 %v44, 16
  %v137 = vrot.slane %v135, 7
  %v138 = vshll.u32 %v44, 16
  %v140 = vor.u32 %v137, %v138
  %v141 = vsel %vm110, %v133, %v140
  %v142 = vrot.slane %v137, 4
  %v144 = vshrl.u32 %v106, 16
  %v146 = vrot.slane %v144, 7
  %v147 = vshll.u32 %v106, 16
  %v149 = vor.u32 %v146, %v147
  %v150 = vsel %vm110, %v142, %v149
  %v152 = vshrl.u32 %v46, 16
  %v154 = vrot.slane %v152, 7
  %v155 = vrot.slane %v154, 4
  %v157 = vshrl.u32 %v47, 16
  %v159 = vrot.slane %v157, 7
  %v160 = vshll.u32 %v47, 16
  %v162 = vor.u32 %v159, %v160
  %v163 = vsel %vm110, %v155, %v162
  %v164 = vrot.slane %v159, 4
  %v166 = vshrl.u32 %v48, 16
  %v168 = vrot.slane %v166, 7
  %v169 = vshll.u32 %v48, 16
  %v171 = vor.u32 %v168, %v169
  %v172 = vsel %vm110, %v164, %v171
  %v173 = vrot.slane %v168, 4
  %v175 = vshrl.u32 %v49, 16
  %v177 = vrot.slane %v175, 7
  %v178 = vshll.u32 %v49, 16
  %v180 = vor.u32 %v177, %v178
  %v181 = vsel %vm110, %v173, %v180
  %v182 = vrot.slane %v177, 4
  %v184 = vshrl.u32 %v107, 16
  %v186 = vrot.slane %v184, 7
  %v187 = vshll.u32 %v107, 16
  %v189 = vor.u32 %v186, %v187
  %v190 = vsel %vm110, %v182, %v189
  %s191 = scalar_lea.vmem %s1, 64
  %v192 = vld [vmem:[%s191] sm:$0xf]
  %v193 = vld [vmem:[%s191 + $0x4] sm:$0xf]
  %v194 = vld [vmem:[%s191 + $0x8] sm:$0xf]
  %v195 = vld [vmem:[%s191 + $0xc] sm:$0xf]
  %v196 = vld [vmem:[%s191 + $0x10] sm:$0xf]
  %v197 = vld [vmem:[%s191 + $0x14] sm:$0xf]
  %v198 = vld [vmem:[%s191 + $0x18] sm:$0xf]
  %v199 = vld [vmem:[%s191 + $0x1c] sm:$0xf]
  %v200 = vld [vmem:[%s191 + $0x20] sm:$0xf]
  %v201 = vld [vmem:[%s191 + $0x24] sm:$0xf]
  %v202 = vld [vmem:[%s191 + $0x28] sm:$0xf]
  %v203 = vld [vmem:[%s191 + $0x2c] sm:$0xf]
  %v204 = vld [vmem:[%s191 + $0x30] sm:$0xf]
  %v205 = vld [vmem:[%s191 + $0x34] sm:$0xf]
  %v206 = vld [vmem:[%s191 + $0x38] sm:$0xf]
  %v207 = vld [vmem:[%s191 + $0x3c] sm:$0xf]
  %v208 = vunpack.c.l.b16 %v123
  %v209 = vunpack.c.l.b16 %v132
  %v210 = vunpack.c.l.b16 %v141
  %v211 = vunpack.c.l.b16 %v150
  %v212 = vunpack.c.l.b16 %v163
  %v213 = vunpack.c.l.b16 %v172
  %v214 = vunpack.c.l.b16 %v181
  %v215 = vunpack.c.l.b16 %v190
  %v216 = vpack.c.b16 %v209, %v208
  %v217 = vpack.c.b16 %v211, %v210
  %v218 = vpack.c.b16 %v213, %v212
  %v219 = vpack.c.b16 %v215, %v214
  %v240 = vunpack.c.l.b16 %v192
  %v241 = vunpack.c.l.b16 %v193
  %v242 = vunpack.c.l.b16 %v194
  %v243 = vunpack.c.l.b16 %v195
  %v244 = vunpack.c.l.b16 %v196
  %v245 = vunpack.c.l.b16 %v197
  %v246 = vunpack.c.l.b16 %v198
  %v247 = vunpack.c.l.b16 %v199
  %v248 = vunpack.c.l.b16 %v200
  %v249 = vunpack.c.l.b16 %v201
  %v250 = vunpack.c.l.b16 %v202
  %v251 = vunpack.c.l.b16 %v203
  %v252 = vunpack.c.l.b16 %v204
  %v253 = vunpack.c.l.b16 %v205
  %v254 = vunpack.c.l.b16 %v206
  %v255 = vunpack.c.l.b16 %v207
  %v256 = vpack.c.b16 %v241, %v240
  %v257 = vpack.c.b16 %v243, %v242
  %v258 = vpack.c.b16 %v245, %v244
  %v259 = vpack.c.b16 %v247, %v246
  %v260 = vpack.c.b16 %v249, %v248
  %v261 = vpack.c.b16 %v251, %v250
  %v262 = vpack.c.b16 %v253, %v252
  %v263 = vpack.c.b16 %v255, %v254
  %272 = vmatprep.subr.bf16.mxu0 0
  %273 = vmatpush1.bf16.msra.mxu0 %v256
  %274 = vmatprep.subr.bf16.mxu0 0
  %275 = vmatpush1.bf16.msra.mxu0 %v257
  %276 = vmatprep.subr.bf16.mxu0 0
  %277 = vmatpush1.bf16.msra.mxu0 %v258
  %278 = vmatprep.subr.bf16.mxu0 0
  %279 = vmatpush1.bf16.msra.mxu0 %v259
  %280 = vmatprep.subr.bf16.mxu0 0
  %281 = vmatpush1.bf16.msra.mxu0 %v260
  %282 = vmatprep.subr.bf16.mxu0 0
  %283 = vmatpush1.bf16.msra.mxu0 %v261
  %284 = vmatprep.subr.bf16.mxu0 0
  %285 = vmatpush1.bf16.msra.mxu0 %v262
  %286 = vmatprep.subr.bf16.mxu0 0
  %287 = vmatpush1.bf16.msra.mxu0 %v263
  %288 = vmatprep.subr.bf16.mxu0 0
  %289 = vmatpush1.bf16.msra.mxu0 0
  %290 = vmatprep.subr.bf16.mxu0 0
  %291 = vmatpush1.bf16.msra.mxu0 0
  %292 = vmatprep.subr.bf16.mxu0 0
  %293 = vmatpush1.bf16.msra.mxu0 0
  %294 = vmatprep.subr.bf16.mxu0 0
  %295 = vmatpush1.bf16.msra.mxu0 0
  %296 = vmatprep.subr.bf16.mxu0 0
  %297 = vmatpush1.bf16.msra.mxu0 0
  %298 = vmatprep.subr.bf16.mxu0 0
  %299 = vmatpush1.bf16.msra.mxu0 0
  %300 = vmatprep.subr.bf16.mxu0 0
  %301 = vmatpush1.bf16.msra.mxu0 0
  %302 = vmatprep.subr.bf16.mxu0 0
  %303 = vmatpush1.bf16.msra.mxu0 0
  %304 = vmatprep.mubr.bf16.mxu0 0
  %305 = vmatmul.mubr.bf16.gmra.mrb[0].mxu0 %v216
  %v306 = vpop.f32.mrb[0].mxu0
  %v307 = vadd.f32 0.0, %v306
  %v308 = vpop.f32.mrb[0].mxu0
  %v309 = vpop.f32.mrb[0].mxu0
  %v310 = vadd.f32 0.0, %v309
  %v311 = vpop.f32.mrb[0].mxu0
  %312 = vmatprep.mubr.bf16.mxu0 0
  %313 = vmatmul.mubr.bf16.gmra.mrb[0].mxu0 %v217
  %v314 = vpop.f32.mrb[0].mxu0
  %v315 = vadd.f32 0.0, %v314
  %v316 = vpop.f32.mrb[0].mxu0
  %v317 = vpop.f32.mrb[0].mxu0
  %v318 = vadd.f32 0.0, %v317
  %v319 = vpop.f32.mrb[0].mxu0
  %320 = vmatprep.mubr.bf16.mxu0 0
  %321 = vmatmul.mubr.bf16.gmra.mrb[0].mxu0 %v218
  %v322 = vpop.f32.mrb[0].mxu0
  %v323 = vadd.f32 0.0, %v322
  %v324 = vpop.f32.mrb[0].mxu0
  %v325 = vpop.f32.mrb[0].mxu0
  %v326 = vadd.f32 0.0, %v325
  %v327 = vpop.f32.mrb[0].mxu0
  %328 = vmatprep.mubr.bf16.mxu0 0
  %329 = vmatmul.mubr.bf16.gmra.mrb[0].mxu0 %v219
  %v330 = vpop.f32.mrb[0].mxu0
  %v331 = vadd.f32 0.0, %v330
  %v332 = vpop.f32.mrb[0].mxu0
  %v333 = vpop.f32.mrb[0].mxu0
  %v334 = vadd.f32 0.0, %v333
  %v335 = vpop.f32.mrb[0].mxu0
  %336 = vdwg.mxu0
  %v337 = vunpack.c.l.b16 %v67
  %v338 = vunpack.c.l.b16 %v70
  %v339 = vunpack.c.l.b16 %v73
  %v340 = vunpack.c.l.b16 %v76
  %v341 = vunpack.c.l.b16 %v80
  %v342 = vunpack.c.l.b16 %v83
  %v343 = vunpack.c.l.b16 %v86
  %v344 = vunpack.c.l.b16 %v89
  %v345 = vpack.c.b16 %v338, %v337
  %v346 = vpack.c.b16 %v340, %v339
  %v347 = vpack.c.b16 %v342, %v341
  %v348 = vpack.c.b16 %v344, %v343
  %v369 = vunpack.c.l.b16 %v90
  %v370 = vunpack.c.l.b16 %v91
  %v371 = vunpack.c.l.b16 %v92
  %v372 = vunpack.c.l.b16 %v93
  %v373 = vunpack.c.l.b16 %v94
  %v374 = vunpack.c.l.b16 %v95
  %v375 = vunpack.c.l.b16 %v96
  %v376 = vunpack.c.l.b16 %v97
  %v377 = vunpack.c.l.b16 %v98
  %v378 = vunpack.c.l.b16 %v99
  %v379 = vunpack.c.l.b16 %v100
  %v380 = vunpack.c.l.b16 %v101
  %v381 = vunpack.c.l.b16 %v102
  %v382 = vunpack.c.l.b16 %v103
  %v383 = vunpack.c.l.b16 %v104
  %v384 = vunpack.c.l.b16 %v105
  %v385 = vpack.c.b16 %v370, %v369
  %v386 = vpack.c.b16 %v372, %v371
  %v387 = vpack.c.b16 %v374, %v373
  %v388 = vpack.c.b16 %v376, %v375
  %v389 = vpack.c.b16 %v378, %v377
  %v390 = vpack.c.b16 %v380, %v379
  %v391 = vpack.c.b16 %v382, %v381
  %v392 = vpack.c.b16 %v384, %v383
  %401 = vmatprep.subr.bf16.mxu0 0
  %402 = vmatpush1.bf16.msra.mxu0 %v385
  %403 = vmatprep.subr.bf16.mxu0 0
  %404 = vmatpush1.bf16.msra.mxu0 %v386
  %405 = vmatprep.subr.bf16.mxu0 0
  %406 = vmatpush1.bf16.msra.mxu0 %v387
  %407 = vmatprep.subr.bf16.mxu0 0
  %408 = vmatpush1.bf16.msra.mxu0 %v388
  %409 = vmatprep.subr.bf16.mxu0 0
  %410 = vmatpush1.bf16.msra.mxu0 %v389
  %411 = vmatprep.subr.bf16.mxu0 0
  %412 = vmatpush1.bf16.msra.mxu0 %v390
  %413 = vmatprep.subr.bf16.mxu0 0
  %414 = vmatpush1.bf16.msra.mxu0 %v391
  %415 = vmatprep.subr.bf16.mxu0 0
  %416 = vmatpush1.bf16.msra.mxu0 %v392
  %417 = vmatprep.subr.bf16.mxu0 0
  %418 = vmatpush1.bf16.msra.mxu0 0
  %419 = vmatprep.subr.bf16.mxu0 0
  %420 = vmatpush1.bf16.msra.mxu0 0
  %421 = vmatprep.subr.bf16.mxu0 0
  %422 = vmatpush1.bf16.msra.mxu0 0
  %423 = vmatprep.subr.bf16.mxu0 0
  %424 = vmatpush1.bf16.msra.mxu0 0
  %425 = vmatprep.subr.bf16.mxu0 0
  %426 = vmatpush1.bf16.msra.mxu0 0
  %427 = vmatprep.subr.bf16.mxu0 0
  %428 = vmatpush1.bf16.msra.mxu0 0
  %429 = vmatprep.subr.bf16.mxu0 0
  %430 = vmatpush1.bf16.msra.mxu0 0
  %431 = vmatprep.subr.bf16.mxu0 0
  %432 = vmatpush1.bf16.msra.mxu0 0
  %433 = vmatprep.mubr.bf16.mxu0 0
  %434 = vmatmul.mubr.bf16.gmra.mrb[0].mxu0 %v345
  %v435 = vpop.f32.mrb[0].mxu0
  %v436 = vadd.f32 %v307, %v435
  %v437 = vpop.f32.mrb[0].mxu0
  %v438 = vpop.f32.mrb[0].mxu0
  %v439 = vadd.f32 %v310, %v438
  %v440 = vpop.f32.mrb[0].mxu0
  %441 = vmatprep.mubr.bf16.mxu0 0
  %442 = vmatmul.mubr.bf16.gmra.mrb[0].mxu0 %v346
  %v443 = vpop.f32.mrb[0].mxu0
  %v444 = vadd.f32 %v315, %v443
  %v445 = vpop.f32.mrb[0].mxu0
  %v446 = vpop.f32.mrb[0].mxu0
  %v447 = vadd.f32 %v318, %v446
  %v448 = vpop.f32.mrb[0].mxu0
  %449 = vmatprep.mubr.bf16.mxu0 0
  %450 = vmatmul.mubr.bf16.gmra.mrb[0].mxu0 %v347
  %v451 = vpop.f32.mrb[0].mxu0
  %v452 = vadd.f32 %v323, %v451
  %v453 = vpop.f32.mrb[0].mxu0
  %v454 = vpop.f32.mrb[0].mxu0
  %v455 = vadd.f32 %v326, %v454
  %v456 = vpop.f32.mrb[0].mxu0
  %457 = vmatprep.mubr.bf16.mxu0 0
  %458 = vmatmul.mubr.bf16.gmra.mrb[0].mxu0 %v348
  %v459 = vpop.f32.mrb[0].mxu0
  %v460 = vadd.f32 %v331, %v459
  %v461 = vpop.f32.mrb[0].mxu0
  %v462 = vpop.f32.mrb[0].mxu0
  %v463 = vadd.f32 %v334, %v462
  %v464 = vpop.f32.mrb[0].mxu0
  %465 = vdwg.mxu0
  %s466 = scalar_lea.vmem %s1, 128
  %v467 = vld [vmem:[%s466] sm:$0xf]
  %v468 = vld [vmem:[%s466 + $0x4] sm:$0xf]
  %v469 = vld [vmem:[%s466 + $0x8] sm:$0xf]
  %v470 = vld [vmem:[%s466 + $0xc] sm:$0xf]
  %v471 = vld [vmem:[%s466 + $0x10] sm:$0xf]
  %v472 = vld [vmem:[%s466 + $0x14] sm:$0xf]
  %v473 = vld [vmem:[%s466 + $0x18] sm:$0xf]
  %v474 = vld [vmem:[%s466 + $0x1c] sm:$0xf]
  %v475 = vld [vmem:[%s466 + $0x20] sm:$0xf]
  %v476 = vld [vmem:[%s466 + $0x24] sm:$0xf]
  %v477 = vld [vmem:[%s466 + $0x28] sm:$0xf]
  %v478 = vld [vmem:[%s466 + $0x2c] sm:$0xf]
  %v479 = vld [vmem:[%s466 + $0x30] sm:$0xf]
  %v480 = vld [vmem:[%s466 + $0x34] sm:$0xf]
  %v481 = vld [vmem:[%s466 + $0x38] sm:$0xf]
  %v482 = vld [vmem:[%s466 + $0x3c] sm:$0xf]
  %v485 = vunpack.c.l.b16 %v42
  %v486 = vunpack.c.l.b16 %v43
  %v487 = vunpack.c.l.b16 %v44
  %v488 = vunpack.c.l.b16 %v106
  %v489 = vunpack.c.l.b16 %v47
  %v490 = vunpack.c.l.b16 %v48
  %v491 = vunpack.c.l.b16 %v49
  %v492 = vunpack.c.l.b16 %v107
  %v493 = vpack.c.b16 %v486, %v485
  %v494 = vpack.c.b16 %v488, %v487
  %v495 = vpack.c.b16 %v490, %v489
  %v496 = vpack.c.b16 %v492, %v491
  %v517 = vunpack.c.l.b16 %v467
  %v518 = vunpack.c.l.b16 %v468
  %v519 = vunpack.c.l.b16 %v469
  %v520 = vunpack.c.l.b16 %v470
  %v521 = vunpack.c.l.b16 %v471
  %v522 = vunpack.c.l.b16 %v472
  %v523 = vunpack.c.l.b16 %v473
  %v524 = vunpack.c.l.b16 %v474
  %v525 = vunpack.c.l.b16 %v475
  %v526 = vunpack.c.l.b16 %v476
  %v527 = vunpack.c.l.b16 %v477
  %v528 = vunpack.c.l.b16 %v478
  %v529 = vunpack.c.l.b16 %v479
  %v530 = vunpack.c.l.b16 %v480
  %v531 = vunpack.c.l.b16 %v481
  %v532 = vunpack.c.l.b16 %v482
  %v533 = vpack.c.b16 %v518, %v517
  %v534 = vpack.c.b16 %v520, %v519
  %v535 = vpack.c.b16 %v522, %v521
  %v536 = vpack.c.b16 %v524, %v523
  %v537 = vpack.c.b16 %v526, %v525
  %v538 = vpack.c.b16 %v528, %v527
  %v539 = vpack.c.b16 %v530, %v529
  %v540 = vpack.c.b16 %v532, %v531
  %549 = vmatprep.subr.bf16.mxu0 0
  %550 = vmatpush1.bf16.msra.mxu0 %v533
  %551 = vmatprep.subr.bf16.mxu0 0
  %552 = vmatpush1.bf16.msra.mxu0 %v534
  %553 = vmatprep.subr.bf16.mxu0 0
  %554 = vmatpush1.bf16.msra.mxu0 %v535
  %555 = vmatprep.subr.bf16.mxu0 0
  %556 = vmatpush1.bf16.msra.mxu0 %v536
  %557 = vmatprep.subr.bf16.mxu0 0
  %558 = vmatpush1.bf16.msra.mxu0 %v537
  %559 = vmatprep.subr.bf16.mxu0 0
  %560 = vmatpush1.bf16.msra.mxu0 %v538
  %561 = vmatprep.subr.bf16.mxu0 0
  %562 = vmatpush1.bf16.msra.mxu0 %v539
  %563 = vmatprep.subr.bf16.mxu0 0
  %564 = vmatpush1.bf16.msra.mxu0 %v540
  %565 = vmatprep.subr.bf16.mxu0 0
  %566 = vmatpush1.bf16.msra.mxu0 0
  %567 = vmatprep.subr.bf16.mxu0 0
  %568 = vmatpush1.bf16.msra.mxu0 0
  %569 = vmatprep.subr.bf16.mxu0 0
  %570 = vmatpush1.bf16.msra.mxu0 0
  %571 = vmatprep.subr.bf16.mxu0 0
  %572 = vmatpush1.bf16.msra.mxu0 0
  %573 = vmatprep.subr.bf16.mxu0 0
  %574 = vmatpush1.bf16.msra.mxu0 0
  %575 = vmatprep.subr.bf16.mxu0 0
  %576 = vmatpush1.bf16.msra.mxu0 0
  %577 = vmatprep.subr.bf16.mxu0 0
  %578 = vmatpush1.bf16.msra.mxu0 0
  %579 = vmatprep.subr.bf16.mxu0 0
  %580 = vmatpush1.bf16.msra.mxu0 0
  %581 = vmatprep.mubr.bf16.mxu0 0
  %582 = vmatmul.mubr.bf16.gmra.mrb[0].mxu0 %v493
  %v583 = vpop.f32.mrb[0].mxu0
  %v584 = vadd.f32 0.0, %v583
  %v585 = vpop.f32.mrb[0].mxu0
  %v586 = vpop.f32.mrb[0].mxu0
  %v587 = vadd.f32 0.0, %v586
  %v588 = vpop.f32.mrb[0].mxu0
  %589 = vmatprep.mubr.bf16.mxu0 0
  %590 = vmatmul.mubr.bf16.gmra.mrb[0].mxu0 %v494
  %v591 = vpop.f32.mrb[0].mxu0
  %v592 = vadd.f32 0.0, %v591
  %v593 = vpop.f32.mrb[0].mxu0
  %v594 = vpop.f32.mrb[0].mxu0
  %v595 = vadd.f32 0.0, %v594
  %v596 = vpop.f32.mrb[0].mxu0
  %597 = vmatprep.mubr.bf16.mxu0 0
  %598 = vmatmul.mubr.bf16.gmra.mrb[0].mxu0 %v495
  %v599 = vpop.f32.mrb[0].mxu0
  %v600 = vadd.f32 0.0, %v599
  %v601 = vpop.f32.mrb[0].mxu0
  %v602 = vpop.f32.mrb[0].mxu0
  %v603 = vadd.f32 0.0, %v602
  %v604 = vpop.f32.mrb[0].mxu0
  %605 = vmatprep.mubr.bf16.mxu0 0
  %606 = vmatmul.mubr.bf16.gmra.mrb[0].mxu0 %v496
  %v607 = vpop.f32.mrb[0].mxu0
  %v608 = vadd.f32 0.0, %v607
  %v609 = vpop.f32.mrb[0].mxu0
  %v610 = vpop.f32.mrb[0].mxu0
  %v611 = vadd.f32 0.0, %v610
  %v612 = vpop.f32.mrb[0].mxu0
  %613 = vdwg.mxu0
  %v614 = vadd.f32 %v436, %v584
  %v615 = vadd.f32 %v439, %v587
  %v616 = vadd.f32 %v444, %v592
  %v617 = vadd.f32 %v447, %v595
  %v618 = vadd.f32 %v452, %v600
  %v619 = vadd.f32 %v455, %v603
  %v620 = vadd.f32 %v460, %v608
  %v621 = vadd.f32 %v463, %v611
  %v622 = vld [vmem:[%s0 + $0x8] sm:$0xf]
  %v623 = vld [vmem:[%s0 + $0xc] sm:$0xf]
  %v624 = vld [vmem:[%s0 + $0x10] sm:$0xf]
  %v625 = vld [vmem:[%s0 + $0x14] sm:$0xf]
  %v626 = vld [vmem:[%s0 + $0x18] sm:$0x1]
  %v627 = vld [vmem:[%s0 + $0x28] sm:$0xf]
  %v628 = vld [vmem:[%s0 + $0x2c] sm:$0xf]
  %v629 = vld [vmem:[%s0 + $0x30] sm:$0xf]
  %v630 = vld [vmem:[%s0 + $0x34] sm:$0xf]
  %v631 = vld [vmem:[%s0 + $0x38] sm:$0x1]
  %vm632 = vsmask.f32 3328
  %vm633 = vsmask.f32 7440
  %vm634 = vmor %vm632, %vm633
  %v636 = vshrl.u32 %v622, 16
  %v638 = vrot.slane %v636, 4
  %v639 = vshll.u32 %v622, 16
  %v641 = vrot.slane %v639, 5
  %v642 = vor.u32 %v638, %v641
  %v643 = vrot.slane %v642, 4
  %v645 = vshll.u32 %v623, 16
  %v647 = vrot.slane %v645, 5
  %v648 = vsel %vm634, %v643, %v647
  %v649 = vshrl.u32 %v623, 16
  %v651 = vrot.slane %v649, 4
  %v652 = vor.u32 %v651, %v647
  %v653 = vrot.slane %v652, 4
  %v655 = vshll.u32 %v624, 16
  %v657 = vrot.slane %v655, 5
  %v658 = vsel %vm634, %v653, %v657
  %v659 = vshrl.u32 %v624, 16
  %v661 = vrot.slane %v659, 4
  %v662 = vor.u32 %v661, %v657
  %v663 = vrot.slane %v662, 4
  %v665 = vshll.u32 %v625, 16
  %v667 = vrot.slane %v665, 5
  %v668 = vsel %vm634, %v663, %v667
  %v669 = vshrl.u32 %v625, 16
  %v671 = vrot.slane %v669, 4
  %v672 = vor.u32 %v671, %v667
  %v673 = vrot.slane %v672, 4
  %v675 = vshll.u32 %v626, 16
  %v677 = vrot.slane %v675, 5
  %v678 = vsel %vm634, %v673, %v677
  %v680 = vshrl.u32 %v627, 16
  %v682 = vrot.slane %v680, 4
  %v683 = vshll.u32 %v627, 16
  %v685 = vrot.slane %v683, 5
  %v686 = vor.u32 %v682, %v685
  %v687 = vrot.slane %v686, 4
  %v689 = vshll.u32 %v628, 16
  %v691 = vrot.slane %v689, 5
  %v692 = vsel %vm634, %v687, %v691
  %v693 = vshrl.u32 %v628, 16
  %v695 = vrot.slane %v693, 4
  %v696 = vor.u32 %v695, %v691
  %v697 = vrot.slane %v696, 4
  %v699 = vshll.u32 %v629, 16
  %v701 = vrot.slane %v699, 5
  %v702 = vsel %vm634, %v697, %v701
  %v703 = vshrl.u32 %v629, 16
  %v705 = vrot.slane %v703, 4
  %v706 = vor.u32 %v705, %v701
  %v707 = vrot.slane %v706, 4
  %v709 = vshll.u32 %v630, 16
  %v711 = vrot.slane %v709, 5
  %v712 = vsel %vm634, %v707, %v711
  %v713 = vshrl.u32 %v630, 16
  %v715 = vrot.slane %v713, 4
  %v716 = vor.u32 %v715, %v711
  %v717 = vrot.slane %v716, 4
  %v719 = vshll.u32 %v631, 16
  %v721 = vrot.slane %v719, 5
  %v722 = vsel %vm634, %v717, %v721
  %s723 = scalar_lea.vmem %s1, 192
  %v724 = vld [vmem:[%s723] sm:$0xf]
  %v725 = vld [vmem:[%s723 + $0x4] sm:$0xf]
  %v726 = vld [vmem:[%s723 + $0x8] sm:$0xf]
  %v727 = vld [vmem:[%s723 + $0xc] sm:$0xf]
  %v728 = vld [vmem:[%s723 + $0x10] sm:$0xf]
  %v729 = vld [vmem:[%s723 + $0x14] sm:$0xf]
  %v730 = vld [vmem:[%s723 + $0x18] sm:$0xf]
  %v731 = vld [vmem:[%s723 + $0x1c] sm:$0xf]
  %v732 = vld [vmem:[%s723 + $0x20] sm:$0xf]
  %v733 = vld [vmem:[%s723 + $0x24] sm:$0xf]
  %v734 = vld [vmem:[%s723 + $0x28] sm:$0xf]
  %v735 = vld [vmem:[%s723 + $0x2c] sm:$0xf]
  %v736 = vld [vmem:[%s723 + $0x30] sm:$0xf]
  %v737 = vld [vmem:[%s723 + $0x34] sm:$0xf]
  %v738 = vld [vmem:[%s723 + $0x38] sm:$0xf]
  %v739 = vld [vmem:[%s723 + $0x3c] sm:$0xf]
  %v740 = vunpack.c.l.b16 %v648
  %v741 = vunpack.c.l.b16 %v658
  %v742 = vunpack.c.l.b16 %v668
  %v743 = vunpack.c.l.b16 %v678
  %v744 = vunpack.c.l.b16 %v692
  %v745 = vunpack.c.l.b16 %v702
  %v746 = vunpack.c.l.b16 %v712
  %v747 = vunpack.c.l.b16 %v722
  %v748 = vpack.c.b16 %v741, %v740
  %v749 = vpack.c.b16 %v743, %v742
  %v750 = vpack.c.b16 %v745, %v744
  %v751 = vpack.c.b16 %v747, %v746
  %v772 = vunpack.c.l.b16 %v724
  %v773 = vunpack.c.l.b16 %v725
  %v774 = vunpack.c.l.b16 %v726
  %v775 = vunpack.c.l.b16 %v727
  %v776 = vunpack.c.l.b16 %v728
  %v777 = vunpack.c.l.b16 %v729
  %v778 = vunpack.c.l.b16 %v730
  %v779 = vunpack.c.l.b16 %v731
  %v780 = vunpack.c.l.b16 %v732
  %v781 = vunpack.c.l.b16 %v733
  %v782 = vunpack.c.l.b16 %v734
  %v783 = vunpack.c.l.b16 %v735
  %v784 = vunpack.c.l.b16 %v736
  %v785 = vunpack.c.l.b16 %v737
  %v786 = vunpack.c.l.b16 %v738
  %v787 = vunpack.c.l.b16 %v739
  %v788 = vpack.c.b16 %v773, %v772
  %v789 = vpack.c.b16 %v775, %v774
  %v790 = vpack.c.b16 %v777, %v776
  %v791 = vpack.c.b16 %v779, %v778
  %v792 = vpack.c.b16 %v781, %v780
  %v793 = vpack.c.b16 %v783, %v782
  %v794 = vpack.c.b16 %v785, %v784
  %v795 = vpack.c.b16 %v787, %v786
  %804 = vmatprep.subr.bf16.mxu0 0
  %805 = vmatpush1.bf16.msra.mxu0 %v788
  %806 = vmatprep.subr.bf16.mxu0 0
  %807 = vmatpush1.bf16.msra.mxu0 %v789
  %808 = vmatprep.subr.bf16.mxu0 0
  %809 = vmatpush1.bf16.msra.mxu0 %v790
  %810 = vmatprep.subr.bf16.mxu0 0
  %811 = vmatpush1.bf16.msra.mxu0 %v791
  %812 = vmatprep.subr.bf16.mxu0 0
  %813 = vmatpush1.bf16.msra.mxu0 %v792
  %814 = vmatprep.subr.bf16.mxu0 0
  %815 = vmatpush1.bf16.msra.mxu0 %v793
  %816 = vmatprep.subr.bf16.mxu0 0
  %817 = vmatpush1.bf16.msra.mxu0 %v794
  %818 = vmatprep.subr.bf16.mxu0 0
  %819 = vmatpush1.bf16.msra.mxu0 %v795
  %820 = vmatprep.subr.bf16.mxu0 0
  %821 = vmatpush1.bf16.msra.mxu0 0
  %822 = vmatprep.subr.bf16.mxu0 0
  %823 = vmatpush1.bf16.msra.mxu0 0
  %824 = vmatprep.subr.bf16.mxu0 0
  %825 = vmatpush1.bf16.msra.mxu0 0
  %826 = vmatprep.subr.bf16.mxu0 0
  %827 = vmatpush1.bf16.msra.mxu0 0
  %828 = vmatprep.subr.bf16.mxu0 0
  %829 = vmatpush1.bf16.msra.mxu0 0
  %830 = vmatprep.subr.bf16.mxu0 0
  %831 = vmatpush1.bf16.msra.mxu0 0
  %832 = vmatprep.subr.bf16.mxu0 0
  %833 = vmatpush1.bf16.msra.mxu0 0
  %834 = vmatprep.subr.bf16.mxu0 0
  %835 = vmatpush1.bf16.msra.mxu0 0
  %836 = vmatprep.mubr.bf16.mxu0 0
  %837 = vmatmul.mubr.bf16.gmra.mrb[0].mxu0 %v748
  %v838 = vpop.f32.mrb[0].mxu0
  %v839 = vadd.f32 0.0, %v838
  %v840 = vpop.f32.mrb[0].mxu0
  %v841 = vpop.f32.mrb[0].mxu0
  %v842 = vadd.f32 0.0, %v841
  %v843 = vpop.f32.mrb[0].mxu0
  %844 = vmatprep.mubr.bf16.mxu0 0
  %845 = vmatmul.mubr.bf16.gmra.mrb[0].mxu0 %v749
  %v846 = vpop.f32.mrb[0].mxu0
  %v847 = vadd.f32 0.0, %v846
  %v848 = vpop.f32.mrb[0].mxu0
  %v849 = vpop.f32.mrb[0].mxu0
  %v850 = vadd.f32 0.0, %v849
  %v851 = vpop.f32.mrb[0].mxu0
  %852 = vmatprep.mubr.bf16.mxu0 0
  %853 = vmatmul.mubr.bf16.gmra.mrb[0].mxu0 %v750
  %v854 = vpop.f32.mrb[0].mxu0
  %v855 = vadd.f32 0.0, %v854
  %v856 = vpop.f32.mrb[0].mxu0
  %v857 = vpop.f32.mrb[0].mxu0
  %v858 = vadd.f32 0.0, %v857
  %v859 = vpop.f32.mrb[0].mxu0
  %860 = vmatprep.mubr.bf16.mxu0 0
  %861 = vmatmul.mubr.bf16.gmra.mrb[0].mxu0 %v751
  %v862 = vpop.f32.mrb[0].mxu0
  %v863 = vadd.f32 0.0, %v862
  %v864 = vpop.f32.mrb[0].mxu0
  %v865 = vpop.f32.mrb[0].mxu0
  %v866 = vadd.f32 0.0, %v865
  %v867 = vpop.f32.mrb[0].mxu0
  %868 = vdwg.mxu0
  %v869 = vadd.f32 %v614, %v839
  %v870 = vadd.f32 %v615, %v842
  %v871 = vadd.f32 %v616, %v847
  %v872 = vadd.f32 %v617, %v850
  %v873 = vadd.f32 %v618, %v855
  %v874 = vadd.f32 %v619, %v858
  %v875 = vadd.f32 %v620, %v863
  %v876 = vadd.f32 %v621, %v866
  %v877 = vld [vmem:[%s0 + $0x8] sm:$0xe]
  %v878 = vld [vmem:[%s0 + $0x28] sm:$0xe]
  %vm889 = vcmask 1042432
  %vm890 = vcmask 1046532
  %vm891 = vmor %vm889, %vm890
  %v892 = vrot.slane %v877, 5
  %v893 = vrot.slane %v892, 4
  %v894 = vrot.slane %v623, 5
  %v895 = vsel %vm891, %v893, %v894
  %v896 = vrot.slane %v894, 4
  %v897 = vrot.slane %v624, 5
  %v898 = vsel %vm891, %v896, %v897
  %v899 = vrot.slane %v897, 4
  %v900 = vrot.slane %v625, 5
  %v901 = vsel %vm891, %v899, %v900
  %v902 = vrot.slane %v900, 4
  %v903 = vrot.slane %v626, 5
  %v904 = vsel %vm891, %v902, %v903
  %v905 = vrot.slane %v878, 5
  %v906 = vrot.slane %v905, 4
  %v907 = vrot.slane %v628, 5
  %v908 = vsel %vm891, %v906, %v907
  %v909 = vrot.slane %v907, 4
  %v910 = vrot.slane %v629, 5
  %v911 = vsel %vm891, %v909, %v910
  %v912 = vrot.slane %v910, 4
  %v913 = vrot.slane %v630, 5
  %v914 = vsel %vm891, %v912, %v913
  %v915 = vrot.slane %v913, 4
  %v916 = vrot.slane %v631, 5
  %v917 = vsel %vm891, %v915, %v916
  %s918 = scalar_lea.vmem %s1, 256
  %v919 = vld [vmem:[%s918] sm:$0xf]
  %v920 = vld [vmem:[%s918 + $0x4] sm:$0xf]
  %v921 = vld [vmem:[%s918 + $0x8] sm:$0xf]
  %v922 = vld [vmem:[%s918 + $0xc] sm:$0xf]
  %v923 = vld [vmem:[%s918 + $0x10] sm:$0xf]
  %v924 = vld [vmem:[%s918 + $0x14] sm:$0xf]
  %v925 = vld [vmem:[%s918 + $0x18] sm:$0xf]
  %v926 = vld [vmem:[%s918 + $0x1c] sm:$0xf]
  %v927 = vld [vmem:[%s918 + $0x20] sm:$0xf]
  %v928 = vld [vmem:[%s918 + $0x24] sm:$0xf]
  %v929 = vld [vmem:[%s918 + $0x28] sm:$0xf]
  %v930 = vld [vmem:[%s918 + $0x2c] sm:$0xf]
  %v931 = vld [vmem:[%s918 + $0x30] sm:$0xf]
  %v932 = vld [vmem:[%s918 + $0x34] sm:$0xf]
  %v933 = vld [vmem:[%s918 + $0x38] sm:$0xf]
  %v934 = vld [vmem:[%s918 + $0x3c] sm:$0xf]
  %v935 = vunpack.c.l.b16 %v895
  %v936 = vunpack.c.l.b16 %v898
  %v937 = vunpack.c.l.b16 %v901
  %v938 = vunpack.c.l.b16 %v904
  %v939 = vunpack.c.l.b16 %v908
  %v940 = vunpack.c.l.b16 %v911
  %v941 = vunpack.c.l.b16 %v914
  %v942 = vunpack.c.l.b16 %v917
  %v943 = vpack.c.b16 %v936, %v935
  %v944 = vpack.c.b16 %v938, %v937
  %v945 = vpack.c.b16 %v940, %v939
  %v946 = vpack.c.b16 %v942, %v941
  %v967 = vunpack.c.l.b16 %v919
  %v968 = vunpack.c.l.b16 %v920
  %v969 = vunpack.c.l.b16 %v921
  %v970 = vunpack.c.l.b16 %v922
  %v971 = vunpack.c.l.b16 %v923
  %v972 = vunpack.c.l.b16 %v924
  %v973 = vunpack.c.l.b16 %v925
  %v974 = vunpack.c.l.b16 %v926
  %v975 = vunpack.c.l.b16 %v927
  %v976 = vunpack.c.l.b16 %v928
  %v977 = vunpack.c.l.b16 %v929
  %v978 = vunpack.c.l.b16 %v930
  %v979 = vunpack.c.l.b16 %v931
  %v980 = vunpack.c.l.b16 %v932
  %v981 = vunpack.c.l.b16 %v933
  %v982 = vunpack.c.l.b16 %v934
  %v983 = vpack.c.b16 %v968, %v967
  %v984 = vpack.c.b16 %v970, %v969
  %v985 = vpack.c.b16 %v972, %v971
  %v986 = vpack.c.b16 %v974, %v973
  %v987 = vpack.c.b16 %v976, %v975
  %v988 = vpack.c.b16 %v978, %v977
  %v989 = vpack.c.b16 %v980, %v979
  %v990 = vpack.c.b16 %v982, %v981
  %999 = vmatprep.subr.bf16.mxu0 0
  %1000 = vmatpush1.bf16.msra.mxu0 %v983
  %1001 = vmatprep.subr.bf16.mxu0 0
  %1002 = vmatpush1.bf16.msra.mxu0 %v984
  %1003 = vmatprep.subr.bf16.mxu0 0
  %1004 = vmatpush1.bf16.msra.mxu0 %v985
  %1005 = vmatprep.subr.bf16.mxu0 0
  %1006 = vmatpush1.bf16.msra.mxu0 %v986
  %1007 = vmatprep.subr.bf16.mxu0 0
  %1008 = vmatpush1.bf16.msra.mxu0 %v987
  %1009 = vmatprep.subr.bf16.mxu0 0
  %1010 = vmatpush1.bf16.msra.mxu0 %v988
  %1011 = vmatprep.subr.bf16.mxu0 0
  %1012 = vmatpush1.bf16.msra.mxu0 %v989
  %1013 = vmatprep.subr.bf16.mxu0 0
  %1014 = vmatpush1.bf16.msra.mxu0 %v990
  %1015 = vmatprep.subr.bf16.mxu0 0
  %1016 = vmatpush1.bf16.msra.mxu0 0
  %1017 = vmatprep.subr.bf16.mxu0 0
  %1018 = vmatpush1.bf16.msra.mxu0 0
  %1019 = vmatprep.subr.bf16.mxu0 0
  %1020 = vmatpush1.bf16.msra.mxu0 0
  %1021 = vmatprep.subr.bf16.mxu0 0
  %1022 = vmatpush1.bf16.msra.mxu0 0
  %1023 = vmatprep.subr.bf16.mxu0 0
  %1024 = vmatpush1.bf16.msra.mxu0 0
  %1025 = vmatprep.subr.bf16.mxu0 0
  %1026 = vmatpush1.bf16.msra.mxu0 0
  %1027 = vmatprep.subr.bf16.mxu0 0
  %1028 = vmatpush1.bf16.msra.mxu0 0
  %1029 = vmatprep.subr.bf16.mxu0 0
  %1030 = vmatpush1.bf16.msra.mxu0 0
  %1031 = vmatprep.mubr.bf16.mxu0 0
  %1032 = vmatmul.mubr.bf16.gmra.mrb[0].mxu0 %v943
  %v1033 = vpop.f32.mrb[0].mxu0
  %v1034 = vadd.f32 0.0, %v1033
  %v1035 = vpop.f32.mrb[0].mxu0
  %v1036 = vpop.f32.mrb[0].mxu0
  %v1037 = vadd.f32 0.0, %v1036
  %v1038 = vpop.f32.mrb[0].mxu0
  %1039 = vmatprep.mubr.bf16.mxu0 0
  %1040 = vmatmul.mubr.bf16.gmra.mrb[0].mxu0 %v944
  %v1041 = vpop.f32.mrb[0].mxu0
  %v1042 = vadd.f32 0.0, %v1041
  %v1043 = vpop.f32.mrb[0].mxu0
  %v1044 = vpop.f32.mrb[0].mxu0
  %v1045 = vadd.f32 0.0, %v1044
  %v1046 = vpop.f32.mrb[0].mxu0
  %1047 = vmatprep.mubr.bf16.mxu0 0
  %1048 = vmatmul.mubr.bf16.gmra.mrb[0].mxu0 %v945
  %v1049 = vpop.f32.mrb[0].mxu0
  %v1050 = vadd.f32 0.0, %v1049
  %v1051 = vpop.f32.mrb[0].mxu0
  %v1052 = vpop.f32.mrb[0].mxu0
  %v1053 = vadd.f32 0.0, %v1052
  %v1054 = vpop.f32.mrb[0].mxu0
  %1055 = vmatprep.mubr.bf16.mxu0 0
  %1056 = vmatmul.mubr.bf16.gmra.mrb[0].mxu0 %v946
  %v1057 = vpop.f32.mrb[0].mxu0
  %v1058 = vadd.f32 0.0, %v1057
  %v1059 = vpop.f32.mrb[0].mxu0
  %v1060 = vpop.f32.mrb[0].mxu0
  %v1061 = vadd.f32 0.0, %v1060
  %v1062 = vpop.f32.mrb[0].mxu0
  %1063 = vdwg.mxu0
  %v1064 = vadd.f32 %v869, %v1034
  %v1065 = vadd.f32 %v870, %v1037
  %v1066 = vadd.f32 %v871, %v1042
  %v1067 = vadd.f32 %v872, %v1045
  %v1068 = vadd.f32 %v873, %v1050
  %v1069 = vadd.f32 %v874, %v1053
  %v1070 = vadd.f32 %v875, %v1058
  %v1071 = vadd.f32 %v876, %v1061
  %v1072 = vld [vmem:[%s2] sm:$0x1]
  %v1074 = vlaneseq
  %v1075 = vshrl.u32 %v1074, 7
  %v1076 = vsub.s32 0, %v1075
  %v1077 = vrot.slane %v1072, %v1076
  %v1079 = vadd.f32 %v1064, %v1077
  %v1080 = vadd.f32 %v1065, %v1077
  %v1081 = vadd.f32 %v1066, %v1077
  %v1082 = vadd.f32 %v1067, %v1077
  %v1083 = vadd.f32 %v1068, %v1077
  %v1084 = vadd.f32 %v1069, %v1077
  %v1085 = vadd.f32 %v1070, %v1077
  %v1086 = vadd.f32 %v1071, %v1077
  %v1087 = vmax.f32 %v1079, 0.0
  %v1088 = vmax.f32 %v1080, 0.0
  %v1089 = vmax.f32 %v1081, 0.0
  %v1090 = vmax.f32 %v1082, 0.0
  %v1091 = vmax.f32 %v1083, 0.0
  %v1092 = vmax.f32 %v1084, 0.0
  %v1093 = vmax.f32 %v1085, 0.0
  %v1094 = vmax.f32 %v1086, 0.0
  %v1095 = vpack.c.bf16 %v1088, %v1087
  %v1096 = vpack.c.bf16 %v1090, %v1089
  %v1097 = vpack.c.bf16 %v1092, %v1091
  %v1098 = vpack.c.bf16 %v1094, %v1093
  %1099 = vst [vmem:[#allocation2 + $0x8] sm:$0xff] %v1095
  %1100 = vst [vmem:[#allocation2 + $0x10] sm:$0xff] %v1096
  %1101 = vst [vmem:[#allocation2 + $0x28] sm:$0xff] %v1097
  %1102 = vst [vmem:[#allocation2 + $0x30] sm:$0xff] %v1098
  %v1103 = vld [vmem:[#allocation2] sm:$0x80]
  %v1104 = vld [vmem:[#allocation2 + $0x8] sm:$0xff]
  %v1105 = vld [vmem:[#allocation2 + $0x10] sm:$0x7f]
  %v1106 = vld [vmem:[#allocation2 + $0x20] sm:$0x80]
  %v1107 = vld [vmem:[#allocation2 + $0x28] sm:$0xff]
  %v1108 = vld [vmem:[#allocation2 + $0x30] sm:$0x7f]
  %v1115 = vrot.slane %v1103, 7
  %v1116 = vrot.slane %v1104, 7
  %v1117 = vsel %vm61, %v1115, %v1116
  %v1118 = vrot.slane %v1105, 7
  %v1119 = vsel %vm61, %v1116, %v1118
  %v1120 = vrot.slane %v1106, 7
  %v1121 = vrot.slane %v1107, 7
  %v1122 = vsel %vm61, %v1120, %v1121
  %v1123 = vrot.slane %v1108, 7
  %v1124 = vsel %vm61, %v1121, %v1123
  %v1129 = vld [vmem:[%s3] sm:$0xf]
  %v1130 = vld [vmem:[%s3 + $0x4] sm:$0xf]
  %v1131 = vld [vmem:[%s3 + $0x8] sm:$0xf]
  %v1132 = vld [vmem:[%s3 + $0xc] sm:$0xf]
  %v1133 = vld [vmem:[%s3 + $0x10] sm:$0xf]
  %v1134 = vld [vmem:[%s3 + $0x14] sm:$0xf]
  %v1135 = vld [vmem:[%s3 + $0x18] sm:$0xf]
  %v1136 = vld [vmem:[%s3 + $0x1c] sm:$0xf]
  %v1137 = vld [vmem:[%s3 + $0x20] sm:$0xf]
  %v1138 = vld [vmem:[%s3 + $0x24] sm:$0xf]
  %v1139 = vld [vmem:[%s3 + $0x28] sm:$0xf]
  %v1140 = vld [vmem:[%s3 + $0x2c] sm:$0xf]
  %v1141 = vld [vmem:[%s3 + $0x30] sm:$0xf]
  %v1142 = vld [vmem:[%s3 + $0x34] sm:$0xf]
  %v1143 = vld [vmem:[%s3 + $0x38] sm:$0xf]
  %v1144 = vld [vmem:[%s3 + $0x3c] sm:$0xf]
  %v1145 = vld [vmem:[#allocation2 + $0x10] sm:$0xff]
  %v1146 = vld [vmem:[#allocation2 + $0x30] sm:$0xff]
  %v1148 = vshrl.u32 %v1103, 16
  %v1150 = vrot.slane %v1148, 7
  %v1152 = vshrl.u32 %v1104, 16
  %v1154 = vrot.slane %v1152, 7
  %v1155 = vshll.u32 %v1104, 16
  %v1157 = vor.u32 %v1154, %v1155
  %v1158 = vsel %vm108, %v1150, %v1157
  %v1160 = vshrl.u32 %v1145, 16
  %v1162 = vrot.slane %v1160, 7
  %v1163 = vshll.u32 %v1145, 16
  %v1165 = vor.u32 %v1162, %v1163
  %v1166 = vsel %vm108, %v1154, %v1165
  %v1168 = vshrl.u32 %v1106, 16
  %v1170 = vrot.slane %v1168, 7
  %v1172 = vshrl.u32 %v1107, 16
  %v1174 = vrot.slane %v1172, 7
  %v1175 = vshll.u32 %v1107, 16
  %v1177 = vor.u32 %v1174, %v1175
  %v1178 = vsel %vm108, %v1170, %v1177
  %v1180 = vshrl.u32 %v1146, 16
  %v1182 = vrot.slane %v1180, 7
  %v1183 = vshll.u32 %v1146, 16
  %v1185 = vor.u32 %v1182, %v1183
  %v1186 = vsel %vm108, %v1174, %v1185
  %s1191 = scalar_lea.vmem %s3, 64
  %v1192 = vld [vmem:[%s1191] sm:$0xf]
  %v1193 = vld [vmem:[%s1191 + $0x4] sm:$0xf]
  %v1194 = vld [vmem:[%s1191 + $0x8] sm:$0xf]
  %v1195 = vld [vmem:[%s1191 + $0xc] sm:$0xf]
  %v1196 = vld [vmem:[%s1191 + $0x10] sm:$0xf]
  %v1197 = vld [vmem:[%s1191 + $0x14] sm:$0xf]
  %v1198 = vld [vmem:[%s1191 + $0x18] sm:$0xf]
  %v1199 = vld [vmem:[%s1191 + $0x1c] sm:$0xf]
  %v1200 = vld [vmem:[%s1191 + $0x20] sm:$0xf]
  %v1201 = vld [vmem:[%s1191 + $0x24] sm:$0xf]
  %v1202 = vld [vmem:[%s1191 + $0x28] sm:$0xf]
  %v1203 = vld [vmem:[%s1191 + $0x2c] sm:$0xf]
  %v1204 = vld [vmem:[%s1191 + $0x30] sm:$0xf]
  %v1205 = vld [vmem:[%s1191 + $0x34] sm:$0xf]
  %v1206 = vld [vmem:[%s1191 + $0x38] sm:$0xf]
  %v1207 = vld [vmem:[%s1191 + $0x3c] sm:$0xf]
  %v1224 = vunpack.c.l.b16 %v1192
  %v1225 = vunpack.c.l.b16 %v1193
  %v1226 = vunpack.c.l.b16 %v1194
  %v1227 = vunpack.c.l.b16 %v1195
  %v1228 = vunpack.c.l.b16 %v1196
  %v1229 = vunpack.c.l.b16 %v1197
  %v1230 = vunpack.c.l.b16 %v1198
  %v1231 = vunpack.c.l.b16 %v1199
  %v1232 = vunpack.c.l.b16 %v1200
  %v1233 = vunpack.c.l.b16 %v1201
  %v1234 = vunpack.c.l.b16 %v1202
  %v1235 = vunpack.c.l.b16 %v1203
  %v1236 = vunpack.c.l.b16 %v1204
  %v1237 = vunpack.c.l.b16 %v1205
  %v1238 = vunpack.c.l.b16 %v1206
  %v1239 = vunpack.c.l.b16 %v1207
  %v1240 = vpack.c.b16 %v1225, %v1224
  %v1241 = vpack.c.b16 %v1227, %v1226
  %v1242 = vpack.c.b16 %v1229, %v1228
  %v1243 = vpack.c.b16 %v1231, %v1230
  %v1244 = vpack.c.b16 %v1233, %v1232
  %v1245 = vpack.c.b16 %v1235, %v1234
  %v1246 = vpack.c.b16 %v1237, %v1236
  %v1247 = vpack.c.b16 %v1239, %v1238
  %1256 = vmatprep.subr.bf16.mxu0 0
  %1257 = vmatpush1.bf16.msra.mxu0 %v1240
  %1258 = vmatprep.subr.bf16.mxu0 0
  %1259 = vmatpush1.bf16.msra.mxu0 %v1241
  %1260 = vmatprep.subr.bf16.mxu0 0
  %1261 = vmatpush1.bf16.msra.mxu0 %v1242
  %1262 = vmatprep.subr.bf16.mxu0 0
  %1263 = vmatpush1.bf16.msra.mxu0 %v1243
  %1264 = vmatprep.subr.bf16.mxu0 0
  %1265 = vmatpush1.bf16.msra.mxu0 %v1244
  %1266 = vmatprep.subr.bf16.mxu0 0
  %1267 = vmatpush1.bf16.msra.mxu0 %v1245
  %1268 = vmatprep.subr.bf16.mxu0 0
  %1269 = vmatpush1.bf16.msra.mxu0 %v1246
  %1270 = vmatprep.subr.bf16.mxu0 0
  %1271 = vmatpush1.bf16.msra.mxu0 %v1247
  %1272 = vmatprep.subr.bf16.mxu0 0
  %1273 = vmatpush1.bf16.msra.mxu0 0
  %1274 = vmatprep.subr.bf16.mxu0 0
  %1275 = vmatpush1.bf16.msra.mxu0 0
  %1276 = vmatprep.subr.bf16.mxu0 0
  %1277 = vmatpush1.bf16.msra.mxu0 0
  %1278 = vmatprep.subr.bf16.mxu0 0
  %1279 = vmatpush1.bf16.msra.mxu0 0
  %1280 = vmatprep.subr.bf16.mxu0 0
  %1281 = vmatpush1.bf16.msra.mxu0 0
  %1282 = vmatprep.subr.bf16.mxu0 0
  %1283 = vmatpush1.bf16.msra.mxu0 0
  %1284 = vmatprep.subr.bf16.mxu0 0
  %1285 = vmatpush1.bf16.msra.mxu0 0
  %1286 = vmatprep.subr.bf16.mxu0 0
  %1287 = vmatpush1.bf16.msra.mxu0 0
  %1288 = vmatprep.mubr.bf16.mxu0 0
  %1289 = vmatmul.mubr.bf16.gmra.mrb[0].mxu0 %v1158
  %v1290 = vpop.f32.mrb[0].mxu0
  %v1291 = vadd.f32 0.0, %v1290
  %v1292 = vpop.f32.mrb[0].mxu0
  %v1293 = vpop.f32.mrb[0].mxu0
  %v1294 = vadd.f32 0.0, %v1293
  %v1295 = vpop.f32.mrb[0].mxu0
  %1296 = vmatprep.mubr.bf16.mxu0 0
  %1297 = vmatmul.mubr.bf16.gmra.mrb[0].mxu0 %v1166
  %v1298 = vpop.f32.mrb[0].mxu0
  %v1299 = vadd.f32 0.0, %v1298
  %v1300 = vpop.f32.mrb[0].mxu0
  %v1301 = vpop.f32.mrb[0].mxu0
  %v1302 = vadd.f32 0.0, %v1301
  %v1303 = vpop.f32.mrb[0].mxu0
  %1304 = vmatprep.mubr.bf16.mxu0 0
  %1305 = vmatmul.mubr.bf16.gmra.mrb[0].mxu0 %v1178
  %v1306 = vpop.f32.mrb[0].mxu0
  %v1307 = vadd.f32 0.0, %v1306
  %v1308 = vpop.f32.mrb[0].mxu0
  %v1309 = vpop.f32.mrb[0].mxu0
  %v1310 = vadd.f32 0.0, %v1309
  %v1311 = vpop.f32.mrb[0].mxu0
  %1312 = vmatprep.mubr.bf16.mxu0 0
  %1313 = vmatmul.mubr.bf16.gmra.mrb[0].mxu0 %v1186
  %v1314 = vpop.f32.mrb[0].mxu0
  %v1315 = vadd.f32 0.0, %v1314
  %v1316 = vpop.f32.mrb[0].mxu0
  %v1317 = vpop.f32.mrb[0].mxu0
  %v1318 = vadd.f32 0.0, %v1317
  %v1319 = vpop.f32.mrb[0].mxu0
  %1320 = vdwg.mxu0
  %v1337 = vunpack.c.l.b16 %v1129
  %v1338 = vunpack.c.l.b16 %v1130
  %v1339 = vunpack.c.l.b16 %v1131
  %v1340 = vunpack.c.l.b16 %v1132
  %v1341 = vunpack.c.l.b16 %v1133
  %v1342 = vunpack.c.l.b16 %v1134
  %v1343 = vunpack.c.l.b16 %v1135
  %v1344 = vunpack.c.l.b16 %v1136
  %v1345 = vunpack.c.l.b16 %v1137
  %v1346 = vunpack.c.l.b16 %v1138
  %v1347 = vunpack.c.l.b16 %v1139
  %v1348 = vunpack.c.l.b16 %v1140
  %v1349 = vunpack.c.l.b16 %v1141
  %v1350 = vunpack.c.l.b16 %v1142
  %v1351 = vunpack.c.l.b16 %v1143
  %v1352 = vunpack.c.l.b16 %v1144
  %v1353 = vpack.c.b16 %v1338, %v1337
  %v1354 = vpack.c.b16 %v1340, %v1339
  %v1355 = vpack.c.b16 %v1342, %v1341
  %v1356 = vpack.c.b16 %v1344, %v1343
  %v1357 = vpack.c.b16 %v1346, %v1345
  %v1358 = vpack.c.b16 %v1348, %v1347
  %v1359 = vpack.c.b16 %v1350, %v1349
  %v1360 = vpack.c.b16 %v1352, %v1351
  %1369 = vmatprep.subr.bf16.mxu0 0
  %1370 = vmatpush1.bf16.msra.mxu0 %v1353
  %1371 = vmatprep.subr.bf16.mxu0 0
  %1372 = vmatpush1.bf16.msra.mxu0 %v1354
  %1373 = vmatprep.subr.bf16.mxu0 0
  %1374 = vmatpush1.bf16.msra.mxu0 %v1355
  %1375 = vmatprep.subr.bf16.mxu0 0
  %1376 = vmatpush1.bf16.msra.mxu0 %v1356
  %1377 = vmatprep.subr.bf16.mxu0 0
  %1378 = vmatpush1.bf16.msra.mxu0 %v1357
  %1379 = vmatprep.subr.bf16.mxu0 0
  %1380 = vmatpush1.bf16.msra.mxu0 %v1358
  %1381 = vmatprep.subr.bf16.mxu0 0
  %1382 = vmatpush1.bf16.msra.mxu0 %v1359
  %1383 = vmatprep.subr.bf16.mxu0 0
  %1384 = vmatpush1.bf16.msra.mxu0 %v1360
  %1385 = vmatprep.subr.bf16.mxu0 0
  %1386 = vmatpush1.bf16.msra.mxu0 0
  %1387 = vmatprep.subr.bf16.mxu0 0
  %1388 = vmatpush1.bf16.msra.mxu0 0
  %1389 = vmatprep.subr.bf16.mxu0 0
  %1390 = vmatpush1.bf16.msra.mxu0 0
  %1391 = vmatprep.subr.bf16.mxu0 0
  %1392 = vmatpush1.bf16.msra.mxu0 0
  %1393 = vmatprep.subr.bf16.mxu0 0
  %1394 = vmatpush1.bf16.msra.mxu0 0
  %1395 = vmatprep.subr.bf16.mxu0 0
  %1396 = vmatpush1.bf16.msra.mxu0 0
  %1397 = vmatprep.subr.bf16.mxu0 0
  %1398 = vmatpush1.bf16.msra.mxu0 0
  %1399 = vmatprep.subr.bf16.mxu0 0
  %1400 = vmatpush1.bf16.msra.mxu0 0
  %1401 = vmatprep.mubr.bf16.mxu0 0
  %1402 = vmatmul.mubr.bf16.gmra.mrb[0].mxu0 %v1117
  %v1403 = vpop.f32.mrb[0].mxu0
  %v1404 = vadd.f32 %v1291, %v1403
  %v1405 = vpop.f32.mrb[0].mxu0
  %v1406 = vpop.f32.mrb[0].mxu0
  %v1407 = vadd.f32 %v1294, %v1406
  %v1408 = vpop.f32.mrb[0].mxu0
  %1409 = vmatprep.mubr.bf16.mxu0 0
  %1410 = vmatmul.mubr.bf16.gmra.mrb[0].mxu0 %v1119
  %v1411 = vpop.f32.mrb[0].mxu0
  %v1412 = vadd.f32 %v1299, %v1411
  %v1413 = vpop.f32.mrb[0].mxu0
  %v1414 = vpop.f32.mrb[0].mxu0
  %v1415 = vadd.f32 %v1302, %v1414
  %v1416 = vpop.f32.mrb[0].mxu0
  %1417 = vmatprep.mubr.bf16.mxu0 0
  %1418 = vmatmul.mubr.bf16.gmra.mrb[0].mxu0 %v1122
  %v1419 = vpop.f32.mrb[0].mxu0
  %v1420 = vadd.f32 %v1307, %v1419
  %v1421 = vpop.f32.mrb[0].mxu0
  %v1422 = vpop.f32.mrb[0].mxu0
  %v1423 = vadd.f32 %v1310, %v1422
  %v1424 = vpop.f32.mrb[0].mxu0
  %1425 = vmatprep.mubr.bf16.mxu0 0
  %1426 = vmatmul.mubr.bf16.gmra.mrb[0].mxu0 %v1124
  %v1427 = vpop.f32.mrb[0].mxu0
  %v1428 = vadd.f32 %v1315, %v1427
  %v1429 = vpop.f32.mrb[0].mxu0
  %v1430 = vpop.f32.mrb[0].mxu0
  %v1431 = vadd.f32 %v1318, %v1430
  %v1432 = vpop.f32.mrb[0].mxu0
  %1433 = vdwg.mxu0
  %s1434 = scalar_lea.vmem %s3, 128
  %v1435 = vld [vmem:[%s1434] sm:$0xf]
  %v1436 = vld [vmem:[%s1434 + $0x4] sm:$0xf]
  %v1437 = vld [vmem:[%s1434 + $0x8] sm:$0xf]
  %v1438 = vld [vmem:[%s1434 + $0xc] sm:$0xf]
  %v1439 = vld [vmem:[%s1434 + $0x10] sm:$0xf]
  %v1440 = vld [vmem:[%s1434 + $0x14] sm:$0xf]
  %v1441 = vld [vmem:[%s1434 + $0x18] sm:$0xf]
  %v1442 = vld [vmem:[%s1434 + $0x1c] sm:$0xf]
  %v1443 = vld [vmem:[%s1434 + $0x20] sm:$0xf]
  %v1444 = vld [vmem:[%s1434 + $0x24] sm:$0xf]
  %v1445 = vld [vmem:[%s1434 + $0x28] sm:$0xf]
  %v1446 = vld [vmem:[%s1434 + $0x2c] sm:$0xf]
  %v1447 = vld [vmem:[%s1434 + $0x30] sm:$0xf]
  %v1448 = vld [vmem:[%s1434 + $0x34] sm:$0xf]
  %v1449 = vld [vmem:[%s1434 + $0x38] sm:$0xf]
  %v1450 = vld [vmem:[%s1434 + $0x3c] sm:$0xf]
  %v1467 = vunpack.c.l.b16 %v1435
  %v1468 = vunpack.c.l.b16 %v1436
  %v1469 = vunpack.c.l.b16 %v1437
  %v1470 = vunpack.c.l.b16 %v1438
  %v1471 = vunpack.c.l.b16 %v1439
  %v1472 = vunpack.c.l.b16 %v1440
  %v1473 = vunpack.c.l.b16 %v1441
  %v1474 = vunpack.c.l.b16 %v1442
  %v1475 = vunpack.c.l.b16 %v1443
  %v1476 = vunpack.c.l.b16 %v1444
  %v1477 = vunpack.c.l.b16 %v1445
  %v1478 = vunpack.c.l.b16 %v1446
  %v1479 = vunpack.c.l.b16 %v1447
  %v1480 = vunpack.c.l.b16 %v1448
  %v1481 = vunpack.c.l.b16 %v1449
  %v1482 = vunpack.c.l.b16 %v1450
  %v1483 = vpack.c.b16 %v1468, %v1467
  %v1484 = vpack.c.b16 %v1470, %v1469
  %v1485 = vpack.c.b16 %v1472, %v1471
  %v1486 = vpack.c.b16 %v1474, %v1473
  %v1487 = vpack.c.b16 %v1476, %v1475
  %v1488 = vpack.c.b16 %v1478, %v1477
  %v1489 = vpack.c.b16 %v1480, %v1479
  %v1490 = vpack.c.b16 %v1482, %v1481
  %1499 = vmatprep.subr.bf16.mxu0 0
  %1500 = vmatpush1.bf16.msra.mxu0 %v1483
  %1501 = vmatprep.subr.bf16.mxu0 0
  %1502 = vmatpush1.bf16.msra.mxu0 %v1484
  %1503 = vmatprep.subr.bf16.mxu0 0
  %1504 = vmatpush1.bf16.msra.mxu0 %v1485
  %1505 = vmatprep.subr.bf16.mxu0 0
  %1506 = vmatpush1.bf16.msra.mxu0 %v1486
  %1507 = vmatprep.subr.bf16.mxu0 0
  %1508 = vmatpush1.bf16.msra.mxu0 %v1487
  %1509 = vmatprep.subr.bf16.mxu0 0
  %1510 = vmatpush1.bf16.msra.mxu0 %v1488
  %1511 = vmatprep.subr.bf16.mxu0 0
  %1512 = vmatpush1.bf16.msra.mxu0 %v1489
  %1513 = vmatprep.subr.bf16.mxu0 0
  %1514 = vmatpush1.bf16.msra.mxu0 %v1490
  %1515 = vmatprep.subr.bf16.mxu0 0
  %1516 = vmatpush1.bf16.msra.mxu0 0
  %1517 = vmatprep.subr.bf16.mxu0 0
  %1518 = vmatpush1.bf16.msra.mxu0 0
  %1519 = vmatprep.subr.bf16.mxu0 0
  %1520 = vmatpush1.bf16.msra.mxu0 0
  %1521 = vmatprep.subr.bf16.mxu0 0
  %1522 = vmatpush1.bf16.msra.mxu0 0
  %1523 = vmatprep.subr.bf16.mxu0 0
  %1524 = vmatpush1.bf16.msra.mxu0 0
  %1525 = vmatprep.subr.bf16.mxu0 0
  %1526 = vmatpush1.bf16.msra.mxu0 0
  %1527 = vmatprep.subr.bf16.mxu0 0
  %1528 = vmatpush1.bf16.msra.mxu0 0
  %1529 = vmatprep.subr.bf16.mxu0 0
  %1530 = vmatpush1.bf16.msra.mxu0 0
  %1531 = vmatprep.mubr.bf16.mxu0 0
  %1532 = vmatmul.mubr.bf16.gmra.mrb[0].mxu0 %v1104
  %v1533 = vpop.f32.mrb[0].mxu0
  %v1534 = vadd.f32 0.0, %v1533
  %v1535 = vpop.f32.mrb[0].mxu0
  %v1536 = vpop.f32.mrb[0].mxu0
  %v1537 = vadd.f32 0.0, %v1536
  %v1538 = vpop.f32.mrb[0].mxu0
  %1539 = vmatprep.mubr.bf16.mxu0 0
  %1540 = vmatmul.mubr.bf16.gmra.mrb[0].mxu0 %v1145
  %v1541 = vpop.f32.mrb[0].mxu0
  %v1542 = vadd.f32 0.0, %v1541
  %v1543 = vpop.f32.mrb[0].mxu0
  %v1544 = vpop.f32.mrb[0].mxu0
  %v1545 = vadd.f32 0.0, %v1544
  %v1546 = vpop.f32.mrb[0].mxu0
  %1547 = vmatprep.mubr.bf16.mxu0 0
  %1548 = vmatmul.mubr.bf16.gmra.mrb[0].mxu0 %v1107
  %v1549 = vpop.f32.mrb[0].mxu0
  %v1550 = vadd.f32 0.0, %v1549
  %v1551 = vpop.f32.mrb[0].mxu0
  %v1552 = vpop.f32.mrb[0].mxu0
  %v1553 = vadd.f32 0.0, %v1552
  %v1554 = vpop.f32.mrb[0].mxu0
  %1555 = vmatprep.mubr.bf16.mxu0 0
  %1556 = vmatmul.mubr.bf16.gmra.mrb[0].mxu0 %v1146
  %v1557 = vpop.f32.mrb[0].mxu0
  %v1558 = vadd.f32 0.0, %v1557
  %v1559 = vpop.f32.mrb[0].mxu0
  %v1560 = vpop.f32.mrb[0].mxu0
  %v1561 = vadd.f32 0.0, %v1560
  %v1562 = vpop.f32.mrb[0].mxu0
  %1563 = vdwg.mxu0
  %v1564 = vadd.f32 %v1404, %v1534
  %v1565 = vadd.f32 %v1407, %v1537
  %v1566 = vadd.f32 %v1412, %v1542
  %v1567 = vadd.f32 %v1415, %v1545
  %v1568 = vadd.f32 %v1420, %v1550
  %v1569 = vadd.f32 %v1423, %v1553
  %v1570 = vadd.f32 %v1428, %v1558
  %v1571 = vadd.f32 %v1431, %v1561
  %v1572 = vld [vmem:[#allocation2 + $0x8] sm:$0xff]
  %v1573 = vld [vmem:[#allocation2 + $0x10] sm:$0xff]
  %v1574 = vld [vmem:[#allocation2 + $0x18] sm:$0x1]
  %v1575 = vld [vmem:[#allocation2 + $0x28] sm:$0xff]
  %v1576 = vld [vmem:[#allocation2 + $0x30] sm:$0xff]
  %v1577 = vld [vmem:[#allocation2 + $0x38] sm:$0x1]
  %vm1578 = vsmask.f32 7424
  %v1580 = vshrl.u32 %v1572, 16
  %v1582 = vshll.u32 %v1572, 16
  %v1584 = vrot.slane %v1582, 1
  %v1585 = vor.u32 %v1580, %v1584
  %v1587 = vshll.u32 %v1573, 16
  %v1589 = vrot.slane %v1587, 1
  %v1590 = vsel %vm1578, %v1585, %v1589
  %v1591 = vshrl.u32 %v1573, 16
  %v1593 = vor.u32 %v1591, %v1589
  %v1595 = vshll.u32 %v1574, 16
  %v1597 = vrot.slane %v1595, 1
  %v1598 = vsel %vm1578, %v1593, %v1597
  %v1600 = vshrl.u32 %v1575, 16
  %v1602 = vshll.u32 %v1575, 16
  %v1604 = vrot.slane %v1602, 1
  %v1605 = vor.u32 %v1600, %v1604
  %v1607 = vshll.u32 %v1576, 16
  %v1609 = vrot.slane %v1607, 1
  %v1610 = vsel %vm1578, %v1605, %v1609
  %v1611 = vshrl.u32 %v1576, 16
  %v1613 = vor.u32 %v1611, %v1609
  %v1615 = vshll.u32 %v1577, 16
  %v1617 = vrot.slane %v1615, 1
  %v1618 = vsel %vm1578, %v1613, %v1617
  %s1623 = scalar_lea.vmem %s3, 192
  %v1624 = vld [vmem:[%s1623] sm:$0xf]
  %v1625 = vld [vmem:[%s1623 + $0x4] sm:$0xf]
  %v1626 = vld [vmem:[%s1623 + $0x8] sm:$0xf]
  %v1627 = vld [vmem:[%s1623 + $0xc] sm:$0xf]
  %v1628 = vld [vmem:[%s1623 + $0x10] sm:$0xf]
  %v1629 = vld [vmem:[%s1623 + $0x14] sm:$0xf]
  %v1630 = vld [vmem:[%s1623 + $0x18] sm:$0xf]
  %v1631 = vld [vmem:[%s1623 + $0x1c] sm:$0xf]
  %v1632 = vld [vmem:[%s1623 + $0x20] sm:$0xf]
  %v1633 = vld [vmem:[%s1623 + $0x24] sm:$0xf]
  %v1634 = vld [vmem:[%s1623 + $0x28] sm:$0xf]
  %v1635 = vld [vmem:[%s1623 + $0x2c] sm:$0xf]
  %v1636 = vld [vmem:[%s1623 + $0x30] sm:$0xf]
  %v1637 = vld [vmem:[%s1623 + $0x34] sm:$0xf]
  %v1638 = vld [vmem:[%s1623 + $0x38] sm:$0xf]
  %v1639 = vld [vmem:[%s1623 + $0x3c] sm:$0xf]
  %v1656 = vunpack.c.l.b16 %v1624
  %v1657 = vunpack.c.l.b16 %v1625
  %v1658 = vunpack.c.l.b16 %v1626
  %v1659 = vunpack.c.l.b16 %v1627
  %v1660 = vunpack.c.l.b16 %v1628
  %v1661 = vunpack.c.l.b16 %v1629
  %v1662 = vunpack.c.l.b16 %v1630
  %v1663 = vunpack.c.l.b16 %v1631
  %v1664 = vunpack.c.l.b16 %v1632
  %v1665 = vunpack.c.l.b16 %v1633
  %v1666 = vunpack.c.l.b16 %v1634
  %v1667 = vunpack.c.l.b16 %v1635
  %v1668 = vunpack.c.l.b16 %v1636
  %v1669 = vunpack.c.l.b16 %v1637
  %v1670 = vunpack.c.l.b16 %v1638
  %v1671 = vunpack.c.l.b16 %v1639
  %v1672 = vpack.c.b16 %v1657, %v1656
  %v1673 = vpack.c.b16 %v1659, %v1658
  %v1674 = vpack.c.b16 %v1661, %v1660
  %v1675 = vpack.c.b16 %v1663, %v1662
  %v1676 = vpack.c.b16 %v1665, %v1664
  %v1677 = vpack.c.b16 %v1667, %v1666
  %v1678 = vpack.c.b16 %v1669, %v1668
  %v1679 = vpack.c.b16 %v1671, %v1670
  %1688 = vmatprep.subr.bf16.mxu0 0
  %1689 = vmatpush1.bf16.msra.mxu0 %v1672
  %1690 = vmatprep.subr.bf16.mxu0 0
  %1691 = vmatpush1.bf16.msra.mxu0 %v1673
  %1692 = vmatprep.subr.bf16.mxu0 0
  %1693 = vmatpush1.bf16.msra.mxu0 %v1674
  %1694 = vmatprep.subr.bf16.mxu0 0
  %1695 = vmatpush1.bf16.msra.mxu0 %v1675
  %1696 = vmatprep.subr.bf16.mxu0 0
  %1697 = vmatpush1.bf16.msra.mxu0 %v1676
  %1698 = vmatprep.subr.bf16.mxu0 0
  %1699 = vmatpush1.bf16.msra.mxu0 %v1677
  %1700 = vmatprep.subr.bf16.mxu0 0
  %1701 = vmatpush1.bf16.msra.mxu0 %v1678
  %1702 = vmatprep.subr.bf16.mxu0 0
  %1703 = vmatpush1.bf16.msra.mxu0 %v1679
  %1704 = vmatprep.subr.bf16.mxu0 0
  %1705 = vmatpush1.bf16.msra.mxu0 0
  %1706 = vmatprep.subr.bf16.mxu0 0
  %1707 = vmatpush1.bf16.msra.mxu0 0
  %1708 = vmatprep.subr.bf16.mxu0 0
  %1709 = vmatpush1.bf16.msra.mxu0 0
  %1710 = vmatprep.subr.bf16.mxu0 0
  %1711 = vmatpush1.bf16.msra.mxu0 0
  %1712 = vmatprep.subr.bf16.mxu0 0
  %1713 = vmatpush1.bf16.msra.mxu0 0
  %1714 = vmatprep.subr.bf16.mxu0 0
  %1715 = vmatpush1.bf16.msra.mxu0 0
  %1716 = vmatprep.subr.bf16.mxu0 0
  %1717 = vmatpush1.bf16.msra.mxu0 0
  %1718 = vmatprep.subr.bf16.mxu0 0
  %1719 = vmatpush1.bf16.msra.mxu0 0
  %1720 = vmatprep.mubr.bf16.mxu0 0
  %1721 = vmatmul.mubr.bf16.gmra.mrb[0].mxu0 %v1590
  %v1722 = vpop.f32.mrb[0].mxu0
  %v1723 = vadd.f32 0.0, %v1722
  %v1724 = vpop.f32.mrb[0].mxu0
  %v1725 = vpop.f32.mrb[0].mxu0
  %v1726 = vadd.f32 0.0, %v1725
  %v1727 = vpop.f32.mrb[0].mxu0
  %1728 = vmatprep.mubr.bf16.mxu0 0
  %1729 = vmatmul.mubr.bf16.gmra.mrb[0].mxu0 %v1598
  %v1730 = vpop.f32.mrb[0].mxu0
  %v1731 = vadd.f32 0.0, %v1730
  %v1732 = vpop.f32.mrb[0].mxu0
  %v1733 = vpop.f32.mrb[0].mxu0
  %v1734 = vadd.f32 0.0, %v1733
  %v1735 = vpop.f32.mrb[0].mxu0
  %1736 = vmatprep.mubr.bf16.mxu0 0
  %1737 = vmatmul.mubr.bf16.gmra.mrb[0].mxu0 %v1610
  %v1738 = vpop.f32.mrb[0].mxu0
  %v1739 = vadd.f32 0.0, %v1738
  %v1740 = vpop.f32.mrb[0].mxu0
  %v1741 = vpop.f32.mrb[0].mxu0
  %v1742 = vadd.f32 0.0, %v1741
  %v1743 = vpop.f32.mrb[0].mxu0
  %1744 = vmatprep.mubr.bf16.mxu0 0
  %1745 = vmatmul.mubr.bf16.gmra.mrb[0].mxu0 %v1618
  %v1746 = vpop.f32.mrb[0].mxu0
  %v1747 = vadd.f32 0.0, %v1746
  %v1748 = vpop.f32.mrb[0].mxu0
  %v1749 = vpop.f32.mrb[0].mxu0
  %v1750 = vadd.f32 0.0, %v1749
  %v1751 = vpop.f32.mrb[0].mxu0
  %1752 = vdwg.mxu0
  %v1753 = vadd.f32 %v1564, %v1723
  %v1754 = vadd.f32 %v1565, %v1726
  %v1755 = vadd.f32 %v1566, %v1731
  %v1756 = vadd.f32 %v1567, %v1734
  %v1757 = vadd.f32 %v1568, %v1739
  %v1758 = vadd.f32 %v1569, %v1742
  %v1759 = vadd.f32 %v1570, %v1747
  %v1760 = vadd.f32 %v1571, %v1750
  %v1761 = vld [vmem:[#allocation2 + $0x8] sm:$0xfe]
  %v1762 = vld [vmem:[#allocation2 + $0x28] sm:$0xfe]
  %vm1769 = vcmask 1046528
  %v1770 = vrot.slane %v1761, 1
  %v1771 = vrot.slane %v1573, 1
  %v1772 = vsel %vm1769, %v1770, %v1771
  %v1773 = vrot.slane %v1574, 1
  %v1774 = vsel %vm1769, %v1771, %v1773
  %v1775 = vrot.slane %v1762, 1
  %v1776 = vrot.slane %v1576, 1
  %v1777 = vsel %vm1769, %v1775, %v1776
  %v1778 = vrot.slane %v1577, 1
  %v1779 = vsel %vm1769, %v1776, %v1778
  %s1784 = scalar_lea.vmem %s3, 256
  %v1785 = vld [vmem:[%s1784] sm:$0xf]
  %v1786 = vld [vmem:[%s1784 + $0x4] sm:$0xf]
  %v1787 = vld [vmem:[%s1784 + $0x8] sm:$0xf]
  %v1788 = vld [vmem:[%s1784 + $0xc] sm:$0xf]
  %v1789 = vld [vmem:[%s1784 + $0x10] sm:$0xf]
  %v1790 = vld [vmem:[%s1784 + $0x14] sm:$0xf]
  %v1791 = vld [vmem:[%s1784 + $0x18] sm:$0xf]
  %v1792 = vld [vmem:[%s1784 + $0x1c] sm:$0xf]
  %v1793 = vld [vmem:[%s1784 + $0x20] sm:$0xf]
  %v1794 = vld [vmem:[%s1784 + $0x24] sm:$0xf]
  %v1795 = vld [vmem:[%s1784 + $0x28] sm:$0xf]
  %v1796 = vld [vmem:[%s1784 + $0x2c] sm:$0xf]
  %v1797 = vld [vmem:[%s1784 + $0x30] sm:$0xf]
  %v1798 = vld [vmem:[%s1784 + $0x34] sm:$0xf]
  %v1799 = vld [vmem:[%s1784 + $0x38] sm:$0xf]
  %v1800 = vld [vmem:[%s1784 + $0x3c] sm:$0xf]
  %v1817 = vunpack.c.l.b16 %v1785
  %v1818 = vunpack.c.l.b16 %v1786
  %v1819 = vunpack.c.l.b16 %v1787
  %v1820 = vunpack.c.l.b16 %v1788
  %v1821 = vunpack.c.l.b16 %v1789
  %v1822 = vunpack.c.l.b16 %v1790
  %v1823 = vunpack.c.l.b16 %v1791
  %v1824 = vunpack.c.l.b16 %v1792
  %v1825 = vunpack.c.l.b16 %v1793
  %v1826 = vunpack.c.l.b16 %v1794
  %v1827 = vunpack.c.l.b16 %v1795
  %v1828 = vunpack.c.l.b16 %v1796
  %v1829 = vunpack.c.l.b16 %v1797
  %v1830 = vunpack.c.l.b16 %v1798
  %v1831 = vunpack.c.l.b16 %v1799
  %v1832 = vunpack.c.l.b16 %v1800
  %v1833 = vpack.c.b16 %v1818, %v1817
  %v1834 = vpack.c.b16 %v1820, %v1819
  %v1835 = vpack.c.b16 %v1822, %v1821
  %v1836 = vpack.c.b16 %v1824, %v1823
  %v1837 = vpack.c.b16 %v1826, %v1825
  %v1838 = vpack.c.b16 %v1828, %v1827
  %v1839 = vpack.c.b16 %v1830, %v1829
  %v1840 = vpack.c.b16 %v1832, %v1831
  %1849 = vmatprep.subr.bf16.mxu0 0
  %1850 = vmatpush1.bf16.msra.mxu0 %v1833
  %1851 = vmatprep.subr.bf16.mxu0 0
  %1852 = vmatpush1.bf16.msra.mxu0 %v1834
  %1853 = vmatprep.subr.bf16.mxu0 0
  %1854 = vmatpush1.bf16.msra.mxu0 %v1835
  %1855 = vmatprep.subr.bf16.mxu0 0
  %1856 = vmatpush1.bf16.msra.mxu0 %v1836
  %1857 = vmatprep.subr.bf16.mxu0 0
  %1858 = vmatpush1.bf16.msra.mxu0 %v1837
  %1859 = vmatprep.subr.bf16.mxu0 0
  %1860 = vmatpush1.bf16.msra.mxu0 %v1838
  %1861 = vmatprep.subr.bf16.mxu0 0
  %1862 = vmatpush1.bf16.msra.mxu0 %v1839
  %1863 = vmatprep.subr.bf16.mxu0 0
  %1864 = vmatpush1.bf16.msra.mxu0 %v1840
  %1865 = vmatprep.subr.bf16.mxu0 0
  %1866 = vmatpush1.bf16.msra.mxu0 0
  %1867 = vmatprep.subr.bf16.mxu0 0
  %1868 = vmatpush1.bf16.msra.mxu0 0
  %1869 = vmatprep.subr.bf16.mxu0 0
  %1870 = vmatpush1.bf16.msra.mxu0 0
  %1871 = vmatprep.subr.bf16.mxu0 0
  %1872 = vmatpush1.bf16.msra.mxu0 0
  %1873 = vmatprep.subr.bf16.mxu0 0
  %1874 = vmatpush1.bf16.msra.mxu0 0
  %1875 = vmatprep.subr.bf16.mxu0 0
  %1876 = vmatpush1.bf16.msra.mxu0 0
  %1877 = vmatprep.subr.bf16.mxu0 0
  %1878 = vmatpush1.bf16.msra.mxu0 0
  %1879 = vmatprep.subr.bf16.mxu0 0
  %1880 = vmatpush1.bf16.msra.mxu0 0
  %1881 = vmatprep.mubr.bf16.mxu0 0
  %1882 = vmatmul.mubr.bf16.gmra.mrb[0].mxu0 %v1772
  %v1883 = vpop.f32.mrb[0].mxu0
  %v1884 = vadd.f32 0.0, %v1883
  %v1885 = vpop.f32.mrb[0].mxu0
  %v1886 = vpop.f32.mrb[0].mxu0
  %v1887 = vadd.f32 0.0, %v1886
  %v1888 = vpop.f32.mrb[0].mxu0
  %1889 = vmatprep.mubr.bf16.mxu0 0
  %1890 = vmatmul.mubr.bf16.gmra.mrb[0].mxu0 %v1774
  %v1891 = vpop.f32.mrb[0].mxu0
  %v1892 = vadd.f32 0.0, %v1891
  %v1893 = vpop.f32.mrb[0].mxu0
  %v1894 = vpop.f32.mrb[0].mxu0
  %v1895 = vadd.f32 0.0, %v1894
  %v1896 = vpop.f32.mrb[0].mxu0
  %1897 = vmatprep.mubr.bf16.mxu0 0
  %1898 = vmatmul.mubr.bf16.gmra.mrb[0].mxu0 %v1777
  %v1899 = vpop.f32.mrb[0].mxu0
  %v1900 = vadd.f32 0.0, %v1899
  %v1901 = vpop.f32.mrb[0].mxu0
  %v1902 = vpop.f32.mrb[0].mxu0
  %v1903 = vadd.f32 0.0, %v1902
  %v1904 = vpop.f32.mrb[0].mxu0
  %1905 = vmatprep.mubr.bf16.mxu0 0
  %1906 = vmatmul.mubr.bf16.gmra.mrb[0].mxu0 %v1779
  %v1907 = vpop.f32.mrb[0].mxu0
  %v1908 = vadd.f32 0.0, %v1907
  %v1909 = vpop.f32.mrb[0].mxu0
  %v1910 = vpop.f32.mrb[0].mxu0
  %v1911 = vadd.f32 0.0, %v1910
  %v1912 = vpop.f32.mrb[0].mxu0
  %1913 = vdwg.mxu0
  %v1914 = vadd.f32 %v1753, %v1884
  %v1915 = vadd.f32 %v1754, %v1887
  %v1916 = vadd.f32 %v1755, %v1892
  %v1917 = vadd.f32 %v1756, %v1895
  %v1918 = vadd.f32 %v1757, %v1900
  %v1919 = vadd.f32 %v1758, %v1903
  %v1920 = vadd.f32 %v1759, %v1908
  %v1921 = vadd.f32 %v1760, %v1911
  %v1922 = vld [vmem:[%s4] sm:$0x1]
  %v1924 = vlaneseq
  %v1925 = vshrl.u32 %v1924, 7
  %v1926 = vsub.s32 0, %v1925
  %v1927 = vrot.slane %v1922, %v1926
  %v1929 = vadd.f32 %v1914, %v1927
  %v1930 = vadd.f32 %v1915, %v1927
  %v1931 = vadd.f32 %v1916, %v1927
  %v1932 = vadd.f32 %v1917, %v1927
  %v1933 = vadd.f32 %v1918, %v1927
  %v1934 = vadd.f32 %v1919, %v1927
  %v1935 = vadd.f32 %v1920, %v1927
  %v1936 = vadd.f32 %v1921, %v1927
  %v1937 = vmax.f32 %v1929, 0.0
  %v1938 = vmax.f32 %v1930, 0.0
  %v1939 = vmax.f32 %v1931, 0.0
  %v1940 = vmax.f32 %v1932, 0.0
  %v1941 = vmax.f32 %v1933, 0.0
  %v1942 = vmax.f32 %v1934, 0.0
  %v1943 = vmax.f32 %v1935, 0.0
  %v1944 = vmax.f32 %v1936, 0.0
  %v1945 = vpack.c.bf16 %v1938, %v1937
  %v1946 = vpack.c.bf16 %v1940, %v1939
  %v1947 = vpack.c.bf16 %v1942, %v1941
  %v1948 = vpack.c.bf16 %v1944, %v1943
  %1949 = vst [vmem:[#allocation3 + $0x8] sm:$0xff] %v1945
  %1950 = vst [vmem:[#allocation3 + $0x10] sm:$0xff] %v1946
  %1951 = vst [vmem:[#allocation3 + $0x28] sm:$0xff] %v1947
  %1952 = vst [vmem:[#allocation3 + $0x30] sm:$0xff] %v1948
  %v1953 = vld [vmem:[#allocation3] sm:$0x80]
  %v1954 = vld [vmem:[#allocation3 + $0x8] sm:$0xff]
  %v1955 = vld [vmem:[#allocation3 + $0x10] sm:$0x7f]
  %v1956 = vld [vmem:[#allocation3 + $0x20] sm:$0x80]
  %v1957 = vld [vmem:[#allocation3 + $0x28] sm:$0xff]
  %v1958 = vld [vmem:[#allocation3 + $0x30] sm:$0x7f]
  %v1965 = vrot.slane %v1953, 7
  %v1966 = vrot.slane %v1954, 7
  %v1967 = vsel %vm61, %v1965, %v1966
  %v1968 = vrot.slane %v1955, 7
  %v1969 = vsel %vm61, %v1966, %v1968
  %v1970 = vrot.slane %v1956, 7
  %v1971 = vrot.slane %v1957, 7
  %v1972 = vsel %vm61, %v1970, %v1971
  %v1973 = vrot.slane %v1958, 7
  %v1974 = vsel %vm61, %v1971, %v1973
  %v1979 = vld [vmem:[%s5] sm:$0xf]
  %v1980 = vld [vmem:[%s5 + $0x4] sm:$0xf]
  %v1981 = vld [vmem:[%s5 + $0x8] sm:$0xf]
  %v1982 = vld [vmem:[%s5 + $0xc] sm:$0xf]
  %v1983 = vld [vmem:[%s5 + $0x10] sm:$0xf]
  %v1984 = vld [vmem:[%s5 + $0x14] sm:$0xf]
  %v1985 = vld [vmem:[%s5 + $0x18] sm:$0xf]
  %v1986 = vld [vmem:[%s5 + $0x1c] sm:$0xf]
  %v1987 = vld [vmem:[%s5 + $0x20] sm:$0xf]
  %v1988 = vld [vmem:[%s5 + $0x24] sm:$0xf]
  %v1989 = vld [vmem:[%s5 + $0x28] sm:$0xf]
  %v1990 = vld [vmem:[%s5 + $0x2c] sm:$0xf]
  %v1991 = vld [vmem:[%s5 + $0x30] sm:$0xf]
  %v1992 = vld [vmem:[%s5 + $0x34] sm:$0xf]
  %v1993 = vld [vmem:[%s5 + $0x38] sm:$0xf]
  %v1994 = vld [vmem:[%s5 + $0x3c] sm:$0xf]
  %v1995 = vld [vmem:[#allocation3 + $0x10] sm:$0xff]
  %v1996 = vld [vmem:[#allocation3 + $0x30] sm:$0xff]
  %v1998 = vshrl.u32 %v1953, 16
  %v2000 = vrot.slane %v1998, 7
  %v2002 = vshrl.u32 %v1954, 16
  %v2004 = vrot.slane %v2002, 7
  %v2005 = vshll.u32 %v1954, 16
  %v2007 = vor.u32 %v2004, %v2005
  %v2008 = vsel %vm108, %v2000, %v2007
  %v2010 = vshrl.u32 %v1995, 16
  %v2012 = vrot.slane %v2010, 7
  %v2013 = vshll.u32 %v1995, 16
  %v2015 = vor.u32 %v2012, %v2013
  %v2016 = vsel %vm108, %v2004, %v2015
  %v2018 = vshrl.u32 %v1956, 16
  %v2020 = vrot.slane %v2018, 7
  %v2022 = vshrl.u32 %v1957, 16
  %v2024 = vrot.slane %v2022, 7
  %v2025 = vshll.u32 %v1957, 16
  %v2027 = vor.u32 %v2024, %v2025
  %v2028 = vsel %vm108, %v2020, %v2027
  %v2030 = vshrl.u32 %v1996, 16
  %v2032 = vrot.slane %v2030, 7
  %v2033 = vshll.u32 %v1996, 16
  %v2035 = vor.u32 %v2032, %v2033
  %v2036 = vsel %vm108, %v2024, %v2035
  %s2041 = scalar_lea.vmem %s5, 64
  %v2042 = vld [vmem:[%s2041] sm:$0xf]
  %v2043 = vld [vmem:[%s2041 + $0x4] sm:$0xf]
  %v2044 = vld [vmem:[%s2041 + $0x8] sm:$0xf]
  %v2045 = vld [vmem:[%s2041 + $0xc] sm:$0xf]
  %v2046 = vld [vmem:[%s2041 + $0x10] sm:$0xf]
  %v2047 = vld [vmem:[%s2041 + $0x14] sm:$0xf]
  %v2048 = vld [vmem:[%s2041 + $0x18] sm:$0xf]
  %v2049 = vld [vmem:[%s2041 + $0x1c] sm:$0xf]
  %v2050 = vld [vmem:[%s2041 + $0x20] sm:$0xf]
  %v2051 = vld [vmem:[%s2041 + $0x24] sm:$0xf]
  %v2052 = vld [vmem:[%s2041 + $0x28] sm:$0xf]
  %v2053 = vld [vmem:[%s2041 + $0x2c] sm:$0xf]
  %v2054 = vld [vmem:[%s2041 + $0x30] sm:$0xf]
  %v2055 = vld [vmem:[%s2041 + $0x34] sm:$0xf]
  %v2056 = vld [vmem:[%s2041 + $0x38] sm:$0xf]
  %v2057 = vld [vmem:[%s2041 + $0x3c] sm:$0xf]
  %v2074 = vunpack.c.l.b16 %v2042
  %v2075 = vunpack.c.l.b16 %v2043
  %v2076 = vunpack.c.l.b16 %v2044
  %v2077 = vunpack.c.l.b16 %v2045
  %v2078 = vunpack.c.l.b16 %v2046
  %v2079 = vunpack.c.l.b16 %v2047
  %v2080 = vunpack.c.l.b16 %v2048
  %v2081 = vunpack.c.l.b16 %v2049
  %v2082 = vunpack.c.l.b16 %v2050
  %v2083 = vunpack.c.l.b16 %v2051
  %v2084 = vunpack.c.l.b16 %v2052
  %v2085 = vunpack.c.l.b16 %v2053
  %v2086 = vunpack.c.l.b16 %v2054
  %v2087 = vunpack.c.l.b16 %v2055
  %v2088 = vunpack.c.l.b16 %v2056
  %v2089 = vunpack.c.l.b16 %v2057
  %v2090 = vpack.c.b16 %v2075, %v2074
  %v2091 = vpack.c.b16 %v2077, %v2076
  %v2092 = vpack.c.b16 %v2079, %v2078
  %v2093 = vpack.c.b16 %v2081, %v2080
  %v2094 = vpack.c.b16 %v2083, %v2082
  %v2095 = vpack.c.b16 %v2085, %v2084
  %v2096 = vpack.c.b16 %v2087, %v2086
  %v2097 = vpack.c.b16 %v2089, %v2088
  %2106 = vmatprep.subr.bf16.mxu0 0
  %2107 = vmatpush1.bf16.msra.mxu0 %v2090
  %2108 = vmatprep.subr.bf16.mxu0 0
  %2109 = vmatpush1.bf16.msra.mxu0 %v2091
  %2110 = vmatprep.subr.bf16.mxu0 0
  %2111 = vmatpush1.bf16.msra.mxu0 %v2092
  %2112 = vmatprep.subr.bf16.mxu0 0
  %2113 = vmatpush1.bf16.msra.mxu0 %v2093
  %2114 = vmatprep.subr.bf16.mxu0 0
  %2115 = vmatpush1.bf16.msra.mxu0 %v2094
  %2116 = vmatprep.subr.bf16.mxu0 0
  %2117 = vmatpush1.bf16.msra.mxu0 %v2095
  %2118 = vmatprep.subr.bf16.mxu0 0
  %2119 = vmatpush1.bf16.msra.mxu0 %v2096
  %2120 = vmatprep.subr.bf16.mxu0 0
  %2121 = vmatpush1.bf16.msra.mxu0 %v2097
  %2122 = vmatprep.subr.bf16.mxu0 0
  %2123 = vmatpush1.bf16.msra.mxu0 0
  %2124 = vmatprep.subr.bf16.mxu0 0
  %2125 = vmatpush1.bf16.msra.mxu0 0
  %2126 = vmatprep.subr.bf16.mxu0 0
  %2127 = vmatpush1.bf16.msra.mxu0 0
  %2128 = vmatprep.subr.bf16.mxu0 0
  %2129 = vmatpush1.bf16.msra.mxu0 0
  %2130 = vmatprep.subr.bf16.mxu0 0
  %2131 = vmatpush1.bf16.msra.mxu0 0
  %2132 = vmatprep.subr.bf16.mxu0 0
  %2133 = vmatpush1.bf16.msra.mxu0 0
  %2134 = vmatprep.subr.bf16.mxu0 0
  %2135 = vmatpush1.bf16.msra.mxu0 0
  %2136 = vmatprep.subr.bf16.mxu0 0
  %2137 = vmatpush1.bf16.msra.mxu0 0
  %2138 = vmatprep.mubr.bf16.mxu0 0
  %2139 = vmatmul.mubr.bf16.gmra.mrb[0].mxu0 %v2008
  %v2140 = vpop.f32.mrb[0].mxu0
  %v2141 = vadd.f32 0.0, %v2140
  %v2142 = vpop.f32.mrb[0].mxu0
  %v2143 = vpop.f32.mrb[0].mxu0
  %v2144 = vadd.f32 0.0, %v2143
  %v2145 = vpop.f32.mrb[0].mxu0
  %2146 = vmatprep.mubr.bf16.mxu0 0
  %2147 = vmatmul.mubr.bf16.gmra.mrb[0].mxu0 %v2016
  %v2148 = vpop.f32.mrb[0].mxu0
  %v2149 = vadd.f32 0.0, %v2148
  %v2150 = vpop.f32.mrb[0].mxu0
  %v2151 = vpop.f32.mrb[0].mxu0
  %v2152 = vadd.f32 0.0, %v2151
  %v2153 = vpop.f32.mrb[0].mxu0
  %2154 = vmatprep.mubr.bf16.mxu0 0
  %2155 = vmatmul.mubr.bf16.gmra.mrb[0].mxu0 %v2028
  %v2156 = vpop.f32.mrb[0].mxu0
  %v2157 = vadd.f32 0.0, %v2156
  %v2158 = vpop.f32.mrb[0].mxu0
  %v2159 = vpop.f32.mrb[0].mxu0
  %v2160 = vadd.f32 0.0, %v2159
  %v2161 = vpop.f32.mrb[0].mxu0
  %2162 = vmatprep.mubr.bf16.mxu0 0
  %2163 = vmatmul.mubr.bf16.gmra.mrb[0].mxu0 %v2036
  %v2164 = vpop.f32.mrb[0].mxu0
  %v2165 = vadd.f32 0.0, %v2164
  %v2166 = vpop.f32.mrb[0].mxu0
  %v2167 = vpop.f32.mrb[0].mxu0
  %v2168 = vadd.f32 0.0, %v2167
  %v2169 = vpop.f32.mrb[0].mxu0
  %2170 = vdwg.mxu0
  %v2187 = vunpack.c.l.b16 %v1979
  %v2188 = vunpack.c.l.b16 %v1980
  %v2189 = vunpack.c.l.b16 %v1981
  %v2190 = vunpack.c.l.b16 %v1982
  %v2191 = vunpack.c.l.b16 %v1983
  %v2192 = vunpack.c.l.b16 %v1984
  %v2193 = vunpack.c.l.b16 %v1985
  %v2194 = vunpack.c.l.b16 %v1986
  %v2195 = vunpack.c.l.b16 %v1987
  %v2196 = vunpack.c.l.b16 %v1988
  %v2197 = vunpack.c.l.b16 %v1989
  %v2198 = vunpack.c.l.b16 %v1990
  %v2199 = vunpack.c.l.b16 %v1991
  %v2200 = vunpack.c.l.b16 %v1992
  %v2201 = vunpack.c.l.b16 %v1993
  %v2202 = vunpack.c.l.b16 %v1994
  %v2203 = vpack.c.b16 %v2188, %v2187
  %v2204 = vpack.c.b16 %v2190, %v2189
  %v2205 = vpack.c.b16 %v2192, %v2191
  %v2206 = vpack.c.b16 %v2194, %v2193
  %v2207 = vpack.c.b16 %v2196, %v2195
  %v2208 = vpack.c.b16 %v2198, %v2197
  %v2209 = vpack.c.b16 %v2200, %v2199
  %v2210 = vpack.c.b16 %v2202, %v2201
  %2219 = vmatprep.subr.bf16.mxu0 0
  %2220 = vmatpush1.bf16.msra.mxu0 %v2203
  %2221 = vmatprep.subr.bf16.mxu0 0
  %2222 = vmatpush1.bf16.msra.mxu0 %v2204
  %2223 = vmatprep.subr.bf16.mxu0 0
  %2224 = vmatpush1.bf16.msra.mxu0 %v2205
  %2225 = vmatprep.subr.bf16.mxu0 0
  %2226 = vmatpush1.bf16.msra.mxu0 %v2206
  %2227 = vmatprep.subr.bf16.mxu0 0
  %2228 = vmatpush1.bf16.msra.mxu0 %v2207
  %2229 = vmatprep.subr.bf16.mxu0 0
  %2230 = vmatpush1.bf16.msra.mxu0 %v2208
  %2231 = vmatprep.subr.bf16.mxu0 0
  %2232 = vmatpush1.bf16.msra.mxu0 %v2209
  %2233 = vmatprep.subr.bf16.mxu0 0
  %2234 = vmatpush1.bf16.msra.mxu0 %v2210
  %2235 = vmatprep.subr.bf16.mxu0 0
  %2236 = vmatpush1.bf16.msra.mxu0 0
  %2237 = vmatprep.subr.bf16.mxu0 0
  %2238 = vmatpush1.bf16.msra.mxu0 0
  %2239 = vmatprep.subr.bf16.mxu0 0
  %2240 = vmatpush1.bf16.msra.mxu0 0
  %2241 = vmatprep.subr.bf16.mxu0 0
  %2242 = vmatpush1.bf16.msra.mxu0 0
  %2243 = vmatprep.subr.bf16.mxu0 0
  %2244 = vmatpush1.bf16.msra.mxu0 0
  %2245 = vmatprep.subr.bf16.mxu0 0
  %2246 = vmatpush1.bf16.msra.mxu0 0
  %2247 = vmatprep.subr.bf16.mxu0 0
  %2248 = vmatpush1.bf16.msra.mxu0 0
  %2249 = vmatprep.subr.bf16.mxu0 0
  %2250 = vmatpush1.bf16.msra.mxu0 0
  %2251 = vmatprep.mubr.bf16.mxu0 0
  %2252 = vmatmul.mubr.bf16.gmra.mrb[0].mxu0 %v1967
  %v2253 = vpop.f32.mrb[0].mxu0
  %v2254 = vadd.f32 %v2141, %v2253
  %v2255 = vpop.f32.mrb[0].mxu0
  %v2256 = vpop.f32.mrb[0].mxu0
  %v2257 = vadd.f32 %v2144, %v2256
  %v2258 = vpop.f32.mrb[0].mxu0
  %2259 = vmatprep.mubr.bf16.mxu0 0
  %2260 = vmatmul.mubr.bf16.gmra.mrb[0].mxu0 %v1969
  %v2261 = vpop.f32.mrb[0].mxu0
  %v2262 = vadd.f32 %v2149, %v2261
  %v2263 = vpop.f32.mrb[0].mxu0
  %v2264 = vpop.f32.mrb[0].mxu0
  %v2265 = vadd.f32 %v2152, %v2264
  %v2266 = vpop.f32.mrb[0].mxu0
  %2267 = vmatprep.mubr.bf16.mxu0 0
  %2268 = vmatmul.mubr.bf16.gmra.mrb[0].mxu0 %v1972
  %v2269 = vpop.f32.mrb[0].mxu0
  %v2270 = vadd.f32 %v2157, %v2269
  %v2271 = vpop.f32.mrb[0].mxu0
  %v2272 = vpop.f32.mrb[0].mxu0
  %v2273 = vadd.f32 %v2160, %v2272
  %v2274 = vpop.f32.mrb[0].mxu0
  %2275 = vmatprep.mubr.bf16.mxu0 0
  %2276 = vmatmul.mubr.bf16.gmra.mrb[0].mxu0 %v1974
  %v2277 = vpop.f32.mrb[0].mxu0
  %v2278 = vadd.f32 %v2165, %v2277
  %v2279 = vpop.f32.mrb[0].mxu0
  %v2280 = vpop.f32.mrb[0].mxu0
  %v2281 = vadd.f32 %v2168, %v2280
  %v2282 = vpop.f32.mrb[0].mxu0
  %2283 = vdwg.mxu0
  %s2284 = scalar_lea.vmem %s5, 128
  %v2285 = vld [vmem:[%s2284] sm:$0xf]
  %v2286 = vld [vmem:[%s2284 + $0x4] sm:$0xf]
  %v2287 = vld [vmem:[%s2284 + $0x8] sm:$0xf]
  %v2288 = vld [vmem:[%s2284 + $0xc] sm:$0xf]
  %v2289 = vld [vmem:[%s2284 + $0x10] sm:$0xf]
  %v2290 = vld [vmem:[%s2284 + $0x14] sm:$0xf]
  %v2291 = vld [vmem:[%s2284 + $0x18] sm:$0xf]
  %v2292 = vld [vmem:[%s2284 + $0x1c] sm:$0xf]
  %v2293 = vld [vmem:[%s2284 + $0x20] sm:$0xf]
  %v2294 = vld [vmem:[%s2284 + $0x24] sm:$0xf]
  %v2295 = vld [vmem:[%s2284 + $0x28] sm:$0xf]
  %v2296 = vld [vmem:[%s2284 + $0x2c] sm:$0xf]
  %v2297 = vld [vmem:[%s2284 + $0x30] sm:$0xf]
  %v2298 = vld [vmem:[%s2284 + $0x34] sm:$0xf]
  %v2299 = vld [vmem:[%s2284 + $0x38] sm:$0xf]
  %v2300 = vld [vmem:[%s2284 + $0x3c] sm:$0xf]
  %v2317 = vunpack.c.l.b16 %v2285
  %v2318 = vunpack.c.l.b16 %v2286
  %v2319 = vunpack.c.l.b16 %v2287
  %v2320 = vunpack.c.l.b16 %v2288
  %v2321 = vunpack.c.l.b16 %v2289
  %v2322 = vunpack.c.l.b16 %v2290
  %v2323 = vunpack.c.l.b16 %v2291
  %v2324 = vunpack.c.l.b16 %v2292
  %v2325 = vunpack.c.l.b16 %v2293
  %v2326 = vunpack.c.l.b16 %v2294
  %v2327 = vunpack.c.l.b16 %v2295
  %v2328 = vunpack.c.l.b16 %v2296
  %v2329 = vunpack.c.l.b16 %v2297
  %v2330 = vunpack.c.l.b16 %v2298
  %v2331 = vunpack.c.l.b16 %v2299
  %v2332 = vunpack.c.l.b16 %v2300
  %v2333 = vpack.c.b16 %v2318, %v2317
  %v2334 = vpack.c.b16 %v2320, %v2319
  %v2335 = vpack.c.b16 %v2322, %v2321
  %v2336 = vpack.c.b16 %v2324, %v2323
  %v2337 = vpack.c.b16 %v2326, %v2325
  %v2338 = vpack.c.b16 %v2328, %v2327
  %v2339 = vpack.c.b16 %v2330, %v2329
  %v2340 = vpack.c.b16 %v2332, %v2331
  %2349 = vmatprep.subr.bf16.mxu0 0
  %2350 = vmatpush1.bf16.msra.mxu0 %v2333
  %2351 = vmatprep.subr.bf16.mxu0 0
  %2352 = vmatpush1.bf16.msra.mxu0 %v2334
  %2353 = vmatprep.subr.bf16.mxu0 0
  %2354 = vmatpush1.bf16.msra.mxu0 %v2335
  %2355 = vmatprep.subr.bf16.mxu0 0
  %2356 = vmatpush1.bf16.msra.mxu0 %v2336
  %2357 = vmatprep.subr.bf16.mxu0 0
  %2358 = vmatpush1.bf16.msra.mxu0 %v2337
  %2359 = vmatprep.subr.bf16.mxu0 0
  %2360 = vmatpush1.bf16.msra.mxu0 %v2338
  %2361 = vmatprep.subr.bf16.mxu0 0
  %2362 = vmatpush1.bf16.msra.mxu0 %v2339
  %2363 = vmatprep.subr.bf16.mxu0 0
  %2364 = vmatpush1.bf16.msra.mxu0 %v2340
  %2365 = vmatprep.subr.bf16.mxu0 0
  %2366 = vmatpush1.bf16.msra.mxu0 0
  %2367 = vmatprep.subr.bf16.mxu0 0
  %2368 = vmatpush1.bf16.msra.mxu0 0
  %2369 = vmatprep.subr.bf16.mxu0 0
  %2370 = vmatpush1.bf16.msra.mxu0 0
  %2371 = vmatprep.subr.bf16.mxu0 0
  %2372 = vmatpush1.bf16.msra.mxu0 0
  %2373 = vmatprep.subr.bf16.mxu0 0
  %2374 = vmatpush1.bf16.msra.mxu0 0
  %2375 = vmatprep.subr.bf16.mxu0 0
  %2376 = vmatpush1.bf16.msra.mxu0 0
  %2377 = vmatprep.subr.bf16.mxu0 0
  %2378 = vmatpush1.bf16.msra.mxu0 0
  %2379 = vmatprep.subr.bf16.mxu0 0
  %2380 = vmatpush1.bf16.msra.mxu0 0
  %2381 = vmatprep.mubr.bf16.mxu0 0
  %2382 = vmatmul.mubr.bf16.gmra.mrb[0].mxu0 %v1954
  %v2383 = vpop.f32.mrb[0].mxu0
  %v2384 = vadd.f32 0.0, %v2383
  %v2385 = vpop.f32.mrb[0].mxu0
  %v2386 = vpop.f32.mrb[0].mxu0
  %v2387 = vadd.f32 0.0, %v2386
  %v2388 = vpop.f32.mrb[0].mxu0
  %2389 = vmatprep.mubr.bf16.mxu0 0
  %2390 = vmatmul.mubr.bf16.gmra.mrb[0].mxu0 %v1995
  %v2391 = vpop.f32.mrb[0].mxu0
  %v2392 = vadd.f32 0.0, %v2391
  %v2393 = vpop.f32.mrb[0].mxu0
  %v2394 = vpop.f32.mrb[0].mxu0
  %v2395 = vadd.f32 0.0, %v2394
  %v2396 = vpop.f32.mrb[0].mxu0
  %2397 = vmatprep.mubr.bf16.mxu0 0
  %2398 = vmatmul.mubr.bf16.gmra.mrb[0].mxu0 %v1957
  %v2399 = vpop.f32.mrb[0].mxu0
  %v2400 = vadd.f32 0.0, %v2399
  %v2401 = vpop.f32.mrb[0].mxu0
  %v2402 = vpop.f32.mrb[0].mxu0
  %v2403 = vadd.f32 0.0, %v2402
  %v2404 = vpop.f32.mrb[0].mxu0
  %2405 = vmatprep.mubr.bf16.mxu0 0
  %2406 = vmatmul.mubr.bf16.gmra.mrb[0].mxu0 %v1996
  %v2407 = vpop.f32.mrb[0].mxu0
  %v2408 = vadd.f32 0.0, %v2407
  %v2409 = vpop.f32.mrb[0].mxu0
  %v2410 = vpop.f32.mrb[0].mxu0
  %v2411 = vadd.f32 0.0, %v2410
  %v2412 = vpop.f32.mrb[0].mxu0
  %2413 = vdwg.mxu0
  %v2414 = vadd.f32 %v2254, %v2384
  %v2415 = vadd.f32 %v2257, %v2387
  %v2416 = vadd.f32 %v2262, %v2392
  %v2417 = vadd.f32 %v2265, %v2395
  %v2418 = vadd.f32 %v2270, %v2400
  %v2419 = vadd.f32 %v2273, %v2403
  %v2420 = vadd.f32 %v2278, %v2408
  %v2421 = vadd.f32 %v2281, %v2411
  %v2422 = vld [vmem:[#allocation3 + $0x8] sm:$0xff]
  %v2423 = vld [vmem:[#allocation3 + $0x10] sm:$0xff]
  %v2424 = vld [vmem:[#allocation3 + $0x18] sm:$0x1]
  %v2425 = vld [vmem:[#allocation3 + $0x28] sm:$0xff]
  %v2426 = vld [vmem:[#allocation3 + $0x30] sm:$0xff]
  %v2427 = vld [vmem:[#allocation3 + $0x38] sm:$0x1]
  %v2429 = vshrl.u32 %v2422, 16
  %v2431 = vshll.u32 %v2422, 16
  %v2433 = vrot.slane %v2431, 1
  %v2434 = vor.u32 %v2429, %v2433
  %v2436 = vshll.u32 %v2423, 16
  %v2438 = vrot.slane %v2436, 1
  %v2439 = vsel %vm1578, %v2434, %v2438
  %v2440 = vshrl.u32 %v2423, 16
  %v2442 = vor.u32 %v2440, %v2438
  %v2444 = vshll.u32 %v2424, 16
  %v2446 = vrot.slane %v2444, 1
  %v2447 = vsel %vm1578, %v2442, %v2446
  %v2449 = vshrl.u32 %v2425, 16
  %v2451 = vshll.u32 %v2425, 16
  %v2453 = vrot.slane %v2451, 1
  %v2454 = vor.u32 %v2449, %v2453
  %v2456 = vshll.u32 %v2426, 16
  %v2458 = vrot.slane %v2456, 1
  %v2459 = vsel %vm1578, %v2454, %v2458
  %v2460 = vshrl.u32 %v2426, 16
  %v2462 = vor.u32 %v2460, %v2458
  %v2464 = vshll.u32 %v2427, 16
  %v2466 = vrot.slane %v2464, 1
  %v2467 = vsel %vm1578, %v2462, %v2466
  %s2472 = scalar_lea.vmem %s5, 192
  %v2473 = vld [vmem:[%s2472] sm:$0xf]
  %v2474 = vld [vmem:[%s2472 + $0x4] sm:$0xf]
  %v2475 = vld [vmem:[%s2472 + $0x8] sm:$0xf]
  %v2476 = vld [vmem:[%s2472 + $0xc] sm:$0xf]
  %v2477 = vld [vmem:[%s2472 + $0x10] sm:$0xf]
  %v2478 = vld [vmem:[%s2472 + $0x14] sm:$0xf]
  %v2479 = vld [vmem:[%s2472 + $0x18] sm:$0xf]
  %v2480 = vld [vmem:[%s2472 + $0x1c] sm:$0xf]
  %v2481 = vld [vmem:[%s2472 + $0x20] sm:$0xf]
  %v2482 = vld [vmem:[%s2472 + $0x24] sm:$0xf]
  %v2483 = vld [vmem:[%s2472 + $0x28] sm:$0xf]
  %v2484 = vld [vmem:[%s2472 + $0x2c] sm:$0xf]
  %v2485 = vld [vmem:[%s2472 + $0x30] sm:$0xf]
  %v2486 = vld [vmem:[%s2472 + $0x34] sm:$0xf]
  %v2487 = vld [vmem:[%s2472 + $0x38] sm:$0xf]
  %v2488 = vld [vmem:[%s2472 + $0x3c] sm:$0xf]
  %v2505 = vunpack.c.l.b16 %v2473
  %v2506 = vunpack.c.l.b16 %v2474
  %v2507 = vunpack.c.l.b16 %v2475
  %v2508 = vunpack.c.l.b16 %v2476
  %v2509 = vunpack.c.l.b16 %v2477
  %v2510 = vunpack.c.l.b16 %v2478
  %v2511 = vunpack.c.l.b16 %v2479
  %v2512 = vunpack.c.l.b16 %v2480
  %v2513 = vunpack.c.l.b16 %v2481
  %v2514 = vunpack.c.l.b16 %v2482
  %v2515 = vunpack.c.l.b16 %v2483
  %v2516 = vunpack.c.l.b16 %v2484
  %v2517 = vunpack.c.l.b16 %v2485
  %v2518 = vunpack.c.l.b16 %v2486
  %v2519 = vunpack.c.l.b16 %v2487
  %v2520 = vunpack.c.l.b16 %v2488
  %v2521 = vpack.c.b16 %v2506, %v2505
  %v2522 = vpack.c.b16 %v2508, %v2507
  %v2523 = vpack.c.b16 %v2510, %v2509
  %v2524 = vpack.c.b16 %v2512, %v2511
  %v2525 = vpack.c.b16 %v2514, %v2513
  %v2526 = vpack.c.b16 %v2516, %v2515
  %v2527 = vpack.c.b16 %v2518, %v2517
  %v2528 = vpack.c.b16 %v2520, %v2519
  %2537 = vmatprep.subr.bf16.mxu0 0
  %2538 = vmatpush1.bf16.msra.mxu0 %v2521
  %2539 = vmatprep.subr.bf16.mxu0 0
  %2540 = vmatpush1.bf16.msra.mxu0 %v2522
  %2541 = vmatprep.subr.bf16.mxu0 0
  %2542 = vmatpush1.bf16.msra.mxu0 %v2523
  %2543 = vmatprep.subr.bf16.mxu0 0
  %2544 = vmatpush1.bf16.msra.mxu0 %v2524
  %2545 = vmatprep.subr.bf16.mxu0 0
  %2546 = vmatpush1.bf16.msra.mxu0 %v2525
  %2547 = vmatprep.subr.bf16.mxu0 0
  %2548 = vmatpush1.bf16.msra.mxu0 %v2526
  %2549 = vmatprep.subr.bf16.mxu0 0
  %2550 = vmatpush1.bf16.msra.mxu0 %v2527
  %2551 = vmatprep.subr.bf16.mxu0 0
  %2552 = vmatpush1.bf16.msra.mxu0 %v2528
  %2553 = vmatprep.subr.bf16.mxu0 0
  %2554 = vmatpush1.bf16.msra.mxu0 0
  %2555 = vmatprep.subr.bf16.mxu0 0
  %2556 = vmatpush1.bf16.msra.mxu0 0
  %2557 = vmatprep.subr.bf16.mxu0 0
  %2558 = vmatpush1.bf16.msra.mxu0 0
  %2559 = vmatprep.subr.bf16.mxu0 0
  %2560 = vmatpush1.bf16.msra.mxu0 0
  %2561 = vmatprep.subr.bf16.mxu0 0
  %2562 = vmatpush1.bf16.msra.mxu0 0
  %2563 = vmatprep.subr.bf16.mxu0 0
  %2564 = vmatpush1.bf16.msra.mxu0 0
  %2565 = vmatprep.subr.bf16.mxu0 0
  %2566 = vmatpush1.bf16.msra.mxu0 0
  %2567 = vmatprep.subr.bf16.mxu0 0
  %2568 = vmatpush1.bf16.msra.mxu0 0
  %2569 = vmatprep.mubr.bf16.mxu0 0
  %2570 = vmatmul.mubr.bf16.gmra.mrb[0].mxu0 %v2439
  %v2571 = vpop.f32.mrb[0].mxu0
  %v2572 = vadd.f32 0.0, %v2571
  %v2573 = vpop.f32.mrb[0].mxu0
  %v2574 = vpop.f32.mrb[0].mxu0
  %v2575 = vadd.f32 0.0, %v2574
  %v2576 = vpop.f32.mrb[0].mxu0
  %2577 = vmatprep.mubr.bf16.mxu0 0
  %2578 = vmatmul.mubr.bf16.gmra.mrb[0].mxu0 %v2447
  %v2579 = vpop.f32.mrb[0].mxu0
  %v2580 = vadd.f32 0.0, %v2579
  %v2581 = vpop.f32.mrb[0].mxu0
  %v2582 = vpop.f32.mrb[0].mxu0
  %v2583 = vadd.f32 0.0, %v2582
  %v2584 = vpop.f32.mrb[0].mxu0
  %2585 = vmatprep.mubr.bf16.mxu0 0
  %2586 = vmatmul.mubr.bf16.gmra.mrb[0].mxu0 %v2459
  %v2587 = vpop.f32.mrb[0].mxu0
  %v2588 = vadd.f32 0.0, %v2587
  %v2589 = vpop.f32.mrb[0].mxu0
  %v2590 = vpop.f32.mrb[0].mxu0
  %v2591 = vadd.f32 0.0, %v2590
  %v2592 = vpop.f32.mrb[0].mxu0
  %2593 = vmatprep.mubr.bf16.mxu0 0
  %2594 = vmatmul.mubr.bf16.gmra.mrb[0].mxu0 %v2467
  %v2595 = vpop.f32.mrb[0].mxu0
  %v2596 = vadd.f32 0.0, %v2595
  %v2597 = vpop.f32.mrb[0].mxu0
  %v2598 = vpop.f32.mrb[0].mxu0
  %v2599 = vadd.f32 0.0, %v2598
  %v2600 = vpop.f32.mrb[0].mxu0
  %2601 = vdwg.mxu0
  %v2602 = vadd.f32 %v2414, %v2572
  %v2603 = vadd.f32 %v2415, %v2575
  %v2604 = vadd.f32 %v2416, %v2580
  %v2605 = vadd.f32 %v2417, %v2583
  %v2606 = vadd.f32 %v2418, %v2588
  %v2607 = vadd.f32 %v2419, %v2591
  %v2608 = vadd.f32 %v2420, %v2596
  %v2609 = vadd.f32 %v2421, %v2599
  %v2610 = vld [vmem:[#allocation3 + $0x8] sm:$0xfe]
  %v2611 = vld [vmem:[#allocation3 + $0x28] sm:$0xfe]
  %v2618 = vrot.slane %v2610, 1
  %v2619 = vrot.slane %v2423, 1
  %v2620 = vsel %vm1769, %v2618, %v2619
  %v2621 = vrot.slane %v2424, 1
  %v2622 = vsel %vm1769, %v2619, %v2621
  %v2623 = vrot.slane %v2611, 1
  %v2624 = vrot.slane %v2426, 1
  %v2625 = vsel %vm1769, %v2623, %v2624
  %v2626 = vrot.slane %v2427, 1
  %v2627 = vsel %vm1769, %v2624, %v2626
  %s2632 = scalar_lea.vmem %s5, 256
  %v2633 = vld [vmem:[%s2632] sm:$0xf]
  %v2634 = vld [vmem:[%s2632 + $0x4] sm:$0xf]
  %v2635 = vld [vmem:[%s2632 + $0x8] sm:$0xf]
  %v2636 = vld [vmem:[%s2632 + $0xc] sm:$0xf]
  %v2637 = vld [vmem:[%s2632 + $0x10] sm:$0xf]
  %v2638 = vld [vmem:[%s2632 + $0x14] sm:$0xf]
  %v2639 = vld [vmem:[%s2632 + $0x18] sm:$0xf]
  %v2640 = vld [vmem:[%s2632 + $0x1c] sm:$0xf]
  %v2641 = vld [vmem:[%s2632 + $0x20] sm:$0xf]
  %v2642 = vld [vmem:[%s2632 + $0x24] sm:$0xf]
  %v2643 = vld [vmem:[%s2632 + $0x28] sm:$0xf]
  %v2644 = vld [vmem:[%s2632 + $0x2c] sm:$0xf]
  %v2645 = vld [vmem:[%s2632 + $0x30] sm:$0xf]
  %v2646 = vld [vmem:[%s2632 + $0x34] sm:$0xf]
  %v2647 = vld [vmem:[%s2632 + $0x38] sm:$0xf]
  %v2648 = vld [vmem:[%s2632 + $0x3c] sm:$0xf]
  %v2665 = vunpack.c.l.b16 %v2633
  %v2666 = vunpack.c.l.b16 %v2634
  %v2667 = vunpack.c.l.b16 %v2635
  %v2668 = vunpack.c.l.b16 %v2636
  %v2669 = vunpack.c.l.b16 %v2637
  %v2670 = vunpack.c.l.b16 %v2638
  %v2671 = vunpack.c.l.b16 %v2639
  %v2672 = vunpack.c.l.b16 %v2640
  %v2673 = vunpack.c.l.b16 %v2641
  %v2674 = vunpack.c.l.b16 %v2642
  %v2675 = vunpack.c.l.b16 %v2643
  %v2676 = vunpack.c.l.b16 %v2644
  %v2677 = vunpack.c.l.b16 %v2645
  %v2678 = vunpack.c.l.b16 %v2646
  %v2679 = vunpack.c.l.b16 %v2647
  %v2680 = vunpack.c.l.b16 %v2648
  %v2681 = vpack.c.b16 %v2666, %v2665
  %v2682 = vpack.c.b16 %v2668, %v2667
  %v2683 = vpack.c.b16 %v2670, %v2669
  %v2684 = vpack.c.b16 %v2672, %v2671
  %v2685 = vpack.c.b16 %v2674, %v2673
  %v2686 = vpack.c.b16 %v2676, %v2675
  %v2687 = vpack.c.b16 %v2678, %v2677
  %v2688 = vpack.c.b16 %v2680, %v2679
  %2697 = vmatprep.subr.bf16.mxu0 0
  %2698 = vmatpush1.bf16.msra.mxu0 %v2681
  %2699 = vmatprep.subr.bf16.mxu0 0
  %2700 = vmatpush1.bf16.msra.mxu0 %v2682
  %2701 = vmatprep.subr.bf16.mxu0 0
  %2702 = vmatpush1.bf16.msra.mxu0 %v2683
  %2703 = vmatprep.subr.bf16.mxu0 0
  %2704 = vmatpush1.bf16.msra.mxu0 %v2684
  %2705 = vmatprep.subr.bf16.mxu0 0
  %2706 = vmatpush1.bf16.msra.mxu0 %v2685
  %2707 = vmatprep.subr.bf16.mxu0 0
  %2708 = vmatpush1.bf16.msra.mxu0 %v2686
  %2709 = vmatprep.subr.bf16.mxu0 0
  %2710 = vmatpush1.bf16.msra.mxu0 %v2687
  %2711 = vmatprep.subr.bf16.mxu0 0
  %2712 = vmatpush1.bf16.msra.mxu0 %v2688
  %2713 = vmatprep.subr.bf16.mxu0 0
  %2714 = vmatpush1.bf16.msra.mxu0 0
  %2715 = vmatprep.subr.bf16.mxu0 0
  %2716 = vmatpush1.bf16.msra.mxu0 0
  %2717 = vmatprep.subr.bf16.mxu0 0
  %2718 = vmatpush1.bf16.msra.mxu0 0
  %2719 = vmatprep.subr.bf16.mxu0 0
  %2720 = vmatpush1.bf16.msra.mxu0 0
  %2721 = vmatprep.subr.bf16.mxu0 0
  %2722 = vmatpush1.bf16.msra.mxu0 0
  %2723 = vmatprep.subr.bf16.mxu0 0
  %2724 = vmatpush1.bf16.msra.mxu0 0
  %2725 = vmatprep.subr.bf16.mxu0 0
  %2726 = vmatpush1.bf16.msra.mxu0 0
  %2727 = vmatprep.subr.bf16.mxu0 0
  %2728 = vmatpush1.bf16.msra.mxu0 0
  %2729 = vmatprep.mubr.bf16.mxu0 0
  %2730 = vmatmul.mubr.bf16.gmra.mrb[0].mxu0 %v2620
  %v2731 = vpop.f32.mrb[0].mxu0
  %v2732 = vadd.f32 0.0, %v2731
  %v2733 = vpop.f32.mrb[0].mxu0
  %v2734 = vpop.f32.mrb[0].mxu0
  %v2735 = vadd.f32 0.0, %v2734
  %v2736 = vpop.f32.mrb[0].mxu0
  %2737 = vmatprep.mubr.bf16.mxu0 0
  %2738 = vmatmul.mubr.bf16.gmra.mrb[0].mxu0 %v2622
  %v2739 = vpop.f32.mrb[0].mxu0
  %v2740 = vadd.f32 0.0, %v2739
  %v2741 = vpop.f32.mrb[0].mxu0
  %v2742 = vpop.f32.mrb[0].mxu0
  %v2743 = vadd.f32 0.0, %v2742
  %v2744 = vpop.f32.mrb[0].mxu0
  %2745 = vmatprep.mubr.bf16.mxu0 0
  %2746 = vmatmul.mubr.bf16.gmra.mrb[0].mxu0 %v2625
  %v2747 = vpop.f32.mrb[0].mxu0
  %v2748 = vadd.f32 0.0, %v2747
  %v2749 = vpop.f32.mrb[0].mxu0
  %v2750 = vpop.f32.mrb[0].mxu0
  %v2751 = vadd.f32 0.0, %v2750
  %v2752 = vpop.f32.mrb[0].mxu0
  %2753 = vmatprep.mubr.bf16.mxu0 0
  %2754 = vmatmul.mubr.bf16.gmra.mrb[0].mxu0 %v2627
  %v2755 = vpop.f32.mrb[0].mxu0
  %v2756 = vadd.f32 0.0, %v2755
  %v2757 = vpop.f32.mrb[0].mxu0
  %v2758 = vpop.f32.mrb[0].mxu0
  %v2759 = vadd.f32 0.0, %v2758
  %v2760 = vpop.f32.mrb[0].mxu0
  %2761 = vdwg.mxu0
  %v2762 = vadd.f32 %v2602, %v2732
  %v2763 = vadd.f32 %v2603, %v2735
  %v2764 = vadd.f32 %v2604, %v2740
  %v2765 = vadd.f32 %v2605, %v2743
  %v2766 = vadd.f32 %v2606, %v2748
  %v2767 = vadd.f32 %v2607, %v2751
  %v2768 = vadd.f32 %v2608, %v2756
  %v2769 = vadd.f32 %v2609, %v2759
  %v2770 = vld [vmem:[%s6] sm:$0x1]
  %v2772 = vlaneseq
  %v2773 = vshrl.u32 %v2772, 7
  %v2774 = vsub.s32 0, %v2773
  %v2775 = vrot.slane %v2770, %v2774
  %v2777 = vadd.f32 %v2762, %v2775
  %v2778 = vadd.f32 %v2763, %v2775
  %v2779 = vadd.f32 %v2764, %v2775
  %v2780 = vadd.f32 %v2765, %v2775
  %v2781 = vadd.f32 %v2766, %v2775
  %v2782 = vadd.f32 %v2767, %v2775
  %v2783 = vadd.f32 %v2768, %v2775
  %v2784 = vadd.f32 %v2769, %v2775
  %v2785 = vmax.f32 %v2777, 0.0
  %v2786 = vmax.f32 %v2778, 0.0
  %v2787 = vmax.f32 %v2779, 0.0
  %v2788 = vmax.f32 %v2780, 0.0
  %v2789 = vmax.f32 %v2781, 0.0
  %v2790 = vmax.f32 %v2782, 0.0
  %v2791 = vmax.f32 %v2783, 0.0
  %v2792 = vmax.f32 %v2784, 0.0
  %v2793 = vpack.c.bf16 %v2786, %v2785
  %v2794 = vpack.c.bf16 %v2788, %v2787
  %v2795 = vpack.c.bf16 %v2790, %v2789
  %v2796 = vpack.c.bf16 %v2792, %v2791
  %2797 = vst [vmem:[#allocation2 + $0x8] sm:$0xff] %v2793
  %2798 = vst [vmem:[#allocation2 + $0x10] sm:$0xff] %v2794
  %2799 = vst [vmem:[#allocation2 + $0x28] sm:$0xff] %v2795
  %2800 = vst [vmem:[#allocation2 + $0x30] sm:$0xff] %v2796
  %v2801 = vld [vmem:[#allocation2] sm:$0x80]
  %v2802 = vld [vmem:[#allocation2 + $0x8] sm:$0xff]
  %v2803 = vld [vmem:[#allocation2 + $0x10] sm:$0x7f]
  %v2804 = vld [vmem:[#allocation2 + $0x20] sm:$0x80]
  %v2805 = vld [vmem:[#allocation2 + $0x28] sm:$0xff]
  %v2806 = vld [vmem:[#allocation2 + $0x30] sm:$0x7f]
  %v2813 = vrot.slane %v2801, 7
  %v2814 = vrot.slane %v2802, 7
  %v2815 = vsel %vm61, %v2813, %v2814
  %v2816 = vrot.slane %v2803, 7
  %v2817 = vsel %vm61, %v2814, %v2816
  %v2818 = vrot.slane %v2804, 7
  %v2819 = vrot.slane %v2805, 7
  %v2820 = vsel %vm61, %v2818, %v2819
  %v2821 = vrot.slane %v2806, 7
  %v2822 = vsel %vm61, %v2819, %v2821
  %v2827 = vld [vmem:[%s7] sm:$0xf]
  %v2828 = vld [vmem:[%s7 + $0x4] sm:$0xf]
  %v2829 = vld [vmem:[%s7 + $0x8] sm:$0xf]
  %v2830 = vld [vmem:[%s7 + $0xc] sm:$0xf]
  %v2831 = vld [vmem:[%s7 + $0x10] sm:$0xf]
  %v2832 = vld [vmem:[%s7 + $0x14] sm:$0xf]
  %v2833 = vld [vmem:[%s7 + $0x18] sm:$0xf]
  %v2834 = vld [vmem:[%s7 + $0x1c] sm:$0xf]
  %v2835 = vld [vmem:[%s7 + $0x20] sm:$0xf]
  %v2836 = vld [vmem:[%s7 + $0x24] sm:$0xf]
  %v2837 = vld [vmem:[%s7 + $0x28] sm:$0xf]
  %v2838 = vld [vmem:[%s7 + $0x2c] sm:$0xf]
  %v2839 = vld [vmem:[%s7 + $0x30] sm:$0xf]
  %v2840 = vld [vmem:[%s7 + $0x34] sm:$0xf]
  %v2841 = vld [vmem:[%s7 + $0x38] sm:$0xf]
  %v2842 = vld [vmem:[%s7 + $0x3c] sm:$0xf]
  %v2843 = vld [vmem:[#allocation2 + $0x10] sm:$0xff]
  %v2844 = vld [vmem:[#allocation2 + $0x30] sm:$0xff]
  %v2846 = vshrl.u32 %v2801, 16
  %v2848 = vrot.slane %v2846, 7
  %v2850 = vshrl.u32 %v2802, 16
  %v2852 = vrot.slane %v2850, 7
  %v2853 = vshll.u32 %v2802, 16
  %v2855 = vor.u32 %v2852, %v2853
  %v2856 = vsel %vm108, %v2848, %v2855
  %v2858 = vshrl.u32 %v2843, 16
  %v2860 = vrot.slane %v2858, 7
  %v2861 = vshll.u32 %v2843, 16
  %v2863 = vor.u32 %v2860, %v2861
  %v2864 = vsel %vm108, %v2852, %v2863
  %v2866 = vshrl.u32 %v2804, 16
  %v2868 = vrot.slane %v2866, 7
  %v2870 = vshrl.u32 %v2805, 16
  %v2872 = vrot.slane %v2870, 7
  %v2873 = vshll.u32 %v2805, 16
  %v2875 = vor.u32 %v2872, %v2873
  %v2876 = vsel %vm108, %v2868, %v2875
  %v2878 = vshrl.u32 %v2844, 16
  %v2880 = vrot.slane %v2878, 7
  %v2881 = vshll.u32 %v2844, 16
  %v2883 = vor.u32 %v2880, %v2881
  %v2884 = vsel %vm108, %v2872, %v2883
  %s2889 = scalar_lea.vmem %s7, 64
  %v2890 = vld [vmem:[%s2889] sm:$0xf]
  %v2891 = vld [vmem:[%s2889 + $0x4] sm:$0xf]
  %v2892 = vld [vmem:[%s2889 + $0x8] sm:$0xf]
  %v2893 = vld [vmem:[%s2889 + $0xc] sm:$0xf]
  %v2894 = vld [vmem:[%s2889 + $0x10] sm:$0xf]
  %v2895 = vld [vmem:[%s2889 + $0x14] sm:$0xf]
  %v2896 = vld [vmem:[%s2889 + $0x18] sm:$0xf]
  %v2897 = vld [vmem:[%s2889 + $0x1c] sm:$0xf]
  %v2898 = vld [vmem:[%s2889 + $0x20] sm:$0xf]
  %v2899 = vld [vmem:[%s2889 + $0x24] sm:$0xf]
  %v2900 = vld [vmem:[%s2889 + $0x28] sm:$0xf]
  %v2901 = vld [vmem:[%s2889 + $0x2c] sm:$0xf]
  %v2902 = vld [vmem:[%s2889 + $0x30] sm:$0xf]
  %v2903 = vld [vmem:[%s2889 + $0x34] sm:$0xf]
  %v2904 = vld [vmem:[%s2889 + $0x38] sm:$0xf]
  %v2905 = vld [vmem:[%s2889 + $0x3c] sm:$0xf]
  %v2922 = vunpack.c.l.b16 %v2890
  %v2923 = vunpack.c.l.b16 %v2891
  %v2924 = vunpack.c.l.b16 %v2892
  %v2925 = vunpack.c.l.b16 %v2893
  %v2926 = vunpack.c.l.b16 %v2894
  %v2927 = vunpack.c.l.b16 %v2895
  %v2928 = vunpack.c.l.b16 %v2896
  %v2929 = vunpack.c.l.b16 %v2897
  %v2930 = vunpack.c.l.b16 %v2898
  %v2931 = vunpack.c.l.b16 %v2899
  %v2932 = vunpack.c.l.b16 %v2900
  %v2933 = vunpack.c.l.b16 %v2901
  %v2934 = vunpack.c.l.b16 %v2902
  %v2935 = vunpack.c.l.b16 %v2903
  %v2936 = vunpack.c.l.b16 %v2904
  %v2937 = vunpack.c.l.b16 %v2905
  %v2938 = vpack.c.b16 %v2923, %v2922
  %v2939 = vpack.c.b16 %v2925, %v2924
  %v2940 = vpack.c.b16 %v2927, %v2926
  %v2941 = vpack.c.b16 %v2929, %v2928
  %v2942 = vpack.c.b16 %v2931, %v2930
  %v2943 = vpack.c.b16 %v2933, %v2932
  %v2944 = vpack.c.b16 %v2935, %v2934
  %v2945 = vpack.c.b16 %v2937, %v2936
  %2954 = vmatprep.subr.bf16.mxu0 0
  %2955 = vmatpush1.bf16.msra.mxu0 %v2938
  %2956 = vmatprep.subr.bf16.mxu0 0
  %2957 = vmatpush1.bf16.msra.mxu0 %v2939
  %2958 = vmatprep.subr.bf16.mxu0 0
  %2959 = vmatpush1.bf16.msra.mxu0 %v2940
  %2960 = vmatprep.subr.bf16.mxu0 0
  %2961 = vmatpush1.bf16.msra.mxu0 %v2941
  %2962 = vmatprep.subr.bf16.mxu0 0
  %2963 = vmatpush1.bf16.msra.mxu0 %v2942
  %2964 = vmatprep.subr.bf16.mxu0 0
  %2965 = vmatpush1.bf16.msra.mxu0 %v2943
  %2966 = vmatprep.subr.bf16.mxu0 0
  %2967 = vmatpush1.bf16.msra.mxu0 %v2944
  %2968 = vmatprep.subr.bf16.mxu0 0
  %2969 = vmatpush1.bf16.msra.mxu0 %v2945
  %2970 = vmatprep.subr.bf16.mxu0 0
  %2971 = vmatpush1.bf16.msra.mxu0 0
  %2972 = vmatprep.subr.bf16.mxu0 0
  %2973 = vmatpush1.bf16.msra.mxu0 0
  %2974 = vmatprep.subr.bf16.mxu0 0
  %2975 = vmatpush1.bf16.msra.mxu0 0
  %2976 = vmatprep.subr.bf16.mxu0 0
  %2977 = vmatpush1.bf16.msra.mxu0 0
  %2978 = vmatprep.subr.bf16.mxu0 0
  %2979 = vmatpush1.bf16.msra.mxu0 0
  %2980 = vmatprep.subr.bf16.mxu0 0
  %2981 = vmatpush1.bf16.msra.mxu0 0
  %2982 = vmatprep.subr.bf16.mxu0 0
  %2983 = vmatpush1.bf16.msra.mxu0 0
  %2984 = vmatprep.subr.bf16.mxu0 0
  %2985 = vmatpush1.bf16.msra.mxu0 0
  %2986 = vmatprep.mubr.bf16.mxu0 0
  %2987 = vmatmul.mubr.bf16.gmra.mrb[0].mxu0 %v2856
  %v2988 = vpop.f32.mrb[0].mxu0
  %v2989 = vadd.f32 0.0, %v2988
  %v2990 = vpop.f32.mrb[0].mxu0
  %v2991 = vpop.f32.mrb[0].mxu0
  %v2992 = vadd.f32 0.0, %v2991
  %v2993 = vpop.f32.mrb[0].mxu0
  %2994 = vmatprep.mubr.bf16.mxu0 0
  %2995 = vmatmul.mubr.bf16.gmra.mrb[0].mxu0 %v2864
  %v2996 = vpop.f32.mrb[0].mxu0
  %v2997 = vadd.f32 0.0, %v2996
  %v2998 = vpop.f32.mrb[0].mxu0
  %v2999 = vpop.f32.mrb[0].mxu0
  %v3000 = vadd.f32 0.0, %v2999
  %v3001 = vpop.f32.mrb[0].mxu0
  %3002 = vmatprep.mubr.bf16.mxu0 0
  %3003 = vmatmul.mubr.bf16.gmra.mrb[0].mxu0 %v2876
  %v3004 = vpop.f32.mrb[0].mxu0
  %v3005 = vadd.f32 0.0, %v3004
  %v3006 = vpop.f32.mrb[0].mxu0
  %v3007 = vpop.f32.mrb[0].mxu0
  %v3008 = vadd.f32 0.0, %v3007
  %v3009 = vpop.f32.mrb[0].mxu0
  %3010 = vmatprep.mubr.bf16.mxu0 0
  %3011 = vmatmul.mubr.bf16.gmra.mrb[0].mxu0 %v2884
  %v3012 = vpop.f32.mrb[0].mxu0
  %v3013 = vadd.f32 0.0, %v3012
  %v3014 = vpop.f32.mrb[0].mxu0
  %v3015 = vpop.f32.mrb[0].mxu0
  %v3016 = vadd.f32 0.0, %v3015
  %v3017 = vpop.f32.mrb[0].mxu0
  %3018 = vdwg.mxu0
  %v3035 = vunpack.c.l.b16 %v2827
  %v3036 = vunpack.c.l.b16 %v2828
  %v3037 = vunpack.c.l.b16 %v2829
  %v3038 = vunpack.c.l.b16 %v2830
  %v3039 = vunpack.c.l.b16 %v2831
  %v3040 = vunpack.c.l.b16 %v2832
  %v3041 = vunpack.c.l.b16 %v2833
  %v3042 = vunpack.c.l.b16 %v2834
  %v3043 = vunpack.c.l.b16 %v2835
  %v3044 = vunpack.c.l.b16 %v2836
  %v3045 = vunpack.c.l.b16 %v2837
  %v3046 = vunpack.c.l.b16 %v2838
  %v3047 = vunpack.c.l.b16 %v2839
  %v3048 = vunpack.c.l.b16 %v2840
  %v3049 = vunpack.c.l.b16 %v2841
  %v3050 = vunpack.c.l.b16 %v2842
  %v3051 = vpack.c.b16 %v3036, %v3035
  %v3052 = vpack.c.b16 %v3038, %v3037
  %v3053 = vpack.c.b16 %v3040, %v3039
  %v3054 = vpack.c.b16 %v3042, %v3041
  %v3055 = vpack.c.b16 %v3044, %v3043
  %v3056 = vpack.c.b16 %v3046, %v3045
  %v3057 = vpack.c.b16 %v3048, %v3047
  %v3058 = vpack.c.b16 %v3050, %v3049
  %3067 = vmatprep.subr.bf16.mxu0 0
  %3068 = vmatpush1.bf16.msra.mxu0 %v3051
  %3069 = vmatprep.subr.bf16.mxu0 0
  %3070 = vmatpush1.bf16.msra.mxu0 %v3052
  %3071 = vmatprep.subr.bf16.mxu0 0
  %3072 = vmatpush1.bf16.msra.mxu0 %v3053
  %3073 = vmatprep.subr.bf16.mxu0 0
  %3074 = vmatpush1.bf16.msra.mxu0 %v3054
  %3075 = vmatprep.subr.bf16.mxu0 0
  %3076 = vmatpush1.bf16.msra.mxu0 %v3055
  %3077 = vmatprep.subr.bf16.mxu0 0
  %3078 = vmatpush1.bf16.msra.mxu0 %v3056
  %3079 = vmatprep.subr.bf16.mxu0 0
  %3080 = vmatpush1.bf16.msra.mxu0 %v3057
  %3081 = vmatprep.subr.bf16.mxu0 0
  %3082 = vmatpush1.bf16.msra.mxu0 %v3058
  %3083 = vmatprep.subr.bf16.mxu0 0
  %3084 = vmatpush1.bf16.msra.mxu0 0
  %3085 = vmatprep.subr.bf16.mxu0 0
  %3086 = vmatpush1.bf16.msra.mxu0 0
  %3087 = vmatprep.subr.bf16.mxu0 0
  %3088 = vmatpush1.bf16.msra.mxu0 0
  %3089 = vmatprep.subr.bf16.mxu0 0
  %3090 = vmatpush1.bf16.msra.mxu0 0
  %3091 = vmatprep.subr.bf16.mxu0 0
  %3092 = vmatpush1.bf16.msra.mxu0 0
  %3093 = vmatprep.subr.bf16.mxu0 0
  %3094 = vmatpush1.bf16.msra.mxu0 0
  %3095 = vmatprep.subr.bf16.mxu0 0
  %3096 = vmatpush1.bf16.msra.mxu0 0
  %3097 = vmatprep.subr.bf16.mxu0 0
  %3098 = vmatpush1.bf16.msra.mxu0 0
  %3099 = vmatprep.mubr.bf16.mxu0 0
  %3100 = vmatmul.mubr.bf16.gmra.mrb[0].mxu0 %v2815
  %v3101 = vpop.f32.mrb[0].mxu0
  %v3102 = vadd.f32 %v2989, %v3101
  %v3103 = vpop.f32.mrb[0].mxu0
  %v3104 = vpop.f32.mrb[0].mxu0
  %v3105 = vadd.f32 %v2992, %v3104
  %v3106 = vpop.f32.mrb[0].mxu0
  %3107 = vmatprep.mubr.bf16.mxu0 0
  %3108 = vmatmul.mubr.bf16.gmra.mrb[0].mxu0 %v2817
  %v3109 = vpop.f32.mrb[0].mxu0
  %v3110 = vadd.f32 %v2997, %v3109
  %v3111 = vpop.f32.mrb[0].mxu0
  %v3112 = vpop.f32.mrb[0].mxu0
  %v3113 = vadd.f32 %v3000, %v3112
  %v3114 = vpop.f32.mrb[0].mxu0
  %3115 = vmatprep.mubr.bf16.mxu0 0
  %3116 = vmatmul.mubr.bf16.gmra.mrb[0].mxu0 %v2820
  %v3117 = vpop.f32.mrb[0].mxu0
  %v3118 = vadd.f32 %v3005, %v3117
  %v3119 = vpop.f32.mrb[0].mxu0
  %v3120 = vpop.f32.mrb[0].mxu0
  %v3121 = vadd.f32 %v3008, %v3120
  %v3122 = vpop.f32.mrb[0].mxu0
  %3123 = vmatprep.mubr.bf16.mxu0 0
  %3124 = vmatmul.mubr.bf16.gmra.mrb[0].mxu0 %v2822
  %v3125 = vpop.f32.mrb[0].mxu0
  %v3126 = vadd.f32 %v3013, %v3125
  %v3127 = vpop.f32.mrb[0].mxu0
  %v3128 = vpop.f32.mrb[0].mxu0
  %v3129 = vadd.f32 %v3016, %v3128
  %v3130 = vpop.f32.mrb[0].mxu0
  %3131 = vdwg.mxu0
  %s3132 = scalar_lea.vmem %s7, 128
  %v3133 = vld [vmem:[%s3132] sm:$0xf]
  %v3134 = vld [vmem:[%s3132 + $0x4] sm:$0xf]
  %v3135 = vld [vmem:[%s3132 + $0x8] sm:$0xf]
  %v3136 = vld [vmem:[%s3132 + $0xc] sm:$0xf]
  %v3137 = vld [vmem:[%s3132 + $0x10] sm:$0xf]
  %v3138 = vld [vmem:[%s3132 + $0x14] sm:$0xf]
  %v3139 = vld [vmem:[%s3132 + $0x18] sm:$0xf]
  %v3140 = vld [vmem:[%s3132 + $0x1c] sm:$0xf]
  %v3141 = vld [vmem:[%s3132 + $0x20] sm:$0xf]
  %v3142 = vld [vmem:[%s3132 + $0x24] sm:$0xf]
  %v3143 = vld [vmem:[%s3132 + $0x28] sm:$0xf]
  %v3144 = vld [vmem:[%s3132 + $0x2c] sm:$0xf]
  %v3145 = vld [vmem:[%s3132 + $0x30] sm:$0xf]
  %v3146 = vld [vmem:[%s3132 + $0x34] sm:$0xf]
  %v3147 = vld [vmem:[%s3132 + $0x38] sm:$0xf]
  %v3148 = vld [vmem:[%s3132 + $0x3c] sm:$0xf]
  %v3165 = vunpack.c.l.b16 %v3133
  %v3166 = vunpack.c.l.b16 %v3134
  %v3167 = vunpack.c.l.b16 %v3135
  %v3168 = vunpack.c.l.b16 %v3136
  %v3169 = vunpack.c.l.b16 %v3137
  %v3170 = vunpack.c.l.b16 %v3138
  %v3171 = vunpack.c.l.b16 %v3139
  %v3172 = vunpack.c.l.b16 %v3140
  %v3173 = vunpack.c.l.b16 %v3141
  %v3174 = vunpack.c.l.b16 %v3142
  %v3175 = vunpack.c.l.b16 %v3143
  %v3176 = vunpack.c.l.b16 %v3144
  %v3177 = vunpack.c.l.b16 %v3145
  %v3178 = vunpack.c.l.b16 %v3146
  %v3179 = vunpack.c.l.b16 %v3147
  %v3180 = vunpack.c.l.b16 %v3148
  %v3181 = vpack.c.b16 %v3166, %v3165
  %v3182 = vpack.c.b16 %v3168, %v3167
  %v3183 = vpack.c.b16 %v3170, %v3169
  %v3184 = vpack.c.b16 %v3172, %v3171
  %v3185 = vpack.c.b16 %v3174, %v3173
  %v3186 = vpack.c.b16 %v3176, %v3175
  %v3187 = vpack.c.b16 %v3178, %v3177
  %v3188 = vpack.c.b16 %v3180, %v3179
  %3197 = vmatprep.subr.bf16.mxu0 0
  %3198 = vmatpush1.bf16.msra.mxu0 %v3181
  %3199 = vmatprep.subr.bf16.mxu0 0
  %3200 = vmatpush1.bf16.msra.mxu0 %v3182
  %3201 = vmatprep.subr.bf16.mxu0 0
  %3202 = vmatpush1.bf16.msra.mxu0 %v3183
  %3203 = vmatprep.subr.bf16.mxu0 0
  %3204 = vmatpush1.bf16.msra.mxu0 %v3184
  %3205 = vmatprep.subr.bf16.mxu0 0
  %3206 = vmatpush1.bf16.msra.mxu0 %v3185
  %3207 = vmatprep.subr.bf16.mxu0 0
  %3208 = vmatpush1.bf16.msra.mxu0 %v3186
  %3209 = vmatprep.subr.bf16.mxu0 0
  %3210 = vmatpush1.bf16.msra.mxu0 %v3187
  %3211 = vmatprep.subr.bf16.mxu0 0
  %3212 = vmatpush1.bf16.msra.mxu0 %v3188
  %3213 = vmatprep.subr.bf16.mxu0 0
  %3214 = vmatpush1.bf16.msra.mxu0 0
  %3215 = vmatprep.subr.bf16.mxu0 0
  %3216 = vmatpush1.bf16.msra.mxu0 0
  %3217 = vmatprep.subr.bf16.mxu0 0
  %3218 = vmatpush1.bf16.msra.mxu0 0
  %3219 = vmatprep.subr.bf16.mxu0 0
  %3220 = vmatpush1.bf16.msra.mxu0 0
  %3221 = vmatprep.subr.bf16.mxu0 0
  %3222 = vmatpush1.bf16.msra.mxu0 0
  %3223 = vmatprep.subr.bf16.mxu0 0
  %3224 = vmatpush1.bf16.msra.mxu0 0
  %3225 = vmatprep.subr.bf16.mxu0 0
  %3226 = vmatpush1.bf16.msra.mxu0 0
  %3227 = vmatprep.subr.bf16.mxu0 0
  %3228 = vmatpush1.bf16.msra.mxu0 0
  %3229 = vmatprep.mubr.bf16.mxu0 0
  %3230 = vmatmul.mubr.bf16.gmra.mrb[0].mxu0 %v2802
  %v3231 = vpop.f32.mrb[0].mxu0
  %v3232 = vadd.f32 0.0, %v3231
  %v3233 = vpop.f32.mrb[0].mxu0
  %v3234 = vpop.f32.mrb[0].mxu0
  %v3235 = vadd.f32 0.0, %v3234
  %v3236 = vpop.f32.mrb[0].mxu0
  %3237 = vmatprep.mubr.bf16.mxu0 0
  %3238 = vmatmul.mubr.bf16.gmra.mrb[0].mxu0 %v2843
  %v3239 = vpop.f32.mrb[0].mxu0
  %v3240 = vadd.f32 0.0, %v3239
  %v3241 = vpop.f32.mrb[0].mxu0
  %v3242 = vpop.f32.mrb[0].mxu0
  %v3243 = vadd.f32 0.0, %v3242
  %v3244 = vpop.f32.mrb[0].mxu0
  %3245 = vmatprep.mubr.bf16.mxu0 0
  %3246 = vmatmul.mubr.bf16.gmra.mrb[0].mxu0 %v2805
  %v3247 = vpop.f32.mrb[0].mxu0
  %v3248 = vadd.f32 0.0, %v3247
  %v3249 = vpop.f32.mrb[0].mxu0
  %v3250 = vpop.f32.mrb[0].mxu0
  %v3251 = vadd.f32 0.0, %v3250
  %v3252 = vpop.f32.mrb[0].mxu0
  %3253 = vmatprep.mubr.bf16.mxu0 0
  %3254 = vmatmul.mubr.bf16.gmra.mrb[0].mxu0 %v2844
  %v3255 = vpop.f32.mrb[0].mxu0
  %v3256 = vadd.f32 0.0, %v3255
  %v3257 = vpop.f32.mrb[0].mxu0
  %v3258 = vpop.f32.mrb[0].mxu0
  %v3259 = vadd.f32 0.0, %v3258
  %v3260 = vpop.f32.mrb[0].mxu0
  %3261 = vdwg.mxu0
  %v3262 = vadd.f32 %v3102, %v3232
  %v3263 = vadd.f32 %v3105, %v3235
  %v3264 = vadd.f32 %v3110, %v3240
  %v3265 = vadd.f32 %v3113, %v3243
  %v3266 = vadd.f32 %v3118, %v3248
  %v3267 = vadd.f32 %v3121, %v3251
  %v3268 = vadd.f32 %v3126, %v3256
  %v3269 = vadd.f32 %v3129, %v3259
  %v3270 = vld [vmem:[#allocation2 + $0x8] sm:$0xff]
  %v3271 = vld [vmem:[#allocation2 + $0x10] sm:$0xff]
  %v3272 = vld [vmem:[#allocation2 + $0x18] sm:$0x1]
  %v3273 = vld [vmem:[#allocation2 + $0x28] sm:$0xff]
  %v3274 = vld [vmem:[#allocation2 + $0x30] sm:$0xff]
  %v3275 = vld [vmem:[#allocation2 + $0x38] sm:$0x1]
  %v3277 = vshrl.u32 %v3270, 16
  %v3279 = vshll.u32 %v3270, 16
  %v3281 = vrot.slane %v3279, 1
  %v3282 = vor.u32 %v3277, %v3281
  %v3284 = vshll.u32 %v3271, 16
  %v3286 = vrot.slane %v3284, 1
  %v3287 = vsel %vm1578, %v3282, %v3286
  %v3288 = vshrl.u32 %v3271, 16
  %v3290 = vor.u32 %v3288, %v3286
  %v3292 = vshll.u32 %v3272, 16
  %v3294 = vrot.slane %v3292, 1
  %v3295 = vsel %vm1578, %v3290, %v3294
  %v3297 = vshrl.u32 %v3273, 16
  %v3299 = vshll.u32 %v3273, 16
  %v3301 = vrot.slane %v3299, 1
  %v3302 = vor.u32 %v3297, %v3301
  %v3304 = vshll.u32 %v3274, 16
  %v3306 = vrot.slane %v3304, 1
  %v3307 = vsel %vm1578, %v3302, %v3306
  %v3308 = vshrl.u32 %v3274, 16
  %v3310 = vor.u32 %v3308, %v3306
  %v3312 = vshll.u32 %v3275, 16
  %v3314 = vrot.slane %v3312, 1
  %v3315 = vsel %vm1578, %v3310, %v3314
  %s3320 = scalar_lea.vmem %s7, 192
  %v3321 = vld [vmem:[%s3320] sm:$0xf]
  %v3322 = vld [vmem:[%s3320 + $0x4] sm:$0xf]
  %v3323 = vld [vmem:[%s3320 + $0x8] sm:$0xf]
  %v3324 = vld [vmem:[%s3320 + $0xc] sm:$0xf]
  %v3325 = vld [vmem:[%s3320 + $0x10] sm:$0xf]
  %v3326 = vld [vmem:[%s3320 + $0x14] sm:$0xf]
  %v3327 = vld [vmem:[%s3320 + $0x18] sm:$0xf]
  %v3328 = vld [vmem:[%s3320 + $0x1c] sm:$0xf]
  %v3329 = vld [vmem:[%s3320 + $0x20] sm:$0xf]
  %v3330 = vld [vmem:[%s3320 + $0x24] sm:$0xf]
  %v3331 = vld [vmem:[%s3320 + $0x28] sm:$0xf]
  %v3332 = vld [vmem:[%s3320 + $0x2c] sm:$0xf]
  %v3333 = vld [vmem:[%s3320 + $0x30] sm:$0xf]
  %v3334 = vld [vmem:[%s3320 + $0x34] sm:$0xf]
  %v3335 = vld [vmem:[%s3320 + $0x38] sm:$0xf]
  %v3336 = vld [vmem:[%s3320 + $0x3c] sm:$0xf]
  %v3353 = vunpack.c.l.b16 %v3321
  %v3354 = vunpack.c.l.b16 %v3322
  %v3355 = vunpack.c.l.b16 %v3323
  %v3356 = vunpack.c.l.b16 %v3324
  %v3357 = vunpack.c.l.b16 %v3325
  %v3358 = vunpack.c.l.b16 %v3326
  %v3359 = vunpack.c.l.b16 %v3327
  %v3360 = vunpack.c.l.b16 %v3328
  %v3361 = vunpack.c.l.b16 %v3329
  %v3362 = vunpack.c.l.b16 %v3330
  %v3363 = vunpack.c.l.b16 %v3331
  %v3364 = vunpack.c.l.b16 %v3332
  %v3365 = vunpack.c.l.b16 %v3333
  %v3366 = vunpack.c.l.b16 %v3334
  %v3367 = vunpack.c.l.b16 %v3335
  %v3368 = vunpack.c.l.b16 %v3336
  %v3369 = vpack.c.b16 %v3354, %v3353
  %v3370 = vpack.c.b16 %v3356, %v3355
  %v3371 = vpack.c.b16 %v3358, %v3357
  %v3372 = vpack.c.b16 %v3360, %v3359
  %v3373 = vpack.c.b16 %v3362, %v3361
  %v3374 = vpack.c.b16 %v3364, %v3363
  %v3375 = vpack.c.b16 %v3366, %v3365
  %v3376 = vpack.c.b16 %v3368, %v3367
  %3385 = vmatprep.subr.bf16.mxu0 0
  %3386 = vmatpush1.bf16.msra.mxu0 %v3369
  %3387 = vmatprep.subr.bf16.mxu0 0
  %3388 = vmatpush1.bf16.msra.mxu0 %v3370
  %3389 = vmatprep.subr.bf16.mxu0 0
  %3390 = vmatpush1.bf16.msra.mxu0 %v3371
  %3391 = vmatprep.subr.bf16.mxu0 0
  %3392 = vmatpush1.bf16.msra.mxu0 %v3372
  %3393 = vmatprep.subr.bf16.mxu0 0
  %3394 = vmatpush1.bf16.msra.mxu0 %v3373
  %3395 = vmatprep.subr.bf16.mxu0 0
  %3396 = vmatpush1.bf16.msra.mxu0 %v3374
  %3397 = vmatprep.subr.bf16.mxu0 0
  %3398 = vmatpush1.bf16.msra.mxu0 %v3375
  %3399 = vmatprep.subr.bf16.mxu0 0
  %3400 = vmatpush1.bf16.msra.mxu0 %v3376
  %3401 = vmatprep.subr.bf16.mxu0 0
  %3402 = vmatpush1.bf16.msra.mxu0 0
  %3403 = vmatprep.subr.bf16.mxu0 0
  %3404 = vmatpush1.bf16.msra.mxu0 0
  %3405 = vmatprep.subr.bf16.mxu0 0
  %3406 = vmatpush1.bf16.msra.mxu0 0
  %3407 = vmatprep.subr.bf16.mxu0 0
  %3408 = vmatpush1.bf16.msra.mxu0 0
  %3409 = vmatprep.subr.bf16.mxu0 0
  %3410 = vmatpush1.bf16.msra.mxu0 0
  %3411 = vmatprep.subr.bf16.mxu0 0
  %3412 = vmatpush1.bf16.msra.mxu0 0
  %3413 = vmatprep.subr.bf16.mxu0 0
  %3414 = vmatpush1.bf16.msra.mxu0 0
  %3415 = vmatprep.subr.bf16.mxu0 0
  %3416 = vmatpush1.bf16.msra.mxu0 0
  %3417 = vmatprep.mubr.bf16.mxu0 0
  %3418 = vmatmul.mubr.bf16.gmra.mrb[0].mxu0 %v3287
  %v3419 = vpop.f32.mrb[0].mxu0
  %v3420 = vadd.f32 0.0, %v3419
  %v3421 = vpop.f32.mrb[0].mxu0
  %v3422 = vpop.f32.mrb[0].mxu0
  %v3423 = vadd.f32 0.0, %v3422
  %v3424 = vpop.f32.mrb[0].mxu0
  %3425 = vmatprep.mubr.bf16.mxu0 0
  %3426 = vmatmul.mubr.bf16.gmra.mrb[0].mxu0 %v3295
  %v3427 = vpop.f32.mrb[0].mxu0
  %v3428 = vadd.f32 0.0, %v3427
  %v3429 = vpop.f32.mrb[0].mxu0
  %v3430 = vpop.f32.mrb[0].mxu0
  %v3431 = vadd.f32 0.0, %v3430
  %v3432 = vpop.f32.mrb[0].mxu0
  %3433 = vmatprep.mubr.bf16.mxu0 0
  %3434 = vmatmul.mubr.bf16.gmra.mrb[0].mxu0 %v3307
  %v3435 = vpop.f32.mrb[0].mxu0
  %v3436 = vadd.f32 0.0, %v3435
  %v3437 = vpop.f32.mrb[0].mxu0
  %v3438 = vpop.f32.mrb[0].mxu0
  %v3439 = vadd.f32 0.0, %v3438
  %v3440 = vpop.f32.mrb[0].mxu0
  %3441 = vmatprep.mubr.bf16.mxu0 0
  %3442 = vmatmul.mubr.bf16.gmra.mrb[0].mxu0 %v3315
  %v3443 = vpop.f32.mrb[0].mxu0
  %v3444 = vadd.f32 0.0, %v3443
  %v3445 = vpop.f32.mrb[0].mxu0
  %v3446 = vpop.f32.mrb[0].mxu0
  %v3447 = vadd.f32 0.0, %v3446
  %v3448 = vpop.f32.mrb[0].mxu0
  %3449 = vdwg.mxu0
  %v3450 = vadd.f32 %v3262, %v3420
  %v3451 = vadd.f32 %v3263, %v3423
  %v3452 = vadd.f32 %v3264, %v3428
  %v3453 = vadd.f32 %v3265, %v3431
  %v3454 = vadd.f32 %v3266, %v3436
  %v3455 = vadd.f32 %v3267, %v3439
  %v3456 = vadd.f32 %v3268, %v3444
  %v3457 = vadd.f32 %v3269, %v3447
  %v3458 = vld [vmem:[#allocation2 + $0x8] sm:$0xfe]
  %v3459 = vld [vmem:[#allocation2 + $0x28] sm:$0xfe]
  %v3466 = vrot.slane %v3458, 1
  %v3467 = vrot.slane %v3271, 1
  %v3468 = vsel %vm1769, %v3466, %v3467
  %v3469 = vrot.slane %v3272, 1
  %v3470 = vsel %vm1769, %v3467, %v3469
  %v3471 = vrot.slane %v3459, 1
  %v3472 = vrot.slane %v3274, 1
  %v3473 = vsel %vm1769, %v3471, %v3472
  %v3474 = vrot.slane %v3275, 1
  %v3475 = vsel %vm1769, %v3472, %v3474
  %s3480 = scalar_lea.vmem %s7, 256
  %v3481 = vld [vmem:[%s3480] sm:$0xf]
  %v3482 = vld [vmem:[%s3480 + $0x4] sm:$0xf]
  %v3483 = vld [vmem:[%s3480 + $0x8] sm:$0xf]
  %v3484 = vld [vmem:[%s3480 + $0xc] sm:$0xf]
  %v3485 = vld [vmem:[%s3480 + $0x10] sm:$0xf]
  %v3486 = vld [vmem:[%s3480 + $0x14] sm:$0xf]
  %v3487 = vld [vmem:[%s3480 + $0x18] sm:$0xf]
  %v3488 = vld [vmem:[%s3480 + $0x1c] sm:$0xf]
  %v3489 = vld [vmem:[%s3480 + $0x20] sm:$0xf]
  %v3490 = vld [vmem:[%s3480 + $0x24] sm:$0xf]
  %v3491 = vld [vmem:[%s3480 + $0x28] sm:$0xf]
  %v3492 = vld [vmem:[%s3480 + $0x2c] sm:$0xf]
  %v3493 = vld [vmem:[%s3480 + $0x30] sm:$0xf]
  %v3494 = vld [vmem:[%s3480 + $0x34] sm:$0xf]
  %v3495 = vld [vmem:[%s3480 + $0x38] sm:$0xf]
  %v3496 = vld [vmem:[%s3480 + $0x3c] sm:$0xf]
  %v3513 = vunpack.c.l.b16 %v3481
  %v3514 = vunpack.c.l.b16 %v3482
  %v3515 = vunpack.c.l.b16 %v3483
  %v3516 = vunpack.c.l.b16 %v3484
  %v3517 = vunpack.c.l.b16 %v3485
  %v3518 = vunpack.c.l.b16 %v3486
  %v3519 = vunpack.c.l.b16 %v3487
  %v3520 = vunpack.c.l.b16 %v3488
  %v3521 = vunpack.c.l.b16 %v3489
  %v3522 = vunpack.c.l.b16 %v3490
  %v3523 = vunpack.c.l.b16 %v3491
  %v3524 = vunpack.c.l.b16 %v3492
  %v3525 = vunpack.c.l.b16 %v3493
  %v3526 = vunpack.c.l.b16 %v3494
  %v3527 = vunpack.c.l.b16 %v3495
  %v3528 = vunpack.c.l.b16 %v3496
  %v3529 = vpack.c.b16 %v3514, %v3513
  %v3530 = vpack.c.b16 %v3516, %v3515
  %v3531 = vpack.c.b16 %v3518, %v3517
  %v3532 = vpack.c.b16 %v3520, %v3519
  %v3533 = vpack.c.b16 %v3522, %v3521
  %v3534 = vpack.c.b16 %v3524, %v3523
  %v3535 = vpack.c.b16 %v3526, %v3525
  %v3536 = vpack.c.b16 %v3528, %v3527
  %3545 = vmatprep.subr.bf16.mxu0 0
  %3546 = vmatpush1.bf16.msra.mxu0 %v3529
  %3547 = vmatprep.subr.bf16.mxu0 0
  %3548 = vmatpush1.bf16.msra.mxu0 %v3530
  %3549 = vmatprep.subr.bf16.mxu0 0
  %3550 = vmatpush1.bf16.msra.mxu0 %v3531
  %3551 = vmatprep.subr.bf16.mxu0 0
  %3552 = vmatpush1.bf16.msra.mxu0 %v3532
  %3553 = vmatprep.subr.bf16.mxu0 0
  %3554 = vmatpush1.bf16.msra.mxu0 %v3533
  %3555 = vmatprep.subr.bf16.mxu0 0
  %3556 = vmatpush1.bf16.msra.mxu0 %v3534
  %3557 = vmatprep.subr.bf16.mxu0 0
  %3558 = vmatpush1.bf16.msra.mxu0 %v3535
  %3559 = vmatprep.subr.bf16.mxu0 0
  %3560 = vmatpush1.bf16.msra.mxu0 %v3536
  %3561 = vmatprep.subr.bf16.mxu0 0
  %3562 = vmatpush1.bf16.msra.mxu0 0
  %3563 = vmatprep.subr.bf16.mxu0 0
  %3564 = vmatpush1.bf16.msra.mxu0 0
  %3565 = vmatprep.subr.bf16.mxu0 0
  %3566 = vmatpush1.bf16.msra.mxu0 0
  %3567 = vmatprep.subr.bf16.mxu0 0
  %3568 = vmatpush1.bf16.msra.mxu0 0
  %3569 = vmatprep.subr.bf16.mxu0 0
  %3570 = vmatpush1.bf16.msra.mxu0 0
  %3571 = vmatprep.subr.bf16.mxu0 0
  %3572 = vmatpush1.bf16.msra.mxu0 0
  %3573 = vmatprep.subr.bf16.mxu0 0
  %3574 = vmatpush1.bf16.msra.mxu0 0
  %3575 = vmatprep.subr.bf16.mxu0 0
  %3576 = vmatpush1.bf16.msra.mxu0 0
  %3577 = vmatprep.mubr.bf16.mxu0 0
  %3578 = vmatmul.mubr.bf16.gmra.mrb[0].mxu0 %v3468
  %v3579 = vpop.f32.mrb[0].mxu0
  %v3580 = vadd.f32 0.0, %v3579
  %v3581 = vpop.f32.mrb[0].mxu0
  %v3582 = vpop.f32.mrb[0].mxu0
  %v3583 = vadd.f32 0.0, %v3582
  %v3584 = vpop.f32.mrb[0].mxu0
  %3585 = vmatprep.mubr.bf16.mxu0 0
  %3586 = vmatmul.mubr.bf16.gmra.mrb[0].mxu0 %v3470
  %v3587 = vpop.f32.mrb[0].mxu0
  %v3588 = vadd.f32 0.0, %v3587
  %v3589 = vpop.f32.mrb[0].mxu0
  %v3590 = vpop.f32.mrb[0].mxu0
  %v3591 = vadd.f32 0.0, %v3590
  %v3592 = vpop.f32.mrb[0].mxu0
  %3593 = vmatprep.mubr.bf16.mxu0 0
  %3594 = vmatmul.mubr.bf16.gmra.mrb[0].mxu0 %v3473
  %v3595 = vpop.f32.mrb[0].mxu0
  %v3596 = vadd.f32 0.0, %v3595
  %v3597 = vpop.f32.mrb[0].mxu0
  %v3598 = vpop.f32.mrb[0].mxu0
  %v3599 = vadd.f32 0.0, %v3598
  %v3600 = vpop.f32.mrb[0].mxu0
  %3601 = vmatprep.mubr.bf16.mxu0 0
  %3602 = vmatmul.mubr.bf16.gmra.mrb[0].mxu0 %v3475
  %v3603 = vpop.f32.mrb[0].mxu0
  %v3604 = vadd.f32 0.0, %v3603
  %v3605 = vpop.f32.mrb[0].mxu0
  %v3606 = vpop.f32.mrb[0].mxu0
  %v3607 = vadd.f32 0.0, %v3606
  %v3608 = vpop.f32.mrb[0].mxu0
  %3609 = vdwg.mxu0
  %v3610 = vadd.f32 %v3450, %v3580
  %v3611 = vadd.f32 %v3451, %v3583
  %v3612 = vadd.f32 %v3452, %v3588
  %v3613 = vadd.f32 %v3453, %v3591
  %v3614 = vadd.f32 %v3454, %v3596
  %v3615 = vadd.f32 %v3455, %v3599
  %v3616 = vadd.f32 %v3456, %v3604
  %v3617 = vadd.f32 %v3457, %v3607
  %v3618 = vld [vmem:[%s8] sm:$0x1]
  %v3620 = vlaneseq
  %v3621 = vshrl.u32 %v3620, 7
  %v3622 = vsub.s32 0, %v3621
  %v3623 = vrot.slane %v3618, %v3622
  %v3625 = vadd.f32 %v3610, %v3623
  %v3626 = vadd.f32 %v3611, %v3623
  %v3627 = vadd.f32 %v3612, %v3623
  %v3628 = vadd.f32 %v3613, %v3623
  %v3629 = vadd.f32 %v3614, %v3623
  %v3630 = vadd.f32 %v3615, %v3623
  %v3631 = vadd.f32 %v3616, %v3623
  %v3632 = vadd.f32 %v3617, %v3623
  %3633 = vst [vmem:[%s9] sm:$0xff] %v3625
  %3634 = vst [vmem:[%s9 + $0x8] sm:$0xff] %v3626
  %3635 = vst [vmem:[%s9 + $0x10] sm:$0xff] %v3627
  %3636 = vst [vmem:[%s9 + $0x18] sm:$0xff] %v3628
  %3637 = vst [vmem:[%s9 + $0x20] sm:$0xff] %v3629
  %3638 = vst [vmem:[%s9 + $0x28] sm:$0xff] %v3630
  %3639 = vst [vmem:[%s9 + $0x30] sm:$0xff] %v3631
  %3640 = vst [vmem:[%s9 + $0x38] sm:$0xff] %v3632
  // Predicated region
  $region38: #{transition_generator.1} parent=0 // pred_check
    _
  $region39: #{transition_generator.1} parent=0 // pred_check_branch
    %3642 = sbr.rel (0) target = $region41
  $region40: #{transition_generator.1} parent=0 // pred_region
    _
  $region41: #{transition_generator.1} parent=0 // pred_fallthru
    _
  // Predicated region
  $region42: #{transition_generator.1} parent=0 // pred_check
    _
  $region43: #{transition_generator.1} parent=0 // pred_check_branch
    %3644 = sbr.rel (0) target = $region45
  $region44: #{transition_generator.1} parent=0 // pred_region
    _
  $region45: #{transition_generator.1} parent=0 // pred_fallthru
    _

</llo_original>
